<compile_context>
chip_gen: v7x
topology: tpu7x:2x2x1
jax: 0.10.0
libtpu: 0.0.40
codegen_flags: <defaults>
</compile_context>

<pallas_src>
import functools

import numpy as np

import jax
import jax.numpy as jnp
from jax.experimental import pallas as pl
from jax.experimental.pallas import tpu as pltpu


# ----------------------------------------------------------------------------
# Static per-tap validity masks for a kxk "same" convolution on the flattened
# (H*W,) spatial axis.  mask[t, m] == 1  iff  pixel m has an in-bounds neighbour
# at offset (kh-p, kw-p), t = kh*k + kw.  (Also zeroes anything a roll wraps.)
# ----------------------------------------------------------------------------
def _tap_masks(k, H, W):
    p = k // 2
    m = np.arange(H * W)
    h, w = m // W, m % W
    rows = []
    for t in range(k * k):
        dh, dw = t // k - p, t % k - p
        valid = (h + dh >= 0) & (h + dh < H) & (w + dw >= 0) & (w + dw < W)
        rows.append(valid.astype(np.float32))
    return jnp.asarray(np.stack(rows, axis=0))          # (k*k, H*W)


# ----------------------------------------------------------------------------
# Fused per-image kernel.  Everything is channels-first: activations (C, M).
# ----------------------------------------------------------------------------
def _mobile_srv3_kernel(x_ref, m3_ref, m5_ref,
                        w_c1_ref, w_e1_ref, w_d1_ref, w_p1_ref,
                        w_sa1_ref, w_sb1_ref, w_sc1_ref,
                        w_e2_ref, w_d2_ref, w_p2_ref,
                        w_sa2_ref, w_sb2_ref, w_sc2_ref, w_c2_ref,
                        out_ref, *, H, W):
    M = H * W
    f32 = jnp.float32

    def mxu(a, b):
        # bf16 MXU operands, f32 accumulation.  N dimension is M=256 (lane-dense).
        return jnp.dot(a.astype(jnp.bfloat16), b.astype(jnp.bfloat16),
                       preferred_element_type=f32)

    def tap_conv(xin, w_ref, mask_ref, k):
        # k*k tap accumulation on a channels-first (C, M) tile.
        #   xin:     (C, M) f32
        #   w_ref:   (C, k*k)  -- per-channel tap weights (row-major kh,kw)
        #   mask_ref:(k*k, M)  -- edge-validity masks (also kill roll wraparound)
        # Spatial shift (dh, dw) == flattened shift dh*W + dw, realized with
        # pltpu.roll on the lane axis (XLU) + mask multiply (VPU).  f32 VPU math.
        p = k // 2
        acc = jnp.zeros(xin.shape, f32)
        for t in range(k * k):
            dh, dw = t // k - p, t % k - p
            delta = dh * W + dw
            if delta == 0:
                xs = xin                                   # centre tap: all valid
            else:
                xs = pltpu.roll(xin, shift=(-delta) % M, axis=1)
                xs = xs * mask_ref[t:t + 1, :]
            acc = acc + w_ref[:, t:t + 1] * xs
        return acc

    def se_gate(proj, w_sq_ref, w_ex_ref, c):
        # SE on the projected output: GAP over M, squeeze->ReLU->excite->hsigmoid.
        # Runs as lane reduce + two small f32 matmuls with the pooled vector
        # broadcast over M (all columns identical), so all dots keep N=256.
        gap = jnp.broadcast_to(jnp.sum(proj, axis=1, keepdims=True) * (1.0 / M),
                               (c, M))
        hid = jnp.maximum(jnp.dot(w_sq_ref[...], gap,
                                  preferred_element_type=f32), 0.0)
        gate = jnp.dot(w_ex_ref[...], hid, preferred_element_type=f32)
        return jnp.clip(gate + 3.0, 0.0, 6.0) * (1.0 / 6.0)        # hsigmoid

    # ---- conv1 3x3 (1 -> 16) + ReLU (hs1) ------------------------------------
    xb = jnp.broadcast_to(x_ref[0], (16, M))               # single input channel
    y16 = jnp.maximum(tap_conv(xb, w_c1_ref, m3_ref, 3), 0.0)        # (16, M)

    # ---- Block(3, 16, 64, 64, ReLU, SE(64), stride=1) ------------------------
    e1 = jnp.maximum(mxu(w_e1_ref[...], y16), 0.0)         # 1x1 expand + ReLU
    d1 = jnp.maximum(tap_conv(e1, w_d1_ref, m3_ref, 3), 0.0)  # dw3x3 + ReLU
    p1 = mxu(w_p1_ref[...], d1)                            # 1x1 project (BN=id)
    g1 = se_gate(p1, w_sa1_ref, w_sb1_ref, 64)             # (64, M) gate
    b1 = p1 * g1 + mxu(w_sc1_ref[...], y16)                # SE mul + 1x1 shortcut

    # ---- Block(5, 64, 32, 32, ReLU, SE(32), stride=1) ------------------------
    e2 = jnp.maximum(mxu(w_e2_ref[...], b1), 0.0)
    d2 = jnp.maximum(tap_conv(e2, w_d2_ref, m5_ref, 5), 0.0)  # dw5x5 + ReLU
    p2 = mxu(w_p2_ref[...], d2)
    g2 = se_gate(p2, w_sa2_ref, w_sb2_ref, 32)
    b2 = p2 * g2 + mxu(w_sc2_ref[...], b1)

    # ---- conv2 1x1 (32 -> 16) + ReLU (hs2) -----------------------------------
    c2 = jnp.maximum(mxu(w_c2_ref[...], b2), 0.0)          # (16, M), lane-dense
    out_ref[...] = c2[None, :, :]


# ----------------------------------------------------------------------------
# Parameters (deterministic, synthetic; all convs bias=False as in the module,
# BatchNorm folded to identity at default eval init).
# Layouts are channels-first:
#   kxk convs: (Cout or C, k*k) with taps flattened row-major (kh, kw)
#   1x1 convs: (Cout, Cin)
# ----------------------------------------------------------------------------
class ParamGen:
    def __init__(self, seed=0):
        self.key = jax.random.PRNGKey(seed)

    def next(self, shape, scale=0.1):
        self.key, sub = jax.random.split(self.key)
        return jax.random.normal(sub, shape, jnp.float32) * scale


def build_params(seed=0):
    pg = ParamGen(seed)
    P = {}
    P["conv1_w"] = pg.next((16, 9))      # 3x3, Cin=1 -> (Cout, taps)
    # Block(3, 16, 64, 64, ReLU, SE(64), 1)
    P["b1_exp_w"] = pg.next((64, 16))
    P["b1_dw_w"] = pg.next((64, 9))
    P["b1_proj_w"] = pg.next((64, 64))
    P["b1_se_w1"] = pg.next((16, 64))    # SE squeeze 64 -> 16
    P["b1_se_w2"] = pg.next((64, 16))    # SE excite  16 -> 64
    P["b1_sc_w"] = pg.next((64, 16))     # 1x1 shortcut (in != out)
    # Block(5, 64, 32, 32, ReLU, SE(32), 1)
    P["b2_exp_w"] = pg.next((32, 64))
    P["b2_dw_w"] = pg.next((32, 25))
    P["b2_proj_w"] = pg.next((32, 32))
    P["b2_se_w1"] = pg.next((8, 32))
    P["b2_se_w2"] = pg.next((32, 8))
    P["b2_sc_w"] = pg.next((32, 64))
    P["conv2_w"] = pg.next((16, 32))     # final 1x1
    return P


# ----------------------------------------------------------------------------
# Forward: one pallas_call (grid over batch) + PixelShuffle/ReLU glue.
# ----------------------------------------------------------------------------
def mobile_srv3_forward(P, x_nchw):
    x = x_nchw.astype(jnp.float32)
    N, Cin, H, W = x.shape
    assert Cin == 1
    M = H * W
    x_flat = x.reshape(N, 1, M)          # channels-first, lane-dense spatial axis

    mask3 = _tap_masks(3, H, W)          # (9,  M)
    mask5 = _tap_masks(5, H, W)          # (25, M)

    weights = (P["conv1_w"], P["b1_exp_w"], P["b1_dw_w"], P["b1_proj_w"],
               P["b1_se_w1"], P["b1_se_w2"], P["b1_sc_w"],
               P["b2_exp_w"], P["b2_dw_w"], P["b2_proj_w"],
               P["b2_se_w1"], P["b2_se_w2"], P["b2_sc_w"], P["conv2_w"])

    c2 = pl.pallas_call(
        functools.partial(_mobile_srv3_kernel, H=H, W=W),
        out_shape=jax.ShapeDtypeStruct((N, 16, M), jnp.float32),
        grid=(N,),
        in_specs=[pl.BlockSpec((1, 1, M), lambda n: (n, 0, 0)),
                  pl.BlockSpec((9, M), lambda n: (0, 0)),
                  pl.BlockSpec((25, M), lambda n: (0, 0))]
                 + [pl.BlockSpec(w.shape, lambda n: (0, 0)) for w in weights],
        out_specs=pl.BlockSpec((1, 16, M), lambda n: (n, 0, 0)),
        compiler_params=pltpu.CompilerParams(
            dimension_semantics=("parallel",)),
    )(x_flat, mask3, mask5, *weights)

    # PixelShuffle(4) + final ReLU (hs3): pure data movement (+idempotent ReLU),
    # left in JAX as recommended.
    r = 4
    c = c2.reshape(N, 1, r, r, H, W)                 # (n, co, i, j, h, w)
    c = jnp.transpose(c, (0, 1, 4, 2, 5, 3))         # (n, co, h, i, w, j)
    out = c.reshape(N, 1, H * r, W * r)
    return jnp.maximum(out, 0.0)


# ----------------------------------------------------------------------------
if __name__ == "__main__":
    key = jax.random.PRNGKey(0)
    x = jax.random.normal(key, (2, 1, 16, 16), jnp.float32)   # NCHW like PyTorch

    params = build_params(seed=0)
    fwd = jax.jit(lambda inp: mobile_srv3_forward(params, inp))

    y = fwd(x)
    jax.block_until_ready(y)

    assert y.shape == (2, 1, 64, 64), y.shape
    assert bool(jnp.all(jnp.isfinite(y)))
    assert float(jnp.max(jnp.abs(y))) > 0.0
    print("KERNEL_OK")
</pallas_src>

<mosaic_0001>
module attributes {stable_mosaic.version = 11 : i64} {
  func.func @_mobile_srv3_kernel(%arg0: i32, %arg1: memref<1x1x256xf32, #tpu.memory_space<vmem>>, %arg2: memref<9x256xf32, #tpu.memory_space<vmem>>, %arg3: memref<25x256xf32, #tpu.memory_space<vmem>>, %arg4: memref<16x9xf32, #tpu.memory_space<vmem>>, %arg5: memref<64x16xf32, #tpu.memory_space<vmem>>, %arg6: memref<64x9xf32, #tpu.memory_space<vmem>>, %arg7: memref<64x64xf32, #tpu.memory_space<vmem>>, %arg8: memref<16x64xf32, #tpu.memory_space<vmem>>, %arg9: memref<64x16xf32, #tpu.memory_space<vmem>>, %arg10: memref<64x16xf32, #tpu.memory_space<vmem>>, %arg11: memref<32x64xf32, #tpu.memory_space<vmem>>, %arg12: memref<32x25xf32, #tpu.memory_space<vmem>>, %arg13: memref<32x32xf32, #tpu.memory_space<vmem>>, %arg14: memref<8x32xf32, #tpu.memory_space<vmem>>, %arg15: memref<32x8xf32, #tpu.memory_space<vmem>>, %arg16: memref<32x64xf32, #tpu.memory_space<vmem>>, %arg17: memref<16x32xf32, #tpu.memory_space<vmem>>, %arg18: memref<1x16x256xf32, #tpu.memory_space<vmem>>) attributes {dimension_semantics = [#tpu.dimension_semantics<parallel>], iteration_bounds = array<i64: 2>, scalar_prefetch = 0 : i64, scratch_operands = 0 : i64, tpu.core_type = #tpu.core_type<tc>, window_params = [{transform_indices = @transform_0, window_bounds = array<i64: 1, 1, 256>}, {pipeline_mode = #tpu.pipeline_mode<synchronous>, transform_indices = @transform_1, window_bounds = array<i64: 9, 256>}, {pipeline_mode = #tpu.pipeline_mode<synchronous>, transform_indices = @transform_2, window_bounds = array<i64: 25, 256>}, {pipeline_mode = #tpu.pipeline_mode<synchronous>, transform_indices = @transform_3, window_bounds = array<i64: 16, 9>}, {pipeline_mode = #tpu.pipeline_mode<synchronous>, transform_indices = @transform_4, window_bounds = array<i64: 64, 16>}, {pipeline_mode = #tpu.pipeline_mode<synchronous>, transform_indices = @transform_5, window_bounds = array<i64: 64, 9>}, {pipeline_mode = #tpu.pipeline_mode<synchronous>, transform_indices = @transform_6, window_bounds = array<i64: 64, 64>}, {pipeline_mode = #tpu.pipeline_mode<synchronous>, transform_indices = @transform_7, window_bounds = array<i64: 16, 64>}, {pipeline_mode = #tpu.pipeline_mode<synchronous>, transform_indices = @transform_8, window_bounds = array<i64: 64, 16>}, {pipeline_mode = #tpu.pipeline_mode<synchronous>, transform_indices = @transform_9, window_bounds = array<i64: 64, 16>}, {pipeline_mode = #tpu.pipeline_mode<synchronous>, transform_indices = @transform_10, window_bounds = array<i64: 32, 64>}, {pipeline_mode = #tpu.pipeline_mode<synchronous>, transform_indices = @transform_11, window_bounds = array<i64: 32, 25>}, {pipeline_mode = #tpu.pipeline_mode<synchronous>, transform_indices = @transform_12, window_bounds = array<i64: 32, 32>}, {pipeline_mode = #tpu.pipeline_mode<synchronous>, transform_indices = @transform_13, window_bounds = array<i64: 8, 32>}, {pipeline_mode = #tpu.pipeline_mode<synchronous>, transform_indices = @transform_14, window_bounds = array<i64: 32, 8>}, {pipeline_mode = #tpu.pipeline_mode<synchronous>, transform_indices = @transform_15, window_bounds = array<i64: 32, 64>}, {pipeline_mode = #tpu.pipeline_mode<synchronous>, transform_indices = @transform_16, window_bounds = array<i64: 16, 32>}, {transform_indices = @transform_17, window_bounds = array<i64: 1, 16, 256>}]} {
    %c0 = arith.constant 0 : index
    %c0_0 = arith.constant 0 : index
    %c0_1 = arith.constant 0 : index
    %0 = vector.load %arg1[%c0, %c0_0, %c0_1] : memref<1x1x256xf32, #tpu.memory_space<vmem>>, vector<1x1x256xf32>
    %1 = vector.shape_cast %0 : vector<1x1x256xf32> to vector<1x256xf32>
    %2 = vector.shape_cast %1 : vector<1x256xf32> to vector<1x256xf32>
    %3 = vector.broadcast %2 : vector<1x256xf32> to vector<16x256xf32>
    %cst = arith.constant 0.000000e+00 : f32
    %4 = vector.broadcast %cst : f32 to vector<16x256xf32>
    %c17_i32 = arith.constant 17 : i32
    %5 = tpu.dynamic_rotate %3 by %c17_i32 dim 1 : vector<16x256xf32>, i32 -> vector<16x256xf32>
    %c0_2 = arith.constant 0 : index
    %c0_3 = arith.constant 0 : index
    %6 = vector.load %arg2[%c0_2, %c0_3] : memref<9x256xf32, #tpu.memory_space<vmem>>, vector<1x256xf32>
    %7 = vector.broadcast %6 : vector<1x256xf32> to vector<16x256xf32>
    %8 = arith.mulf %5, %7 : vector<16x256xf32>
    %c0_4 = arith.constant 0 : index
    %c0_5 = arith.constant 0 : index
    %9 = vector.load %arg4[%c0_4, %c0_5] : memref<16x9xf32, #tpu.memory_space<vmem>>, vector<16x1xf32>
    %10 = vector.broadcast %9 : vector<16x1xf32> to vector<16x256xf32>
    %11 = arith.mulf %10, %8 : vector<16x256xf32>
    %12 = arith.addf %4, %11 : vector<16x256xf32>
    %c16_i32 = arith.constant 16 : i32
    %13 = tpu.dynamic_rotate %3 by %c16_i32 dim 1 : vector<16x256xf32>, i32 -> vector<16x256xf32>
    %c1 = arith.constant 1 : index
    %c0_6 = arith.constant 0 : index
    %14 = vector.load %arg2[%c1, %c0_6] : memref<9x256xf32, #tpu.memory_space<vmem>>, vector<1x256xf32>
    %15 = vector.broadcast %14 : vector<1x256xf32> to vector<16x256xf32>
    %16 = arith.mulf %13, %15 : vector<16x256xf32>
    %c0_7 = arith.constant 0 : index
    %c1_8 = arith.constant 1 : index
    %17 = vector.load %arg4[%c0_7, %c1_8] : memref<16x9xf32, #tpu.memory_space<vmem>>, vector<16x1xf32>
    %18 = vector.broadcast %17 : vector<16x1xf32> to vector<16x256xf32>
    %19 = arith.mulf %18, %16 : vector<16x256xf32>
    %20 = arith.addf %12, %19 : vector<16x256xf32>
    %c15_i32 = arith.constant 15 : i32
    %21 = tpu.dynamic_rotate %3 by %c15_i32 dim 1 : vector<16x256xf32>, i32 -> vector<16x256xf32>
    %c2 = arith.constant 2 : index
    %c0_9 = arith.constant 0 : index
    %22 = vector.load %arg2[%c2, %c0_9] : memref<9x256xf32, #tpu.memory_space<vmem>>, vector<1x256xf32>
    %23 = vector.broadcast %22 : vector<1x256xf32> to vector<16x256xf32>
    %24 = arith.mulf %21, %23 : vector<16x256xf32>
    %c0_10 = arith.constant 0 : index
    %c2_11 = arith.constant 2 : index
    %25 = vector.load %arg4[%c0_10, %c2_11] : memref<16x9xf32, #tpu.memory_space<vmem>>, vector<16x1xf32>
    %26 = vector.broadcast %25 : vector<16x1xf32> to vector<16x256xf32>
    %27 = arith.mulf %26, %24 : vector<16x256xf32>
    %28 = arith.addf %20, %27 : vector<16x256xf32>
    %c1_i32 = arith.constant 1 : i32
    %29 = tpu.dynamic_rotate %3 by %c1_i32 dim 1 : vector<16x256xf32>, i32 -> vector<16x256xf32>
    %c3 = arith.constant 3 : index
    %c0_12 = arith.constant 0 : index
    %30 = vector.load %arg2[%c3, %c0_12] : memref<9x256xf32, #tpu.memory_space<vmem>>, vector<1x256xf32>
    %31 = vector.broadcast %30 : vector<1x256xf32> to vector<16x256xf32>
    %32 = arith.mulf %29, %31 : vector<16x256xf32>
    %c0_13 = arith.constant 0 : index
    %c3_14 = arith.constant 3 : index
    %33 = vector.load %arg4[%c0_13, %c3_14] : memref<16x9xf32, #tpu.memory_space<vmem>>, vector<16x1xf32>
    %34 = vector.broadcast %33 : vector<16x1xf32> to vector<16x256xf32>
    %35 = arith.mulf %34, %32 : vector<16x256xf32>
    %36 = arith.addf %28, %35 : vector<16x256xf32>
    %c0_15 = arith.constant 0 : index
    %c4 = arith.constant 4 : index
    %37 = vector.load %arg4[%c0_15, %c4] : memref<16x9xf32, #tpu.memory_space<vmem>>, vector<16x1xf32>
    %38 = vector.broadcast %37 : vector<16x1xf32> to vector<16x256xf32>
    %39 = arith.mulf %38, %3 : vector<16x256xf32>
    %40 = arith.addf %36, %39 : vector<16x256xf32>
    %c255_i32 = arith.constant 255 : i32
    %41 = tpu.dynamic_rotate %3 by %c255_i32 dim 1 : vector<16x256xf32>, i32 -> vector<16x256xf32>
    %c5 = arith.constant 5 : index
    %c0_16 = arith.constant 0 : index
    %42 = vector.load %arg2[%c5, %c0_16] : memref<9x256xf32, #tpu.memory_space<vmem>>, vector<1x256xf32>
    %43 = vector.broadcast %42 : vector<1x256xf32> to vector<16x256xf32>
    %44 = arith.mulf %41, %43 : vector<16x256xf32>
    %c0_17 = arith.constant 0 : index
    %c5_18 = arith.constant 5 : index
    %45 = vector.load %arg4[%c0_17, %c5_18] : memref<16x9xf32, #tpu.memory_space<vmem>>, vector<16x1xf32>
    %46 = vector.broadcast %45 : vector<16x1xf32> to vector<16x256xf32>
    %47 = arith.mulf %46, %44 : vector<16x256xf32>
    %48 = arith.addf %40, %47 : vector<16x256xf32>
    %c241_i32 = arith.constant 241 : i32
    %49 = tpu.dynamic_rotate %3 by %c241_i32 dim 1 : vector<16x256xf32>, i32 -> vector<16x256xf32>
    %c6 = arith.constant 6 : index
    %c0_19 = arith.constant 0 : index
    %50 = vector.load %arg2[%c6, %c0_19] : memref<9x256xf32, #tpu.memory_space<vmem>>, vector<1x256xf32>
    %51 = vector.broadcast %50 : vector<1x256xf32> to vector<16x256xf32>
    %52 = arith.mulf %49, %51 : vector<16x256xf32>
    %c0_20 = arith.constant 0 : index
    %c6_21 = arith.constant 6 : index
    %53 = vector.load %arg4[%c0_20, %c6_21] : memref<16x9xf32, #tpu.memory_space<vmem>>, vector<16x1xf32>
    %54 = vector.broadcast %53 : vector<16x1xf32> to vector<16x256xf32>
    %55 = arith.mulf %54, %52 : vector<16x256xf32>
    %56 = arith.addf %48, %55 : vector<16x256xf32>
    %c240_i32 = arith.constant 240 : i32
    %57 = tpu.dynamic_rotate %3 by %c240_i32 dim 1 : vector<16x256xf32>, i32 -> vector<16x256xf32>
    %c7 = arith.constant 7 : index
    %c0_22 = arith.constant 0 : index
    %58 = vector.load %arg2[%c7, %c0_22] : memref<9x256xf32, #tpu.memory_space<vmem>>, vector<1x256xf32>
    %59 = vector.broadcast %58 : vector<1x256xf32> to vector<16x256xf32>
    %60 = arith.mulf %57, %59 : vector<16x256xf32>
    %c0_23 = arith.constant 0 : index
    %c7_24 = arith.constant 7 : index
    %61 = vector.load %arg4[%c0_23, %c7_24] : memref<16x9xf32, #tpu.memory_space<vmem>>, vector<16x1xf32>
    %62 = vector.broadcast %61 : vector<16x1xf32> to vector<16x256xf32>
    %63 = arith.mulf %62, %60 : vector<16x256xf32>
    %64 = arith.addf %56, %63 : vector<16x256xf32>
    %c239_i32 = arith.constant 239 : i32
    %65 = tpu.dynamic_rotate %3 by %c239_i32 dim 1 : vector<16x256xf32>, i32 -> vector<16x256xf32>
    %c8 = arith.constant 8 : index
    %c0_25 = arith.constant 0 : index
    %66 = vector.load %arg2[%c8, %c0_25] : memref<9x256xf32, #tpu.memory_space<vmem>>, vector<1x256xf32>
    %67 = vector.broadcast %66 : vector<1x256xf32> to vector<16x256xf32>
    %68 = arith.mulf %65, %67 : vector<16x256xf32>
    %c0_26 = arith.constant 0 : index
    %c8_27 = arith.constant 8 : index
    %69 = vector.load %arg4[%c0_26, %c8_27] : memref<16x9xf32, #tpu.memory_space<vmem>>, vector<16x1xf32>
    %70 = vector.broadcast %69 : vector<16x1xf32> to vector<16x256xf32>
    %71 = arith.mulf %70, %68 : vector<16x256xf32>
    %72 = arith.addf %64, %71 : vector<16x256xf32>
    %cst_28 = arith.constant 0.000000e+00 : f32
    %73 = vector.broadcast %cst_28 : f32 to vector<16x256xf32>
    %74 = arith.maximumf %72, %73 : vector<16x256xf32>
    %c0_29 = arith.constant 0 : index
    %c0_30 = arith.constant 0 : index
    %75 = vector.load %arg5[%c0_29, %c0_30] : memref<64x16xf32, #tpu.memory_space<vmem>>, vector<64x16xf32>
    %76 = arith.truncf %75 : vector<64x16xf32> to vector<64x16xbf16>
    %77 = arith.truncf %74 : vector<16x256xf32> to vector<16x256xbf16>
    %cst_31 = arith.constant dense<0.000000e+00> : vector<64x256xf32>
    %78 = tpu.matmul %76, %77, %cst_31 {dimension_numbers = #tpu.dot_dimension_numbers<[1], [0], [0], [1], [0, 0, 1, 1], [], []>} : vector<64x16xbf16>, vector<16x256xbf16>, vector<64x256xf32> -> vector<64x256xf32>
    %cst_32 = arith.constant 0.000000e+00 : f32
    %79 = vector.broadcast %cst_32 : f32 to vector<64x256xf32>
    %80 = arith.maximumf %78, %79 : vector<64x256xf32>
    %cst_33 = arith.constant 0.000000e+00 : f32
    %81 = vector.broadcast %cst_33 : f32 to vector<64x256xf32>
    %c17_i32_34 = arith.constant 17 : i32
    %82 = tpu.dynamic_rotate %80 by %c17_i32_34 dim 1 : vector<64x256xf32>, i32 -> vector<64x256xf32>
    %c0_35 = arith.constant 0 : index
    %c0_36 = arith.constant 0 : index
    %83 = vector.load %arg2[%c0_35, %c0_36] : memref<9x256xf32, #tpu.memory_space<vmem>>, vector<1x256xf32>
    %84 = vector.broadcast %83 : vector<1x256xf32> to vector<64x256xf32>
    %85 = arith.mulf %82, %84 : vector<64x256xf32>
    %c0_37 = arith.constant 0 : index
    %c0_38 = arith.constant 0 : index
    %86 = vector.load %arg6[%c0_37, %c0_38] : memref<64x9xf32, #tpu.memory_space<vmem>>, vector<64x1xf32>
    %87 = vector.broadcast %86 : vector<64x1xf32> to vector<64x256xf32>
    %88 = arith.mulf %87, %85 : vector<64x256xf32>
    %89 = arith.addf %81, %88 : vector<64x256xf32>
    %c16_i32_39 = arith.constant 16 : i32
    %90 = tpu.dynamic_rotate %80 by %c16_i32_39 dim 1 : vector<64x256xf32>, i32 -> vector<64x256xf32>
    %c1_40 = arith.constant 1 : index
    %c0_41 = arith.constant 0 : index
    %91 = vector.load %arg2[%c1_40, %c0_41] : memref<9x256xf32, #tpu.memory_space<vmem>>, vector<1x256xf32>
    %92 = vector.broadcast %91 : vector<1x256xf32> to vector<64x256xf32>
    %93 = arith.mulf %90, %92 : vector<64x256xf32>
    %c0_42 = arith.constant 0 : index
    %c1_43 = arith.constant 1 : index
    %94 = vector.load %arg6[%c0_42, %c1_43] : memref<64x9xf32, #tpu.memory_space<vmem>>, vector<64x1xf32>
    %95 = vector.broadcast %94 : vector<64x1xf32> to vector<64x256xf32>
    %96 = arith.mulf %95, %93 : vector<64x256xf32>
    %97 = arith.addf %89, %96 : vector<64x256xf32>
    %c15_i32_44 = arith.constant 15 : i32
    %98 = tpu.dynamic_rotate %80 by %c15_i32_44 dim 1 : vector<64x256xf32>, i32 -> vector<64x256xf32>
    %c2_45 = arith.constant 2 : index
    %c0_46 = arith.constant 0 : index
    %99 = vector.load %arg2[%c2_45, %c0_46] : memref<9x256xf32, #tpu.memory_space<vmem>>, vector<1x256xf32>
    %100 = vector.broadcast %99 : vector<1x256xf32> to vector<64x256xf32>
    %101 = arith.mulf %98, %100 : vector<64x256xf32>
    %c0_47 = arith.constant 0 : index
    %c2_48 = arith.constant 2 : index
    %102 = vector.load %arg6[%c0_47, %c2_48] : memref<64x9xf32, #tpu.memory_space<vmem>>, vector<64x1xf32>
    %103 = vector.broadcast %102 : vector<64x1xf32> to vector<64x256xf32>
    %104 = arith.mulf %103, %101 : vector<64x256xf32>
    %105 = arith.addf %97, %104 : vector<64x256xf32>
    %c1_i32_49 = arith.constant 1 : i32
    %106 = tpu.dynamic_rotate %80 by %c1_i32_49 dim 1 : vector<64x256xf32>, i32 -> vector<64x256xf32>
    %c3_50 = arith.constant 3 : index
    %c0_51 = arith.constant 0 : index
    %107 = vector.load %arg2[%c3_50, %c0_51] : memref<9x256xf32, #tpu.memory_space<vmem>>, vector<1x256xf32>
    %108 = vector.broadcast %107 : vector<1x256xf32> to vector<64x256xf32>
    %109 = arith.mulf %106, %108 : vector<64x256xf32>
    %c0_52 = arith.constant 0 : index
    %c3_53 = arith.constant 3 : index
    %110 = vector.load %arg6[%c0_52, %c3_53] : memref<64x9xf32, #tpu.memory_space<vmem>>, vector<64x1xf32>
    %111 = vector.broadcast %110 : vector<64x1xf32> to vector<64x256xf32>
    %112 = arith.mulf %111, %109 : vector<64x256xf32>
    %113 = arith.addf %105, %112 : vector<64x256xf32>
    %c0_54 = arith.constant 0 : index
    %c4_55 = arith.constant 4 : index
    %114 = vector.load %arg6[%c0_54, %c4_55] : memref<64x9xf32, #tpu.memory_space<vmem>>, vector<64x1xf32>
    %115 = vector.broadcast %114 : vector<64x1xf32> to vector<64x256xf32>
    %116 = arith.mulf %115, %80 : vector<64x256xf32>
    %117 = arith.addf %113, %116 : vector<64x256xf32>
    %c255_i32_56 = arith.constant 255 : i32
    %118 = tpu.dynamic_rotate %80 by %c255_i32_56 dim 1 : vector<64x256xf32>, i32 -> vector<64x256xf32>
    %c5_57 = arith.constant 5 : index
    %c0_58 = arith.constant 0 : index
    %119 = vector.load %arg2[%c5_57, %c0_58] : memref<9x256xf32, #tpu.memory_space<vmem>>, vector<1x256xf32>
    %120 = vector.broadcast %119 : vector<1x256xf32> to vector<64x256xf32>
    %121 = arith.mulf %118, %120 : vector<64x256xf32>
    %c0_59 = arith.constant 0 : index
    %c5_60 = arith.constant 5 : index
    %122 = vector.load %arg6[%c0_59, %c5_60] : memref<64x9xf32, #tpu.memory_space<vmem>>, vector<64x1xf32>
    %123 = vector.broadcast %122 : vector<64x1xf32> to vector<64x256xf32>
    %124 = arith.mulf %123, %121 : vector<64x256xf32>
    %125 = arith.addf %117, %124 : vector<64x256xf32>
    %c241_i32_61 = arith.constant 241 : i32
    %126 = tpu.dynamic_rotate %80 by %c241_i32_61 dim 1 : vector<64x256xf32>, i32 -> vector<64x256xf32>
    %c6_62 = arith.constant 6 : index
    %c0_63 = arith.constant 0 : index
    %127 = vector.load %arg2[%c6_62, %c0_63] : memref<9x256xf32, #tpu.memory_space<vmem>>, vector<1x256xf32>
    %128 = vector.broadcast %127 : vector<1x256xf32> to vector<64x256xf32>
    %129 = arith.mulf %126, %128 : vector<64x256xf32>
    %c0_64 = arith.constant 0 : index
    %c6_65 = arith.constant 6 : index
    %130 = vector.load %arg6[%c0_64, %c6_65] : memref<64x9xf32, #tpu.memory_space<vmem>>, vector<64x1xf32>
    %131 = vector.broadcast %130 : vector<64x1xf32> to vector<64x256xf32>
    %132 = arith.mulf %131, %129 : vector<64x256xf32>
    %133 = arith.addf %125, %132 : vector<64x256xf32>
    %c240_i32_66 = arith.constant 240 : i32
    %134 = tpu.dynamic_rotate %80 by %c240_i32_66 dim 1 : vector<64x256xf32>, i32 -> vector<64x256xf32>
    %c7_67 = arith.constant 7 : index
    %c0_68 = arith.constant 0 : index
    %135 = vector.load %arg2[%c7_67, %c0_68] : memref<9x256xf32, #tpu.memory_space<vmem>>, vector<1x256xf32>
    %136 = vector.broadcast %135 : vector<1x256xf32> to vector<64x256xf32>
    %137 = arith.mulf %134, %136 : vector<64x256xf32>
    %c0_69 = arith.constant 0 : index
    %c7_70 = arith.constant 7 : index
    %138 = vector.load %arg6[%c0_69, %c7_70] : memref<64x9xf32, #tpu.memory_space<vmem>>, vector<64x1xf32>
    %139 = vector.broadcast %138 : vector<64x1xf32> to vector<64x256xf32>
    %140 = arith.mulf %139, %137 : vector<64x256xf32>
    %141 = arith.addf %133, %140 : vector<64x256xf32>
    %c239_i32_71 = arith.constant 239 : i32
    %142 = tpu.dynamic_rotate %80 by %c239_i32_71 dim 1 : vector<64x256xf32>, i32 -> vector<64x256xf32>
    %c8_72 = arith.constant 8 : index
    %c0_73 = arith.constant 0 : index
    %143 = vector.load %arg2[%c8_72, %c0_73] : memref<9x256xf32, #tpu.memory_space<vmem>>, vector<1x256xf32>
    %144 = vector.broadcast %143 : vector<1x256xf32> to vector<64x256xf32>
    %145 = arith.mulf %142, %144 : vector<64x256xf32>
    %c0_74 = arith.constant 0 : index
    %c8_75 = arith.constant 8 : index
    %146 = vector.load %arg6[%c0_74, %c8_75] : memref<64x9xf32, #tpu.memory_space<vmem>>, vector<64x1xf32>
    %147 = vector.broadcast %146 : vector<64x1xf32> to vector<64x256xf32>
    %148 = arith.mulf %147, %145 : vector<64x256xf32>
    %149 = arith.addf %141, %148 : vector<64x256xf32>
    %cst_76 = arith.constant 0.000000e+00 : f32
    %150 = vector.broadcast %cst_76 : f32 to vector<64x256xf32>
    %151 = arith.maximumf %149, %150 : vector<64x256xf32>
    %c0_77 = arith.constant 0 : index
    %c0_78 = arith.constant 0 : index
    %152 = vector.load %arg7[%c0_77, %c0_78] : memref<64x64xf32, #tpu.memory_space<vmem>>, vector<64x64xf32>
    %153 = arith.truncf %152 : vector<64x64xf32> to vector<64x64xbf16>
    %154 = arith.truncf %151 : vector<64x256xf32> to vector<64x256xbf16>
    %cst_79 = arith.constant dense<0.000000e+00> : vector<64x256xf32>
    %155 = tpu.matmul %153, %154, %cst_79 {dimension_numbers = #tpu.dot_dimension_numbers<[1], [0], [0], [1], [0, 0, 1, 1], [], []>} : vector<64x64xbf16>, vector<64x256xbf16>, vector<64x256xf32> -> vector<64x256xf32>
    %cst_80 = arith.constant dense<0.000000e+00> : vector<64xf32>
    %156 = vector.multi_reduction <add>, %155, %cst_80 [1] : vector<64x256xf32> to vector<64xf32>
    %157 = vector.shape_cast %156 : vector<64xf32> to vector<64x1xf32>
    %cst_81 = arith.constant 3.906250e-03 : f32
    %158 = vector.broadcast %cst_81 : f32 to vector<64x1xf32>
    %159 = arith.mulf %157, %158 : vector<64x1xf32>
    %160 = vector.shape_cast %159 : vector<64x1xf32> to vector<64x1xf32>
    %161 = vector.broadcast %160 : vector<64x1xf32> to vector<64x256xf32>
    %c0_82 = arith.constant 0 : index
    %c0_83 = arith.constant 0 : index
    %162 = vector.load %arg8[%c0_82, %c0_83] : memref<16x64xf32, #tpu.memory_space<vmem>>, vector<16x64xf32>
    %cst_84 = arith.constant dense<0.000000e+00> : vector<16x256xf32>
    %163 = tpu.matmul %162, %161, %cst_84 {dimension_numbers = #tpu.dot_dimension_numbers<[1], [0], [0], [1], [0, 0, 1, 1], [], []>} : vector<16x64xf32>, vector<64x256xf32>, vector<16x256xf32> -> vector<16x256xf32>
    %cst_85 = arith.constant 0.000000e+00 : f32
    %164 = vector.broadcast %cst_85 : f32 to vector<16x256xf32>
    %165 = arith.maximumf %163, %164 : vector<16x256xf32>
    %c0_86 = arith.constant 0 : index
    %c0_87 = arith.constant 0 : index
    %166 = vector.load %arg9[%c0_86, %c0_87] : memref<64x16xf32, #tpu.memory_space<vmem>>, vector<64x16xf32>
    %cst_88 = arith.constant dense<0.000000e+00> : vector<64x256xf32>
    %167 = tpu.matmul %166, %165, %cst_88 {dimension_numbers = #tpu.dot_dimension_numbers<[1], [0], [0], [1], [0, 0, 1, 1], [], []>} : vector<64x16xf32>, vector<16x256xf32>, vector<64x256xf32> -> vector<64x256xf32>
    %cst_89 = arith.constant 3.000000e+00 : f32
    %168 = vector.broadcast %cst_89 : f32 to vector<64x256xf32>
    %169 = arith.addf %167, %168 : vector<64x256xf32>
    %cst_90 = arith.constant 0.000000e+00 : f32
    %cst_91 = arith.constant 6.000000e+00 : f32
    %170 = vector.broadcast %cst_90 : f32 to vector<64x256xf32>
    %171 = arith.maximumf %170, %169 : vector<64x256xf32>
    %172 = vector.broadcast %cst_91 : f32 to vector<64x256xf32>
    %173 = arith.minimumf %172, %171 : vector<64x256xf32>
    %cst_92 = arith.constant 0.166666672 : f32
    %174 = vector.broadcast %cst_92 : f32 to vector<64x256xf32>
    %175 = arith.mulf %173, %174 : vector<64x256xf32>
    %176 = arith.mulf %155, %175 : vector<64x256xf32>
    %c0_93 = arith.constant 0 : index
    %c0_94 = arith.constant 0 : index
    %177 = vector.load %arg10[%c0_93, %c0_94] : memref<64x16xf32, #tpu.memory_space<vmem>>, vector<64x16xf32>
    %178 = arith.truncf %177 : vector<64x16xf32> to vector<64x16xbf16>
    %179 = arith.truncf %74 : vector<16x256xf32> to vector<16x256xbf16>
    %cst_95 = arith.constant dense<0.000000e+00> : vector<64x256xf32>
    %180 = tpu.matmul %178, %179, %cst_95 {dimension_numbers = #tpu.dot_dimension_numbers<[1], [0], [0], [1], [0, 0, 1, 1], [], []>} : vector<64x16xbf16>, vector<16x256xbf16>, vector<64x256xf32> -> vector<64x256xf32>
    %181 = arith.addf %176, %180 : vector<64x256xf32>
    %c0_96 = arith.constant 0 : index
    %c0_97 = arith.constant 0 : index
    %182 = vector.load %arg11[%c0_96, %c0_97] : memref<32x64xf32, #tpu.memory_space<vmem>>, vector<32x64xf32>
    %183 = arith.truncf %182 : vector<32x64xf32> to vector<32x64xbf16>
    %184 = arith.truncf %181 : vector<64x256xf32> to vector<64x256xbf16>
    %cst_98 = arith.constant dense<0.000000e+00> : vector<32x256xf32>
    %185 = tpu.matmul %183, %184, %cst_98 {dimension_numbers = #tpu.dot_dimension_numbers<[1], [0], [0], [1], [0, 0, 1, 1], [], []>} : vector<32x64xbf16>, vector<64x256xbf16>, vector<32x256xf32> -> vector<32x256xf32>
    %cst_99 = arith.constant 0.000000e+00 : f32
    %186 = vector.broadcast %cst_99 : f32 to vector<32x256xf32>
    %187 = arith.maximumf %185, %186 : vector<32x256xf32>
    %cst_100 = arith.constant 0.000000e+00 : f32
    %188 = vector.broadcast %cst_100 : f32 to vector<32x256xf32>
    %c34_i32 = arith.constant 34 : i32
    %189 = tpu.dynamic_rotate %187 by %c34_i32 dim 1 : vector<32x256xf32>, i32 -> vector<32x256xf32>
    %c0_101 = arith.constant 0 : index
    %c0_102 = arith.constant 0 : index
    %190 = vector.load %arg3[%c0_101, %c0_102] : memref<25x256xf32, #tpu.memory_space<vmem>>, vector<1x256xf32>
    %191 = vector.broadcast %190 : vector<1x256xf32> to vector<32x256xf32>
    %192 = arith.mulf %189, %191 : vector<32x256xf32>
    %c0_103 = arith.constant 0 : index
    %c0_104 = arith.constant 0 : index
    %193 = vector.load %arg12[%c0_103, %c0_104] : memref<32x25xf32, #tpu.memory_space<vmem>>, vector<32x1xf32>
    %194 = vector.broadcast %193 : vector<32x1xf32> to vector<32x256xf32>
    %195 = arith.mulf %194, %192 : vector<32x256xf32>
    %196 = arith.addf %188, %195 : vector<32x256xf32>
    %c33_i32 = arith.constant 33 : i32
    %197 = tpu.dynamic_rotate %187 by %c33_i32 dim 1 : vector<32x256xf32>, i32 -> vector<32x256xf32>
    %c1_105 = arith.constant 1 : index
    %c0_106 = arith.constant 0 : index
    %198 = vector.load %arg3[%c1_105, %c0_106] : memref<25x256xf32, #tpu.memory_space<vmem>>, vector<1x256xf32>
    %199 = vector.broadcast %198 : vector<1x256xf32> to vector<32x256xf32>
    %200 = arith.mulf %197, %199 : vector<32x256xf32>
    %c0_107 = arith.constant 0 : index
    %c1_108 = arith.constant 1 : index
    %201 = vector.load %arg12[%c0_107, %c1_108] : memref<32x25xf32, #tpu.memory_space<vmem>>, vector<32x1xf32>
    %202 = vector.broadcast %201 : vector<32x1xf32> to vector<32x256xf32>
    %203 = arith.mulf %202, %200 : vector<32x256xf32>
    %204 = arith.addf %196, %203 : vector<32x256xf32>
    %c32_i32 = arith.constant 32 : i32
    %205 = tpu.dynamic_rotate %187 by %c32_i32 dim 1 : vector<32x256xf32>, i32 -> vector<32x256xf32>
    %c2_109 = arith.constant 2 : index
    %c0_110 = arith.constant 0 : index
    %206 = vector.load %arg3[%c2_109, %c0_110] : memref<25x256xf32, #tpu.memory_space<vmem>>, vector<1x256xf32>
    %207 = vector.broadcast %206 : vector<1x256xf32> to vector<32x256xf32>
    %208 = arith.mulf %205, %207 : vector<32x256xf32>
    %c0_111 = arith.constant 0 : index
    %c2_112 = arith.constant 2 : index
    %209 = vector.load %arg12[%c0_111, %c2_112] : memref<32x25xf32, #tpu.memory_space<vmem>>, vector<32x1xf32>
    %210 = vector.broadcast %209 : vector<32x1xf32> to vector<32x256xf32>
    %211 = arith.mulf %210, %208 : vector<32x256xf32>
    %212 = arith.addf %204, %211 : vector<32x256xf32>
    %c31_i32 = arith.constant 31 : i32
    %213 = tpu.dynamic_rotate %187 by %c31_i32 dim 1 : vector<32x256xf32>, i32 -> vector<32x256xf32>
    %c3_113 = arith.constant 3 : index
    %c0_114 = arith.constant 0 : index
    %214 = vector.load %arg3[%c3_113, %c0_114] : memref<25x256xf32, #tpu.memory_space<vmem>>, vector<1x256xf32>
    %215 = vector.broadcast %214 : vector<1x256xf32> to vector<32x256xf32>
    %216 = arith.mulf %213, %215 : vector<32x256xf32>
    %c0_115 = arith.constant 0 : index
    %c3_116 = arith.constant 3 : index
    %217 = vector.load %arg12[%c0_115, %c3_116] : memref<32x25xf32, #tpu.memory_space<vmem>>, vector<32x1xf32>
    %218 = vector.broadcast %217 : vector<32x1xf32> to vector<32x256xf32>
    %219 = arith.mulf %218, %216 : vector<32x256xf32>
    %220 = arith.addf %212, %219 : vector<32x256xf32>
    %c30_i32 = arith.constant 30 : i32
    %221 = tpu.dynamic_rotate %187 by %c30_i32 dim 1 : vector<32x256xf32>, i32 -> vector<32x256xf32>
    %c4_117 = arith.constant 4 : index
    %c0_118 = arith.constant 0 : index
    %222 = vector.load %arg3[%c4_117, %c0_118] : memref<25x256xf32, #tpu.memory_space<vmem>>, vector<1x256xf32>
    %223 = vector.broadcast %222 : vector<1x256xf32> to vector<32x256xf32>
    %224 = arith.mulf %221, %223 : vector<32x256xf32>
    %c0_119 = arith.constant 0 : index
    %c4_120 = arith.constant 4 : index
    %225 = vector.load %arg12[%c0_119, %c4_120] : memref<32x25xf32, #tpu.memory_space<vmem>>, vector<32x1xf32>
    %226 = vector.broadcast %225 : vector<32x1xf32> to vector<32x256xf32>
    %227 = arith.mulf %226, %224 : vector<32x256xf32>
    %228 = arith.addf %220, %227 : vector<32x256xf32>
    %c18_i32 = arith.constant 18 : i32
    %229 = tpu.dynamic_rotate %187 by %c18_i32 dim 1 : vector<32x256xf32>, i32 -> vector<32x256xf32>
    %c5_121 = arith.constant 5 : index
    %c0_122 = arith.constant 0 : index
    %230 = vector.load %arg3[%c5_121, %c0_122] : memref<25x256xf32, #tpu.memory_space<vmem>>, vector<1x256xf32>
    %231 = vector.broadcast %230 : vector<1x256xf32> to vector<32x256xf32>
    %232 = arith.mulf %229, %231 : vector<32x256xf32>
    %c0_123 = arith.constant 0 : index
    %c5_124 = arith.constant 5 : index
    %233 = vector.load %arg12[%c0_123, %c5_124] : memref<32x25xf32, #tpu.memory_space<vmem>>, vector<32x1xf32>
    %234 = vector.broadcast %233 : vector<32x1xf32> to vector<32x256xf32>
    %235 = arith.mulf %234, %232 : vector<32x256xf32>
    %236 = arith.addf %228, %235 : vector<32x256xf32>
    %c17_i32_125 = arith.constant 17 : i32
    %237 = tpu.dynamic_rotate %187 by %c17_i32_125 dim 1 : vector<32x256xf32>, i32 -> vector<32x256xf32>
    %c6_126 = arith.constant 6 : index
    %c0_127 = arith.constant 0 : index
    %238 = vector.load %arg3[%c6_126, %c0_127] : memref<25x256xf32, #tpu.memory_space<vmem>>, vector<1x256xf32>
    %239 = vector.broadcast %238 : vector<1x256xf32> to vector<32x256xf32>
    %240 = arith.mulf %237, %239 : vector<32x256xf32>
    %c0_128 = arith.constant 0 : index
    %c6_129 = arith.constant 6 : index
    %241 = vector.load %arg12[%c0_128, %c6_129] : memref<32x25xf32, #tpu.memory_space<vmem>>, vector<32x1xf32>
    %242 = vector.broadcast %241 : vector<32x1xf32> to vector<32x256xf32>
    %243 = arith.mulf %242, %240 : vector<32x256xf32>
    %244 = arith.addf %236, %243 : vector<32x256xf32>
    %c16_i32_130 = arith.constant 16 : i32
    %245 = tpu.dynamic_rotate %187 by %c16_i32_130 dim 1 : vector<32x256xf32>, i32 -> vector<32x256xf32>
    %c7_131 = arith.constant 7 : index
    %c0_132 = arith.constant 0 : index
    %246 = vector.load %arg3[%c7_131, %c0_132] : memref<25x256xf32, #tpu.memory_space<vmem>>, vector<1x256xf32>
    %247 = vector.broadcast %246 : vector<1x256xf32> to vector<32x256xf32>
    %248 = arith.mulf %245, %247 : vector<32x256xf32>
    %c0_133 = arith.constant 0 : index
    %c7_134 = arith.constant 7 : index
    %249 = vector.load %arg12[%c0_133, %c7_134] : memref<32x25xf32, #tpu.memory_space<vmem>>, vector<32x1xf32>
    %250 = vector.broadcast %249 : vector<32x1xf32> to vector<32x256xf32>
    %251 = arith.mulf %250, %248 : vector<32x256xf32>
    %252 = arith.addf %244, %251 : vector<32x256xf32>
    %c15_i32_135 = arith.constant 15 : i32
    %253 = tpu.dynamic_rotate %187 by %c15_i32_135 dim 1 : vector<32x256xf32>, i32 -> vector<32x256xf32>
    %c8_136 = arith.constant 8 : index
    %c0_137 = arith.constant 0 : index
    %254 = vector.load %arg3[%c8_136, %c0_137] : memref<25x256xf32, #tpu.memory_space<vmem>>, vector<1x256xf32>
    %255 = vector.broadcast %254 : vector<1x256xf32> to vector<32x256xf32>
    %256 = arith.mulf %253, %255 : vector<32x256xf32>
    %c0_138 = arith.constant 0 : index
    %c8_139 = arith.constant 8 : index
    %257 = vector.load %arg12[%c0_138, %c8_139] : memref<32x25xf32, #tpu.memory_space<vmem>>, vector<32x1xf32>
    %258 = vector.broadcast %257 : vector<32x1xf32> to vector<32x256xf32>
    %259 = arith.mulf %258, %256 : vector<32x256xf32>
    %260 = arith.addf %252, %259 : vector<32x256xf32>
    %c14_i32 = arith.constant 14 : i32
    %261 = tpu.dynamic_rotate %187 by %c14_i32 dim 1 : vector<32x256xf32>, i32 -> vector<32x256xf32>
    %c9 = arith.constant 9 : index
    %c0_140 = arith.constant 0 : index
    %262 = vector.load %arg3[%c9, %c0_140] : memref<25x256xf32, #tpu.memory_space<vmem>>, vector<1x256xf32>
    %263 = vector.broadcast %262 : vector<1x256xf32> to vector<32x256xf32>
    %264 = arith.mulf %261, %263 : vector<32x256xf32>
    %c0_141 = arith.constant 0 : index
    %c9_142 = arith.constant 9 : index
    %265 = vector.load %arg12[%c0_141, %c9_142] : memref<32x25xf32, #tpu.memory_space<vmem>>, vector<32x1xf32>
    %266 = vector.broadcast %265 : vector<32x1xf32> to vector<32x256xf32>
    %267 = arith.mulf %266, %264 : vector<32x256xf32>
    %268 = arith.addf %260, %267 : vector<32x256xf32>
    %c2_i32 = arith.constant 2 : i32
    %269 = tpu.dynamic_rotate %187 by %c2_i32 dim 1 : vector<32x256xf32>, i32 -> vector<32x256xf32>
    %c10 = arith.constant 10 : index
    %c0_143 = arith.constant 0 : index
    %270 = vector.load %arg3[%c10, %c0_143] : memref<25x256xf32, #tpu.memory_space<vmem>>, vector<1x256xf32>
    %271 = vector.broadcast %270 : vector<1x256xf32> to vector<32x256xf32>
    %272 = arith.mulf %269, %271 : vector<32x256xf32>
    %c0_144 = arith.constant 0 : index
    %c10_145 = arith.constant 10 : index
    %273 = vector.load %arg12[%c0_144, %c10_145] : memref<32x25xf32, #tpu.memory_space<vmem>>, vector<32x1xf32>
    %274 = vector.broadcast %273 : vector<32x1xf32> to vector<32x256xf32>
    %275 = arith.mulf %274, %272 : vector<32x256xf32>
    %276 = arith.addf %268, %275 : vector<32x256xf32>
    %c1_i32_146 = arith.constant 1 : i32
    %277 = tpu.dynamic_rotate %187 by %c1_i32_146 dim 1 : vector<32x256xf32>, i32 -> vector<32x256xf32>
    %c11 = arith.constant 11 : index
    %c0_147 = arith.constant 0 : index
    %278 = vector.load %arg3[%c11, %c0_147] : memref<25x256xf32, #tpu.memory_space<vmem>>, vector<1x256xf32>
    %279 = vector.broadcast %278 : vector<1x256xf32> to vector<32x256xf32>
    %280 = arith.mulf %277, %279 : vector<32x256xf32>
    %c0_148 = arith.constant 0 : index
    %c11_149 = arith.constant 11 : index
    %281 = vector.load %arg12[%c0_148, %c11_149] : memref<32x25xf32, #tpu.memory_space<vmem>>, vector<32x1xf32>
    %282 = vector.broadcast %281 : vector<32x1xf32> to vector<32x256xf32>
    %283 = arith.mulf %282, %280 : vector<32x256xf32>
    %284 = arith.addf %276, %283 : vector<32x256xf32>
    %c0_150 = arith.constant 0 : index
    %c12 = arith.constant 12 : index
    %285 = vector.load %arg12[%c0_150, %c12] : memref<32x25xf32, #tpu.memory_space<vmem>>, vector<32x1xf32>
    %286 = vector.broadcast %285 : vector<32x1xf32> to vector<32x256xf32>
    %287 = arith.mulf %286, %187 : vector<32x256xf32>
    %288 = arith.addf %284, %287 : vector<32x256xf32>
    %c255_i32_151 = arith.constant 255 : i32
    %289 = tpu.dynamic_rotate %187 by %c255_i32_151 dim 1 : vector<32x256xf32>, i32 -> vector<32x256xf32>
    %c13 = arith.constant 13 : index
    %c0_152 = arith.constant 0 : index
    %290 = vector.load %arg3[%c13, %c0_152] : memref<25x256xf32, #tpu.memory_space<vmem>>, vector<1x256xf32>
    %291 = vector.broadcast %290 : vector<1x256xf32> to vector<32x256xf32>
    %292 = arith.mulf %289, %291 : vector<32x256xf32>
    %c0_153 = arith.constant 0 : index
    %c13_154 = arith.constant 13 : index
    %293 = vector.load %arg12[%c0_153, %c13_154] : memref<32x25xf32, #tpu.memory_space<vmem>>, vector<32x1xf32>
    %294 = vector.broadcast %293 : vector<32x1xf32> to vector<32x256xf32>
    %295 = arith.mulf %294, %292 : vector<32x256xf32>
    %296 = arith.addf %288, %295 : vector<32x256xf32>
    %c254_i32 = arith.constant 254 : i32
    %297 = tpu.dynamic_rotate %187 by %c254_i32 dim 1 : vector<32x256xf32>, i32 -> vector<32x256xf32>
    %c14 = arith.constant 14 : index
    %c0_155 = arith.constant 0 : index
    %298 = vector.load %arg3[%c14, %c0_155] : memref<25x256xf32, #tpu.memory_space<vmem>>, vector<1x256xf32>
    %299 = vector.broadcast %298 : vector<1x256xf32> to vector<32x256xf32>
    %300 = arith.mulf %297, %299 : vector<32x256xf32>
    %c0_156 = arith.constant 0 : index
    %c14_157 = arith.constant 14 : index
    %301 = vector.load %arg12[%c0_156, %c14_157] : memref<32x25xf32, #tpu.memory_space<vmem>>, vector<32x1xf32>
    %302 = vector.broadcast %301 : vector<32x1xf32> to vector<32x256xf32>
    %303 = arith.mulf %302, %300 : vector<32x256xf32>
    %304 = arith.addf %296, %303 : vector<32x256xf32>
    %c242_i32 = arith.constant 242 : i32
    %305 = tpu.dynamic_rotate %187 by %c242_i32 dim 1 : vector<32x256xf32>, i32 -> vector<32x256xf32>
    %c15 = arith.constant 15 : index
    %c0_158 = arith.constant 0 : index
    %306 = vector.load %arg3[%c15, %c0_158] : memref<25x256xf32, #tpu.memory_space<vmem>>, vector<1x256xf32>
    %307 = vector.broadcast %306 : vector<1x256xf32> to vector<32x256xf32>
    %308 = arith.mulf %305, %307 : vector<32x256xf32>
    %c0_159 = arith.constant 0 : index
    %c15_160 = arith.constant 15 : index
    %309 = vector.load %arg12[%c0_159, %c15_160] : memref<32x25xf32, #tpu.memory_space<vmem>>, vector<32x1xf32>
    %310 = vector.broadcast %309 : vector<32x1xf32> to vector<32x256xf32>
    %311 = arith.mulf %310, %308 : vector<32x256xf32>
    %312 = arith.addf %304, %311 : vector<32x256xf32>
    %c241_i32_161 = arith.constant 241 : i32
    %313 = tpu.dynamic_rotate %187 by %c241_i32_161 dim 1 : vector<32x256xf32>, i32 -> vector<32x256xf32>
    %c16 = arith.constant 16 : index
    %c0_162 = arith.constant 0 : index
    %314 = vector.load %arg3[%c16, %c0_162] : memref<25x256xf32, #tpu.memory_space<vmem>>, vector<1x256xf32>
    %315 = vector.broadcast %314 : vector<1x256xf32> to vector<32x256xf32>
    %316 = arith.mulf %313, %315 : vector<32x256xf32>
    %c0_163 = arith.constant 0 : index
    %c16_164 = arith.constant 16 : index
    %317 = vector.load %arg12[%c0_163, %c16_164] : memref<32x25xf32, #tpu.memory_space<vmem>>, vector<32x1xf32>
    %318 = vector.broadcast %317 : vector<32x1xf32> to vector<32x256xf32>
    %319 = arith.mulf %318, %316 : vector<32x256xf32>
    %320 = arith.addf %312, %319 : vector<32x256xf32>
    %c240_i32_165 = arith.constant 240 : i32
    %321 = tpu.dynamic_rotate %187 by %c240_i32_165 dim 1 : vector<32x256xf32>, i32 -> vector<32x256xf32>
    %c17 = arith.constant 17 : index
    %c0_166 = arith.constant 0 : index
    %322 = vector.load %arg3[%c17, %c0_166] : memref<25x256xf32, #tpu.memory_space<vmem>>, vector<1x256xf32>
    %323 = vector.broadcast %322 : vector<1x256xf32> to vector<32x256xf32>
    %324 = arith.mulf %321, %323 : vector<32x256xf32>
    %c0_167 = arith.constant 0 : index
    %c17_168 = arith.constant 17 : index
    %325 = vector.load %arg12[%c0_167, %c17_168] : memref<32x25xf32, #tpu.memory_space<vmem>>, vector<32x1xf32>
    %326 = vector.broadcast %325 : vector<32x1xf32> to vector<32x256xf32>
    %327 = arith.mulf %326, %324 : vector<32x256xf32>
    %328 = arith.addf %320, %327 : vector<32x256xf32>
    %c239_i32_169 = arith.constant 239 : i32
    %329 = tpu.dynamic_rotate %187 by %c239_i32_169 dim 1 : vector<32x256xf32>, i32 -> vector<32x256xf32>
    %c18 = arith.constant 18 : index
    %c0_170 = arith.constant 0 : index
    %330 = vector.load %arg3[%c18, %c0_170] : memref<25x256xf32, #tpu.memory_space<vmem>>, vector<1x256xf32>
    %331 = vector.broadcast %330 : vector<1x256xf32> to vector<32x256xf32>
    %332 = arith.mulf %329, %331 : vector<32x256xf32>
    %c0_171 = arith.constant 0 : index
    %c18_172 = arith.constant 18 : index
    %333 = vector.load %arg12[%c0_171, %c18_172] : memref<32x25xf32, #tpu.memory_space<vmem>>, vector<32x1xf32>
    %334 = vector.broadcast %333 : vector<32x1xf32> to vector<32x256xf32>
    %335 = arith.mulf %334, %332 : vector<32x256xf32>
    %336 = arith.addf %328, %335 : vector<32x256xf32>
    %c238_i32 = arith.constant 238 : i32
    %337 = tpu.dynamic_rotate %187 by %c238_i32 dim 1 : vector<32x256xf32>, i32 -> vector<32x256xf32>
    %c19 = arith.constant 19 : index
    %c0_173 = arith.constant 0 : index
    %338 = vector.load %arg3[%c19, %c0_173] : memref<25x256xf32, #tpu.memory_space<vmem>>, vector<1x256xf32>
    %339 = vector.broadcast %338 : vector<1x256xf32> to vector<32x256xf32>
    %340 = arith.mulf %337, %339 : vector<32x256xf32>
    %c0_174 = arith.constant 0 : index
    %c19_175 = arith.constant 19 : index
    %341 = vector.load %arg12[%c0_174, %c19_175] : memref<32x25xf32, #tpu.memory_space<vmem>>, vector<32x1xf32>
    %342 = vector.broadcast %341 : vector<32x1xf32> to vector<32x256xf32>
    %343 = arith.mulf %342, %340 : vector<32x256xf32>
    %344 = arith.addf %336, %343 : vector<32x256xf32>
    %c226_i32 = arith.constant 226 : i32
    %345 = tpu.dynamic_rotate %187 by %c226_i32 dim 1 : vector<32x256xf32>, i32 -> vector<32x256xf32>
    %c20 = arith.constant 20 : index
    %c0_176 = arith.constant 0 : index
    %346 = vector.load %arg3[%c20, %c0_176] : memref<25x256xf32, #tpu.memory_space<vmem>>, vector<1x256xf32>
    %347 = vector.broadcast %346 : vector<1x256xf32> to vector<32x256xf32>
    %348 = arith.mulf %345, %347 : vector<32x256xf32>
    %c0_177 = arith.constant 0 : index
    %c20_178 = arith.constant 20 : index
    %349 = vector.load %arg12[%c0_177, %c20_178] : memref<32x25xf32, #tpu.memory_space<vmem>>, vector<32x1xf32>
    %350 = vector.broadcast %349 : vector<32x1xf32> to vector<32x256xf32>
    %351 = arith.mulf %350, %348 : vector<32x256xf32>
    %352 = arith.addf %344, %351 : vector<32x256xf32>
    %c225_i32 = arith.constant 225 : i32
    %353 = tpu.dynamic_rotate %187 by %c225_i32 dim 1 : vector<32x256xf32>, i32 -> vector<32x256xf32>
    %c21 = arith.constant 21 : index
    %c0_179 = arith.constant 0 : index
    %354 = vector.load %arg3[%c21, %c0_179] : memref<25x256xf32, #tpu.memory_space<vmem>>, vector<1x256xf32>
    %355 = vector.broadcast %354 : vector<1x256xf32> to vector<32x256xf32>
    %356 = arith.mulf %353, %355 : vector<32x256xf32>
    %c0_180 = arith.constant 0 : index
    %c21_181 = arith.constant 21 : index
    %357 = vector.load %arg12[%c0_180, %c21_181] : memref<32x25xf32, #tpu.memory_space<vmem>>, vector<32x1xf32>
    %358 = vector.broadcast %357 : vector<32x1xf32> to vector<32x256xf32>
    %359 = arith.mulf %358, %356 : vector<32x256xf32>
    %360 = arith.addf %352, %359 : vector<32x256xf32>
    %c224_i32 = arith.constant 224 : i32
    %361 = tpu.dynamic_rotate %187 by %c224_i32 dim 1 : vector<32x256xf32>, i32 -> vector<32x256xf32>
    %c22 = arith.constant 22 : index
    %c0_182 = arith.constant 0 : index
    %362 = vector.load %arg3[%c22, %c0_182] : memref<25x256xf32, #tpu.memory_space<vmem>>, vector<1x256xf32>
    %363 = vector.broadcast %362 : vector<1x256xf32> to vector<32x256xf32>
    %364 = arith.mulf %361, %363 : vector<32x256xf32>
    %c0_183 = arith.constant 0 : index
    %c22_184 = arith.constant 22 : index
    %365 = vector.load %arg12[%c0_183, %c22_184] : memref<32x25xf32, #tpu.memory_space<vmem>>, vector<32x1xf32>
    %366 = vector.broadcast %365 : vector<32x1xf32> to vector<32x256xf32>
    %367 = arith.mulf %366, %364 : vector<32x256xf32>
    %368 = arith.addf %360, %367 : vector<32x256xf32>
    %c223_i32 = arith.constant 223 : i32
    %369 = tpu.dynamic_rotate %187 by %c223_i32 dim 1 : vector<32x256xf32>, i32 -> vector<32x256xf32>
    %c23 = arith.constant 23 : index
    %c0_185 = arith.constant 0 : index
    %370 = vector.load %arg3[%c23, %c0_185] : memref<25x256xf32, #tpu.memory_space<vmem>>, vector<1x256xf32>
    %371 = vector.broadcast %370 : vector<1x256xf32> to vector<32x256xf32>
    %372 = arith.mulf %369, %371 : vector<32x256xf32>
    %c0_186 = arith.constant 0 : index
    %c23_187 = arith.constant 23 : index
    %373 = vector.load %arg12[%c0_186, %c23_187] : memref<32x25xf32, #tpu.memory_space<vmem>>, vector<32x1xf32>
    %374 = vector.broadcast %373 : vector<32x1xf32> to vector<32x256xf32>
    %375 = arith.mulf %374, %372 : vector<32x256xf32>
    %376 = arith.addf %368, %375 : vector<32x256xf32>
    %c222_i32 = arith.constant 222 : i32
    %377 = tpu.dynamic_rotate %187 by %c222_i32 dim 1 : vector<32x256xf32>, i32 -> vector<32x256xf32>
    %c24 = arith.constant 24 : index
    %c0_188 = arith.constant 0 : index
    %378 = vector.load %arg3[%c24, %c0_188] : memref<25x256xf32, #tpu.memory_space<vmem>>, vector<1x256xf32>
    %379 = vector.broadcast %378 : vector<1x256xf32> to vector<32x256xf32>
    %380 = arith.mulf %377, %379 : vector<32x256xf32>
    %c0_189 = arith.constant 0 : index
    %c24_190 = arith.constant 24 : index
    %381 = vector.load %arg12[%c0_189, %c24_190] : memref<32x25xf32, #tpu.memory_space<vmem>>, vector<32x1xf32>
    %382 = vector.broadcast %381 : vector<32x1xf32> to vector<32x256xf32>
    %383 = arith.mulf %382, %380 : vector<32x256xf32>
    %384 = arith.addf %376, %383 : vector<32x256xf32>
    %cst_191 = arith.constant 0.000000e+00 : f32
    %385 = vector.broadcast %cst_191 : f32 to vector<32x256xf32>
    %386 = arith.maximumf %384, %385 : vector<32x256xf32>
    %c0_192 = arith.constant 0 : index
    %c0_193 = arith.constant 0 : index
    %387 = vector.load %arg13[%c0_192, %c0_193] : memref<32x32xf32, #tpu.memory_space<vmem>>, vector<32x32xf32>
    %388 = arith.truncf %387 : vector<32x32xf32> to vector<32x32xbf16>
    %389 = arith.truncf %386 : vector<32x256xf32> to vector<32x256xbf16>
    %cst_194 = arith.constant dense<0.000000e+00> : vector<32x256xf32>
    %390 = tpu.matmul %388, %389, %cst_194 {dimension_numbers = #tpu.dot_dimension_numbers<[1], [0], [0], [1], [0, 0, 1, 1], [], []>} : vector<32x32xbf16>, vector<32x256xbf16>, vector<32x256xf32> -> vector<32x256xf32>
    %cst_195 = arith.constant dense<0.000000e+00> : vector<32xf32>
    %391 = vector.multi_reduction <add>, %390, %cst_195 [1] : vector<32x256xf32> to vector<32xf32>
    %392 = vector.shape_cast %391 : vector<32xf32> to vector<32x1xf32>
    %cst_196 = arith.constant 3.906250e-03 : f32
    %393 = vector.broadcast %cst_196 : f32 to vector<32x1xf32>
    %394 = arith.mulf %392, %393 : vector<32x1xf32>
    %395 = vector.shape_cast %394 : vector<32x1xf32> to vector<32x1xf32>
    %396 = vector.broadcast %395 : vector<32x1xf32> to vector<32x256xf32>
    %c0_197 = arith.constant 0 : index
    %c0_198 = arith.constant 0 : index
    %397 = vector.load %arg14[%c0_197, %c0_198] : memref<8x32xf32, #tpu.memory_space<vmem>>, vector<8x32xf32>
    %cst_199 = arith.constant dense<0.000000e+00> : vector<8x256xf32>
    %398 = tpu.matmul %397, %396, %cst_199 {dimension_numbers = #tpu.dot_dimension_numbers<[1], [0], [0], [1], [0, 0, 1, 1], [], []>} : vector<8x32xf32>, vector<32x256xf32>, vector<8x256xf32> -> vector<8x256xf32>
    %cst_200 = arith.constant 0.000000e+00 : f32
    %399 = vector.broadcast %cst_200 : f32 to vector<8x256xf32>
    %400 = arith.maximumf %398, %399 : vector<8x256xf32>
    %c0_201 = arith.constant 0 : index
    %c0_202 = arith.constant 0 : index
    %401 = vector.load %arg15[%c0_201, %c0_202] : memref<32x8xf32, #tpu.memory_space<vmem>>, vector<32x8xf32>
    %cst_203 = arith.constant dense<0.000000e+00> : vector<32x256xf32>
    %402 = tpu.matmul %401, %400, %cst_203 {dimension_numbers = #tpu.dot_dimension_numbers<[1], [0], [0], [1], [0, 0, 1, 1], [], []>} : vector<32x8xf32>, vector<8x256xf32>, vector<32x256xf32> -> vector<32x256xf32>
    %cst_204 = arith.constant 3.000000e+00 : f32
    %403 = vector.broadcast %cst_204 : f32 to vector<32x256xf32>
    %404 = arith.addf %402, %403 : vector<32x256xf32>
    %cst_205 = arith.constant 0.000000e+00 : f32
    %cst_206 = arith.constant 6.000000e+00 : f32
    %405 = vector.broadcast %cst_205 : f32 to vector<32x256xf32>
    %406 = arith.maximumf %405, %404 : vector<32x256xf32>
    %407 = vector.broadcast %cst_206 : f32 to vector<32x256xf32>
    %408 = arith.minimumf %407, %406 : vector<32x256xf32>
    %cst_207 = arith.constant 0.166666672 : f32
    %409 = vector.broadcast %cst_207 : f32 to vector<32x256xf32>
    %410 = arith.mulf %408, %409 : vector<32x256xf32>
    %411 = arith.mulf %390, %410 : vector<32x256xf32>
    %c0_208 = arith.constant 0 : index
    %c0_209 = arith.constant 0 : index
    %412 = vector.load %arg16[%c0_208, %c0_209] : memref<32x64xf32, #tpu.memory_space<vmem>>, vector<32x64xf32>
    %413 = arith.truncf %412 : vector<32x64xf32> to vector<32x64xbf16>
    %414 = arith.truncf %181 : vector<64x256xf32> to vector<64x256xbf16>
    %cst_210 = arith.constant dense<0.000000e+00> : vector<32x256xf32>
    %415 = tpu.matmul %413, %414, %cst_210 {dimension_numbers = #tpu.dot_dimension_numbers<[1], [0], [0], [1], [0, 0, 1, 1], [], []>} : vector<32x64xbf16>, vector<64x256xbf16>, vector<32x256xf32> -> vector<32x256xf32>
    %416 = arith.addf %411, %415 : vector<32x256xf32>
    %c0_211 = arith.constant 0 : index
    %c0_212 = arith.constant 0 : index
    %417 = vector.load %arg17[%c0_211, %c0_212] : memref<16x32xf32, #tpu.memory_space<vmem>>, vector<16x32xf32>
    %418 = arith.truncf %417 : vector<16x32xf32> to vector<16x32xbf16>
    %419 = arith.truncf %416 : vector<32x256xf32> to vector<32x256xbf16>
    %cst_213 = arith.constant dense<0.000000e+00> : vector<16x256xf32>
    %420 = tpu.matmul %418, %419, %cst_213 {dimension_numbers = #tpu.dot_dimension_numbers<[1], [0], [0], [1], [0, 0, 1, 1], [], []>} : vector<16x32xbf16>, vector<32x256xbf16>, vector<16x256xf32> -> vector<16x256xf32>
    %cst_214 = arith.constant 0.000000e+00 : f32
    %421 = vector.broadcast %cst_214 : f32 to vector<16x256xf32>
    %422 = arith.maximumf %420, %421 : vector<16x256xf32>
    %423 = vector.shape_cast %422 : vector<16x256xf32> to vector<1x16x256xf32>
    %c0_215 = arith.constant 0 : index
    %c0_216 = arith.constant 0 : index
    %c0_217 = arith.constant 0 : index
    %424 = vector.load %arg18[%c0_215, %c0_216, %c0_217] : memref<1x16x256xf32, #tpu.memory_space<vmem>>, vector<1x16x256xf32>
    tpu.vector_store %arg18[%c0_215, %c0_216, %c0_217], %423 {strides = array<i32>} : memref<1x16x256xf32, #tpu.memory_space<vmem>>, vector<1x16x256xf32>,
    return
  }
  func.func @transform_0(%arg0: i32) -> (i32, i32, i32) {
    %c0_i32 = arith.constant 0 : i32
    %c0_i32_0 = arith.constant 0 : i32
    %c0_i32_1 = arith.constant 0 : i32
    return %arg0, %c0_i32, %c0_i32_0 : i32, i32, i32
  }
  func.func @transform_1(%arg0: i32) -> (i32, i32) {
    %c0_i32 = arith.constant 0 : i32
    %c0_i32_0 = arith.constant 0 : i32
    %c0_i32_1 = arith.constant 0 : i32
    return %c0_i32, %c0_i32_0 : i32, i32
  }
  func.func @transform_2(%arg0: i32) -> (i32, i32) {
    %c0_i32 = arith.constant 0 : i32
    %c0_i32_0 = arith.constant 0 : i32
    %c0_i32_1 = arith.constant 0 : i32
    return %c0_i32, %c0_i32_0 : i32, i32
  }
  func.func @transform_3(%arg0: i32) -> (i32, i32) {
    %c0_i32 = arith.constant 0 : i32
    %c0_i32_0 = arith.constant 0 : i32
    %c0_i32_1 = arith.constant 0 : i32
    return %c0_i32, %c0_i32_0 : i32, i32
  }
  func.func @transform_4(%arg0: i32) -> (i32, i32) {
    %c0_i32 = arith.constant 0 : i32
    %c0_i32_0 = arith.constant 0 : i32
    %c0_i32_1 = arith.constant 0 : i32
    return %c0_i32, %c0_i32_0 : i32, i32
  }
  func.func @transform_5(%arg0: i32) -> (i32, i32) {
    %c0_i32 = arith.constant 0 : i32
    %c0_i32_0 = arith.constant 0 : i32
    %c0_i32_1 = arith.constant 0 : i32
    return %c0_i32, %c0_i32_0 : i32, i32
  }
  func.func @transform_6(%arg0: i32) -> (i32, i32) {
    %c0_i32 = arith.constant 0 : i32
    %c0_i32_0 = arith.constant 0 : i32
    %c0_i32_1 = arith.constant 0 : i32
    return %c0_i32, %c0_i32_0 : i32, i32
  }
  func.func @transform_7(%arg0: i32) -> (i32, i32) {
    %c0_i32 = arith.constant 0 : i32
    %c0_i32_0 = arith.constant 0 : i32
    %c0_i32_1 = arith.constant 0 : i32
    return %c0_i32, %c0_i32_0 : i32, i32
  }
  func.func @transform_8(%arg0: i32) -> (i32, i32) {
    %c0_i32 = arith.constant 0 : i32
    %c0_i32_0 = arith.constant 0 : i32
    %c0_i32_1 = arith.constant 0 : i32
    return %c0_i32, %c0_i32_0 : i32, i32
  }
  func.func @transform_9(%arg0: i32) -> (i32, i32) {
    %c0_i32 = arith.constant 0 : i32
    %c0_i32_0 = arith.constant 0 : i32
    %c0_i32_1 = arith.constant 0 : i32
    return %c0_i32, %c0_i32_0 : i32, i32
  }
  func.func @transform_10(%arg0: i32) -> (i32, i32) {
    %c0_i32 = arith.constant 0 : i32
    %c0_i32_0 = arith.constant 0 : i32
    %c0_i32_1 = arith.constant 0 : i32
    return %c0_i32, %c0_i32_0 : i32, i32
  }
  func.func @transform_11(%arg0: i32) -> (i32, i32) {
    %c0_i32 = arith.constant 0 : i32
    %c0_i32_0 = arith.constant 0 : i32
    %c0_i32_1 = arith.constant 0 : i32
    return %c0_i32, %c0_i32_0 : i32, i32
  }
  func.func @transform_12(%arg0: i32) -> (i32, i32) {
    %c0_i32 = arith.constant 0 : i32
    %c0_i32_0 = arith.constant 0 : i32
    %c0_i32_1 = arith.constant 0 : i32
    return %c0_i32, %c0_i32_0 : i32, i32
  }
  func.func @transform_13(%arg0: i32) -> (i32, i32) {
    %c0_i32 = arith.constant 0 : i32
    %c0_i32_0 = arith.constant 0 : i32
    %c0_i32_1 = arith.constant 0 : i32
    return %c0_i32, %c0_i32_0 : i32, i32
  }
  func.func @transform_14(%arg0: i32) -> (i32, i32) {
    %c0_i32 = arith.constant 0 : i32
    %c0_i32_0 = arith.constant 0 : i32
    %c0_i32_1 = arith.constant 0 : i32
    return %c0_i32, %c0_i32_0 : i32, i32
  }
  func.func @transform_15(%arg0: i32) -> (i32, i32) {
    %c0_i32 = arith.constant 0 : i32
    %c0_i32_0 = arith.constant 0 : i32
    %c0_i32_1 = arith.constant 0 : i32
    return %c0_i32, %c0_i32_0 : i32, i32
  }
  func.func @transform_16(%arg0: i32) -> (i32, i32) {
    %c0_i32 = arith.constant 0 : i32
    %c0_i32_0 = arith.constant 0 : i32
    %c0_i32_1 = arith.constant 0 : i32
    return %c0_i32, %c0_i32_0 : i32, i32
  }
  func.func @transform_17(%arg0: i32) -> (i32, i32, i32) {
    %c0_i32 = arith.constant 0 : i32
    %c0_i32_0 = arith.constant 0 : i32
    %c0_i32_1 = arith.constant 0 : i32
    return %arg0, %c0_i32, %c0_i32_0 : i32, i32, i32
  }
}

</mosaic_0001>

<llo_original>
// kernel: _lambda_.1
$region0: #{_lambda_.1}
  #allocation0 [shape = 'u32[]', space=smem, size = 0x4, offset = 0x4, fixed_abs, tag = 'smem constant byte address 0x4 - core index']
  #allocation1 [shape = 'u32[144,128]{1,0:T(1,128)}', space=vmem, size = 0x12000, scoped, tag = 'internal scratch']
  %s0 = inlined_call_operand.vmem [shape: f32[2,1,256], index: 0, kind: input, shape index: {}]
  %s1 = inlined_call_operand.hbm [shape: f32[9,256], index: 1, kind: input, shape index: {}]
  %s2 = inlined_call_operand.hbm [shape: f32[25,256], index: 2, kind: input, shape index: {}]
  %s3 = inlined_call_operand.hbm [shape: f32[16,9], index: 3, kind: input, shape index: {}]
  %s4 = inlined_call_operand.hbm [shape: f32[64,16], index: 4, kind: input, shape index: {}]
  %s5 = inlined_call_operand.hbm [shape: f32[64,9], index: 5, kind: input, shape index: {}]
  %s6 = inlined_call_operand.hbm [shape: f32[64,64], index: 6, kind: input, shape index: {}]
  %s7 = inlined_call_operand.hbm [shape: f32[16,64], index: 7, kind: input, shape index: {}]
  %s8 = inlined_call_operand.hbm [shape: f32[64,16], index: 8, kind: input, shape index: {}]
  %s9 = inlined_call_operand.vmem [shape: f32[64,16], index: 9, kind: input, shape index: {}]
  %s10 = inlined_call_operand.hbm [shape: f32[32,64], index: 10, kind: input, shape index: {}]
  %s11 = inlined_call_operand.hbm [shape: f32[32,25], index: 11, kind: input, shape index: {}]
  %s12 = inlined_call_operand.hbm [shape: f32[32,32], index: 12, kind: input, shape index: {}]
  %s13 = inlined_call_operand.hbm [shape: f32[8,32], index: 13, kind: input, shape index: {}]
  %s14 = inlined_call_operand.hbm [shape: f32[32,8], index: 14, kind: input, shape index: {}]
  %s15 = inlined_call_operand.hbm [shape: f32[32,64], index: 15, kind: input, shape index: {}]
  %s16 = inlined_call_operand.vmem [shape: f32[16,32], index: 16, kind: input, shape index: {}]
  %s17 = inlined_call_operand.vmem [shape: f32[2,16,256], index: 17, kind: output, shape index: {}]
  %s18 = sld [smem:[#allocation0]]
  $region157: #{_lambda_.1} parent=0
    _
  %s20 = ssub.s32 1, %s18
  %s21 = scalar_select 0, %s20, %s18
  $region1: #{_lambda_.1} parent=0
    #allocation2 [shape = 'u8[16384]{0}', space=vmem, size = 0x4000, scoped, tag = 'input window, operand 1, single buffered']
    #allocation3 [shape = 's32[2]{0}', space=sflag, size = 0x8, scoped, tag = 'scoped memory for _lambda_.1']
    #allocation4 [shape = 'u8[32768]{0}', space=vmem, size = 0x8000, scoped, tag = 'input window, operand 2, single buffered']
    #allocation5 [shape = 's32[1]{0}', space=sflag, size = 0x4, scoped, tag = 'scoped memory for _lambda_.1']
    #allocation6 [shape = 'u8[8192]{0}', space=vmem, size = 0x2000, scoped, tag = 'input window, operand 3, single buffered']
    #allocation7 [shape = 'u8[32768]{0}', space=vmem, size = 0x8000, scoped, tag = 'input window, operand 4, single buffered']
    #allocation8 [shape = 's32[1]{0}', space=sflag, size = 0x4, scoped, tag = 'scoped memory for _lambda_.1']
    #allocation9 [shape = 'u8[32768]{0}', space=vmem, size = 0x8000, scoped, tag = 'input window, operand 5, single buffered']
    #allocation10 [shape = 'u8[32768]{0}', space=vmem, size = 0x8000, scoped, tag = 'input window, operand 6, single buffered']
    #allocation11 [shape = 's32[1]{0}', space=sflag, size = 0x4, scoped, tag = 'scoped memory for _lambda_.1']
    #allocation12 [shape = 'u8[8192]{0}', space=vmem, size = 0x2000, scoped, tag = 'input window, operand 7, single buffered']
    #allocation13 [shape = 'u8[32768]{0}', space=vmem, size = 0x8000, scoped, tag = 'input window, operand 8, single buffered']
    #allocation14 [shape = 's32[1]{0}', space=sflag, size = 0x4, scoped, tag = 'scoped memory for _lambda_.1']
    #allocation15 [shape = 'u8[16384]{0}', space=vmem, size = 0x4000, scoped, tag = 'input window, operand 10, single buffered']
    #allocation16 [shape = 'u8[16384]{0}', space=vmem, size = 0x4000, scoped, tag = 'input window, operand 11, single buffered']
    #allocation17 [shape = 's32[1]{0}', space=sflag, size = 0x4, scoped, tag = 'scoped memory for _lambda_.1']
    #allocation18 [shape = 'u8[16384]{0}', space=vmem, size = 0x4000, scoped, tag = 'input window, operand 12, single buffered']
    #allocation19 [shape = 'u8[4096]{0}', space=vmem, size = 0x1000, scoped, tag = 'input window, operand 13, single buffered']
    #allocation20 [shape = 's32[1]{0}', space=sflag, size = 0x4, scoped, tag = 'scoped memory for _lambda_.1']
    #allocation21 [shape = 'u8[16384]{0}', space=vmem, size = 0x4000, scoped, tag = 'input window, operand 14, single buffered']
    #allocation22 [shape = 'u8[16384]{0}', space=vmem, size = 0x4000, scoped, tag = 'input window, operand 15, single buffered']
    #allocation23 [shape = 's32[1]{0}', space=sflag, size = 0x4, scoped, tag = 'scoped memory for _lambda_.1']
    %22 = vsyncpa [#allocation3], 0
    %23 = vsyncpa [#allocation5], 0
    %24 = vsyncpa [#allocation8], 0
    %25 = vsyncpa [#allocation11], 0
    %26 = vsyncpa [#allocation14], 0
    %27 = vsyncpa [#allocation17], 0
    %28 = vsyncpa [#allocation20], 0
    %29 = vsyncpa [#allocation23], 0
    loop: start=0, step=1, limit=4
    $region2: #{_lambda_.1} parent=1 // loop_pre_header
      _
    $region3: #{_lambda_.1} parent=1 // loop_header
      %s31 = sphi 0, %s35
      %p32 = scmp.ge.s32.totalorder %s31, 4
      %s41 = sphi 0, %s43
      %s44 = sphi 0, %s41
      %s45 = sphi 0, %s44
      %s61 = sphi 0, %s45
      %s65 = sphi 0, %s65
      %s67 = sphi 0, %s65
      %s68 = sphi 0, %s67
      %s82 = sphi 0, %s68
      %s86 = sphi 0, %s86
      %s88 = sphi 0, %s86
      %s89 = sphi 0, %s88
      %s103 = sphi 0, %s89
      %s107 = sphi 0, %s107
      %s109 = sphi 0, %s107
      %s110 = sphi 0, %s109
      %s124 = sphi 0, %s110
      %s128 = sphi 0, %s128
      %s130 = sphi 0, %s128
      %s131 = sphi 0, %s130
      %s145 = sphi 0, %s131
      %s149 = sphi 0, %s149
      %s151 = sphi 0, %s149
      %s152 = sphi 0, %s151
      %s166 = sphi 0, %s152
      %s170 = sphi 0, %s170
      %s172 = sphi 0, %s170
      %s173 = sphi 0, %s172
      %s187 = sphi 0, %s173
      %s191 = sphi 0, %s191
      %s193 = sphi 0, %s191
      %s194 = sphi 0, %s193
      %s208 = sphi 0, %s194
      %s212 = sphi 0, %s212
      %s214 = sphi 0, %s212
      %s215 = sphi 0, %s214
      %s229 = sphi 0, %s215
      %s233 = sphi 0, %s233
      %s235 = sphi 0, %s233
      %s236 = sphi 0, %s235
      %s250 = sphi 0, %s236
      %s254 = sphi 0, %s254
      %s256 = sphi 0, %s254
      %s257 = sphi 0, %s256
      %s271 = sphi 0, %s257
      %s275 = sphi 0, %s275
      %s277 = sphi 0, %s275
      %s278 = sphi 0, %s277
      %s292 = sphi 0, %s278
      %s296 = sphi 0, %s296
      %s298 = sphi 0, %s296
      %s299 = sphi 0, %s298
      %s313 = sphi 0, %s299
      %s317 = sphi 0, %s317
      %s319 = sphi 0, %s317
      %s320 = sphi 0, %s319
      %s334 = sphi 0, %s320
      %s338 = sphi 0, %s338
      %s340 = sphi 0, %s338
      %s341 = sphi 0, %s340
      %s355 = sphi 0, %s341
      %s359 = sphi 0, %s359
      %s361 = sphi 0, %s359
      %s362 = sphi 0, %s361
      %s376 = sphi 0, %s362
      %s380 = sphi 0, %s380
      %s382 = sphi 0, %s380
      %s383 = sphi 0, %s382
      %s397 = sphi 0, %s383
      %s403 = sphi 0, %s405
      %s406 = sphi 0, %s403
      %s407 = sphi 0, %s406
      %s423 = sphi 0, %s407
    $region4: #{_lambda_.1} parent=1 // loop_header_branch
      %34 = sbr.rel (%p32) target = $region8
    $region5: #{_lambda_.1} parent=1 // loop_body
      %s36 = ssub.s32 %s31, 1
      %s37 = ssub.s32 %s31, 2
      %s38 = sadd.s32 %s31, 1
      %s39 = ssub.s32 %s31, %s38
      %p40 = scmp.eq.s32.totalorder %s39, 0
      %s42 = sadd.s32 %s41, 1
      %s43 = scalar_select %p40, %s41, %s42
      %p46 = pneg %p40
      %p47 = scmp.eq.s32.totalorder %s31, 1
      %p48 = por %p46, %p47
      %p49 = scmp.ne.s32.totalorder %s41, %s44
      %p50 = scmp.eq.s32.totalorder %s31, 0
      %p51 = por %p49, %p50
      %p52 = scmp.ne.s32.totalorder %s41, %s44
      %p53 = scmp.eq.s32.totalorder %s36, 1
      %p54 = por %p52, %p53
      %p55 = scmp.ne.s32.totalorder %s44, %s45
      %p56 = scmp.eq.s32.totalorder %s36, 0
      %p57 = por %p55, %p56
      %p58 = scmp.ne.s32.totalorder %s44, %s45
      %p59 = scmp.eq.s32.totalorder %s37, 1
      %p60 = por %p58, %p59
      %p62 = scmp.ne.s32.totalorder %s45, %s61
      %p63 = scmp.eq.s32.totalorder %s37, 0
      %p64 = por %p62, %p63
      %s66 = sadd.s32 %s65, 1
      %p69 = scmp.eq.s32.totalorder %s31, 1
      %p70 = scmp.ne.s32.totalorder %s65, %s67
      %p71 = scmp.eq.s32.totalorder %s31, 0
      %p72 = por %p70, %p71
      %p73 = scmp.ne.s32.totalorder %s65, %s67
      %p74 = scmp.eq.s32.totalorder %s36, 1
      %p75 = por %p73, %p74
      %p76 = scmp.ne.s32.totalorder %s67, %s68
      %p77 = scmp.eq.s32.totalorder %s36, 0
      %p78 = por %p76, %p77
      %p79 = scmp.ne.s32.totalorder %s67, %s68
      %p80 = scmp.eq.s32.totalorder %s37, 1
      %p81 = por %p79, %p80
      %p83 = scmp.ne.s32.totalorder %s68, %s82
      %p84 = scmp.eq.s32.totalorder %s37, 0
      %p85 = por %p83, %p84
      %s87 = sadd.s32 %s86, 1
      %p90 = scmp.eq.s32.totalorder %s31, 1
      %p91 = scmp.ne.s32.totalorder %s86, %s88
      %p92 = scmp.eq.s32.totalorder %s31, 0
      %p93 = por %p91, %p92
      %p94 = scmp.ne.s32.totalorder %s86, %s88
      %p95 = scmp.eq.s32.totalorder %s36, 1
      %p96 = por %p94, %p95
      %p97 = scmp.ne.s32.totalorder %s88, %s89
      %p98 = scmp.eq.s32.totalorder %s36, 0
      %p99 = por %p97, %p98
      %p100 = scmp.ne.s32.totalorder %s88, %s89
      %p101 = scmp.eq.s32.totalorder %s37, 1
      %p102 = por %p100, %p101
      %p104 = scmp.ne.s32.totalorder %s89, %s103
      %p105 = scmp.eq.s32.totalorder %s37, 0
      %p106 = por %p104, %p105
      %s108 = sadd.s32 %s107, 1
      %p111 = scmp.eq.s32.totalorder %s31, 1
      %p112 = scmp.ne.s32.totalorder %s107, %s109
      %p113 = scmp.eq.s32.totalorder %s31, 0
      %p114 = por %p112, %p113
      %p115 = scmp.ne.s32.totalorder %s107, %s109
      %p116 = scmp.eq.s32.totalorder %s36, 1
      %p117 = por %p115, %p116
      %p118 = scmp.ne.s32.totalorder %s109, %s110
      %p119 = scmp.eq.s32.totalorder %s36, 0
      %p120 = por %p118, %p119
      %p121 = scmp.ne.s32.totalorder %s109, %s110
      %p122 = scmp.eq.s32.totalorder %s37, 1
      %p123 = por %p121, %p122
      %p125 = scmp.ne.s32.totalorder %s110, %s124
      %p126 = scmp.eq.s32.totalorder %s37, 0
      %p127 = por %p125, %p126
      %s129 = sadd.s32 %s128, 1
      %p132 = scmp.eq.s32.totalorder %s31, 1
      %p133 = scmp.ne.s32.totalorder %s128, %s130
      %p134 = scmp.eq.s32.totalorder %s31, 0
      %p135 = por %p133, %p134
      %p136 = scmp.ne.s32.totalorder %s128, %s130
      %p137 = scmp.eq.s32.totalorder %s36, 1
      %p138 = por %p136, %p137
      %p139 = scmp.ne.s32.totalorder %s130, %s131
      %p140 = scmp.eq.s32.totalorder %s36, 0
      %p141 = por %p139, %p140
      %p142 = scmp.ne.s32.totalorder %s130, %s131
      %p143 = scmp.eq.s32.totalorder %s37, 1
      %p144 = por %p142, %p143
      %p146 = scmp.ne.s32.totalorder %s131, %s145
      %p147 = scmp.eq.s32.totalorder %s37, 0
      %p148 = por %p146, %p147
      %s150 = sadd.s32 %s149, 1
      %p153 = scmp.eq.s32.totalorder %s31, 1
      %p154 = scmp.ne.s32.totalorder %s149, %s151
      %p155 = scmp.eq.s32.totalorder %s31, 0
      %p156 = por %p154, %p155
      %p157 = scmp.ne.s32.totalorder %s149, %s151
      %p158 = scmp.eq.s32.totalorder %s36, 1
      %p159 = por %p157, %p158
      %p160 = scmp.ne.s32.totalorder %s151, %s152
      %p161 = scmp.eq.s32.totalorder %s36, 0
      %p162 = por %p160, %p161
      %p163 = scmp.ne.s32.totalorder %s151, %s152
      %p164 = scmp.eq.s32.totalorder %s37, 1
      %p165 = por %p163, %p164
      %p167 = scmp.ne.s32.totalorder %s152, %s166
      %p168 = scmp.eq.s32.totalorder %s37, 0
      %p169 = por %p167, %p168
      %s171 = sadd.s32 %s170, 1
      %p174 = scmp.eq.s32.totalorder %s31, 1
      %p175 = scmp.ne.s32.totalorder %s170, %s172
      %p176 = scmp.eq.s32.totalorder %s31, 0
      %p177 = por %p175, %p176
      %p178 = scmp.ne.s32.totalorder %s170, %s172
      %p179 = scmp.eq.s32.totalorder %s36, 1
      %p180 = por %p178, %p179
      %p181 = scmp.ne.s32.totalorder %s172, %s173
      %p182 = scmp.eq.s32.totalorder %s36, 0
      %p183 = por %p181, %p182
      %p184 = scmp.ne.s32.totalorder %s172, %s173
      %p185 = scmp.eq.s32.totalorder %s37, 1
      %p186 = por %p184, %p185
      %p188 = scmp.ne.s32.totalorder %s173, %s187
      %p189 = scmp.eq.s32.totalorder %s37, 0
      %p190 = por %p188, %p189
      %s192 = sadd.s32 %s191, 1
      %p195 = scmp.eq.s32.totalorder %s31, 1
      %p196 = scmp.ne.s32.totalorder %s191, %s193
      %p197 = scmp.eq.s32.totalorder %s31, 0
      %p198 = por %p196, %p197
      %p199 = scmp.ne.s32.totalorder %s191, %s193
      %p200 = scmp.eq.s32.totalorder %s36, 1
      %p201 = por %p199, %p200
      %p202 = scmp.ne.s32.totalorder %s193, %s194
      %p203 = scmp.eq.s32.totalorder %s36, 0
      %p204 = por %p202, %p203
      %p205 = scmp.ne.s32.totalorder %s193, %s194
      %p206 = scmp.eq.s32.totalorder %s37, 1
      %p207 = por %p205, %p206
      %p209 = scmp.ne.s32.totalorder %s194, %s208
      %p210 = scmp.eq.s32.totalorder %s37, 0
      %p211 = por %p209, %p210
      %s213 = sadd.s32 %s212, 1
      %p216 = scmp.eq.s32.totalorder %s31, 1
      %p217 = scmp.ne.s32.totalorder %s212, %s214
      %p218 = scmp.eq.s32.totalorder %s31, 0
      %p219 = por %p217, %p218
      %p220 = scmp.ne.s32.totalorder %s212, %s214
      %p221 = scmp.eq.s32.totalorder %s36, 1
      %p222 = por %p220, %p221
      %p223 = scmp.ne.s32.totalorder %s214, %s215
      %p224 = scmp.eq.s32.totalorder %s36, 0
      %p225 = por %p223, %p224
      %p226 = scmp.ne.s32.totalorder %s214, %s215
      %p227 = scmp.eq.s32.totalorder %s37, 1
      %p228 = por %p226, %p227
      %p230 = scmp.ne.s32.totalorder %s215, %s229
      %p231 = scmp.eq.s32.totalorder %s37, 0
      %p232 = por %p230, %p231
      %s234 = sadd.s32 %s233, 1
      %p237 = scmp.eq.s32.totalorder %s31, 1
      %p238 = scmp.ne.s32.totalorder %s233, %s235
      %p239 = scmp.eq.s32.totalorder %s31, 0
      %p240 = por %p238, %p239
      %p241 = scmp.ne.s32.totalorder %s233, %s235
      %p242 = scmp.eq.s32.totalorder %s36, 1
      %p243 = por %p241, %p242
      %p244 = scmp.ne.s32.totalorder %s235, %s236
      %p245 = scmp.eq.s32.totalorder %s36, 0
      %p246 = por %p244, %p245
      %p247 = scmp.ne.s32.totalorder %s235, %s236
      %p248 = scmp.eq.s32.totalorder %s37, 1
      %p249 = por %p247, %p248
      %p251 = scmp.ne.s32.totalorder %s236, %s250
      %p252 = scmp.eq.s32.totalorder %s37, 0
      %p253 = por %p251, %p252
      %s255 = sadd.s32 %s254, 1
      %p258 = scmp.eq.s32.totalorder %s31, 1
      %p259 = scmp.ne.s32.totalorder %s254, %s256
      %p260 = scmp.eq.s32.totalorder %s31, 0
      %p261 = por %p259, %p260
      %p262 = scmp.ne.s32.totalorder %s254, %s256
      %p263 = scmp.eq.s32.totalorder %s36, 1
      %p264 = por %p262, %p263
      %p265 = scmp.ne.s32.totalorder %s256, %s257
      %p266 = scmp.eq.s32.totalorder %s36, 0
      %p267 = por %p265, %p266
      %p268 = scmp.ne.s32.totalorder %s256, %s257
      %p269 = scmp.eq.s32.totalorder %s37, 1
      %p270 = por %p268, %p269
      %p272 = scmp.ne.s32.totalorder %s257, %s271
      %p273 = scmp.eq.s32.totalorder %s37, 0
      %p274 = por %p272, %p273
      %s276 = sadd.s32 %s275, 1
      %p279 = scmp.eq.s32.totalorder %s31, 1
      %p280 = scmp.ne.s32.totalorder %s275, %s277
      %p281 = scmp.eq.s32.totalorder %s31, 0
      %p282 = por %p280, %p281
      %p283 = scmp.ne.s32.totalorder %s275, %s277
      %p284 = scmp.eq.s32.totalorder %s36, 1
      %p285 = por %p283, %p284
      %p286 = scmp.ne.s32.totalorder %s277, %s278
      %p287 = scmp.eq.s32.totalorder %s36, 0
      %p288 = por %p286, %p287
      %p289 = scmp.ne.s32.totalorder %s277, %s278
      %p290 = scmp.eq.s32.totalorder %s37, 1
      %p291 = por %p289, %p290
      %p293 = scmp.ne.s32.totalorder %s278, %s292
      %p294 = scmp.eq.s32.totalorder %s37, 0
      %p295 = por %p293, %p294
      %s297 = sadd.s32 %s296, 1
      %p300 = scmp.eq.s32.totalorder %s31, 1
      %p301 = scmp.ne.s32.totalorder %s296, %s298
      %p302 = scmp.eq.s32.totalorder %s31, 0
      %p303 = por %p301, %p302
      %p304 = scmp.ne.s32.totalorder %s296, %s298
      %p305 = scmp.eq.s32.totalorder %s36, 1
      %p306 = por %p304, %p305
      %p307 = scmp.ne.s32.totalorder %s298, %s299
      %p308 = scmp.eq.s32.totalorder %s36, 0
      %p309 = por %p307, %p308
      %p310 = scmp.ne.s32.totalorder %s298, %s299
      %p311 = scmp.eq.s32.totalorder %s37, 1
      %p312 = por %p310, %p311
      %p314 = scmp.ne.s32.totalorder %s299, %s313
      %p315 = scmp.eq.s32.totalorder %s37, 0
      %p316 = por %p314, %p315
      %s318 = sadd.s32 %s317, 1
      %p321 = scmp.eq.s32.totalorder %s31, 1
      %p322 = scmp.ne.s32.totalorder %s317, %s319
      %p323 = scmp.eq.s32.totalorder %s31, 0
      %p324 = por %p322, %p323
      %p325 = scmp.ne.s32.totalorder %s317, %s319
      %p326 = scmp.eq.s32.totalorder %s36, 1
      %p327 = por %p325, %p326
      %p328 = scmp.ne.s32.totalorder %s319, %s320
      %p329 = scmp.eq.s32.totalorder %s36, 0
      %p330 = por %p328, %p329
      %p331 = scmp.ne.s32.totalorder %s319, %s320
      %p332 = scmp.eq.s32.totalorder %s37, 1
      %p333 = por %p331, %p332
      %p335 = scmp.ne.s32.totalorder %s320, %s334
      %p336 = scmp.eq.s32.totalorder %s37, 0
      %p337 = por %p335, %p336
      %s339 = sadd.s32 %s338, 1
      %p342 = scmp.eq.s32.totalorder %s31, 1
      %p343 = scmp.ne.s32.totalorder %s338, %s340
      %p344 = scmp.eq.s32.totalorder %s31, 0
      %p345 = por %p343, %p344
      %p346 = scmp.ne.s32.totalorder %s338, %s340
      %p347 = scmp.eq.s32.totalorder %s36, 1
      %p348 = por %p346, %p347
      %p349 = scmp.ne.s32.totalorder %s340, %s341
      %p350 = scmp.eq.s32.totalorder %s36, 0
      %p351 = por %p349, %p350
      %p352 = scmp.ne.s32.totalorder %s340, %s341
      %p353 = scmp.eq.s32.totalorder %s37, 1
      %p354 = por %p352, %p353
      %p356 = scmp.ne.s32.totalorder %s341, %s355
      %p357 = scmp.eq.s32.totalorder %s37, 0
      %p358 = por %p356, %p357
      %s360 = sadd.s32 %s359, 1
      %p363 = scmp.eq.s32.totalorder %s31, 1
      %p364 = scmp.ne.s32.totalorder %s359, %s361
      %p365 = scmp.eq.s32.totalorder %s31, 0
      %p366 = por %p364, %p365
      %p367 = scmp.ne.s32.totalorder %s359, %s361
      %p368 = scmp.eq.s32.totalorder %s36, 1
      %p369 = por %p367, %p368
      %p370 = scmp.ne.s32.totalorder %s361, %s362
      %p371 = scmp.eq.s32.totalorder %s36, 0
      %p372 = por %p370, %p371
      %p373 = scmp.ne.s32.totalorder %s361, %s362
      %p374 = scmp.eq.s32.totalorder %s37, 1
      %p375 = por %p373, %p374
      %p377 = scmp.ne.s32.totalorder %s362, %s376
      %p378 = scmp.eq.s32.totalorder %s37, 0
      %p379 = por %p377, %p378
      %s381 = sadd.s32 %s380, 1
      %p384 = scmp.eq.s32.totalorder %s31, 1
      %p385 = scmp.ne.s32.totalorder %s380, %s382
      %p386 = scmp.eq.s32.totalorder %s31, 0
      %p387 = por %p385, %p386
      %p388 = scmp.ne.s32.totalorder %s380, %s382
      %p389 = scmp.eq.s32.totalorder %s36, 1
      %p390 = por %p388, %p389
      %p391 = scmp.ne.s32.totalorder %s382, %s383
      %p392 = scmp.eq.s32.totalorder %s36, 0
      %p393 = por %p391, %p392
      %p394 = scmp.ne.s32.totalorder %s382, %s383
      %p395 = scmp.eq.s32.totalorder %s37, 1
      %p396 = por %p394, %p395
      %p398 = scmp.ne.s32.totalorder %s383, %s397
      %p399 = scmp.eq.s32.totalorder %s37, 0
      %p400 = por %p398, %p399
      %s401 = ssub.s32 %s31, %s38
      %p402 = scmp.eq.s32.totalorder %s401, 0
      %s404 = sadd.s32 %s403, 1
      %s405 = scalar_select %p402, %s403, %s404
      %p408 = pneg %p402
      %p409 = scmp.eq.s32.totalorder %s31, 1
      %p410 = por %p408, %p409
      %p411 = scmp.ne.s32.totalorder %s403, %s406
      %p412 = scmp.eq.s32.totalorder %s31, 0
      %p413 = por %p411, %p412
      %p414 = scmp.ne.s32.totalorder %s403, %s406
      %p415 = scmp.eq.s32.totalorder %s36, 1
      %p416 = por %p414, %p415
      %p417 = scmp.ne.s32.totalorder %s406, %s407
      %p418 = scmp.eq.s32.totalorder %s36, 0
      %p419 = por %p417, %p418
      %p420 = scmp.ne.s32.totalorder %s406, %s407
      %p421 = scmp.eq.s32.totalorder %s37, 1
      %p422 = por %p420, %p421
      %p424 = scmp.ne.s32.totalorder %s407, %s423
      %p425 = scmp.eq.s32.totalorder %s37, 0
      %p426 = por %p424, %p425
      %p427 = scmp.le.s32.totalorder 1, %s31
      %p428 = scmp.lt.s32.totalorder %s31, 3
      %p429 = pnand %p427, %p428
      %p430 = pneg %p429
      // Predicated region
      $region9: #{_lambda_.1} parent=5 // pred_check
        _
      $region10: #{_lambda_.1} parent=5 // pred_check_branch
        %432 = sbr.rel (%p429) target = $region12
      $region11: #{_lambda_.1} parent=5 // pred_region
        %s433 = ssub.s32 %s31, 1
        // Predicated region
        $region13: #{_lambda_.1} parent=11 // pred_check
          %p434 = pneg %p78
        $region14: #{_lambda_.1} parent=11 // pred_check_branch
          %436 = sbr.rel (%p434) target = $region16
        $region15: #{_lambda_.1} parent=11 // pred_region
          %s438 = ssub.s32 512, 512
          %439 = vsyncadd [#allocation3], %s438
          %s440 = sshll.u32 [#allocation2], 4
          %s441 = int_to_ptr.vmem [resolvable:$true] %s440
          %446 = dma.hbm_to_vmem [thread:$0]  %s1, 512, %s441, [#allocation3], 256, 256, 16
        $region16: #{_lambda_.1} parent=11 // pred_fallthru
          _
        // Predicated region
        $region17: #{_lambda_.1} parent=11 // pred_check
          %p447 = pneg %p99
        $region18: #{_lambda_.1} parent=11 // pred_check_branch
          %449 = sbr.rel (%p447) target = $region20
        $region19: #{_lambda_.1} parent=11 // pred_region
          %s451 = ssub.s32 1024, 1024
          %452 = vsyncadd [#allocation5], %s451
          %s453 = sshll.u32 [#allocation4], 4
          %s454 = int_to_ptr.vmem [resolvable:$true] %s453
          %459 = dma.hbm_to_vmem [thread:$0]  %s2, 1024, %s454, [#allocation5], 256, 256, 16
        $region20: #{_lambda_.1} parent=11 // pred_fallthru
          _
        // Predicated region
        $region21: #{_lambda_.1} parent=11 // pred_check
          %p460 = pneg %p120
        $region22: #{_lambda_.1} parent=11 // pred_check_branch
          %462 = sbr.rel (%p460) target = $region24
        $region23: #{_lambda_.1} parent=11 // pred_region
          %s464 = ssub.s32 256, 256
          %465 = vsyncadd [#allocation5], %s464
          %s466 = sshll.u32 [#allocation6], 4
          %s467 = int_to_ptr.vmem [resolvable:$true] %s466
          %472 = dma.hbm_to_vmem [thread:$0]  %s3, 256, %s467, [#allocation5], 128, 128, 8
        $region24: #{_lambda_.1} parent=11 // pred_fallthru
          _
        // Predicated region
        $region25: #{_lambda_.1} parent=11 // pred_check
          %p473 = pneg %p141
        $region26: #{_lambda_.1} parent=11 // pred_check_branch
          %475 = sbr.rel (%p473) target = $region28
        $region27: #{_lambda_.1} parent=11 // pred_region
          %s477 = ssub.s32 1024, 1024
          %478 = vsyncadd [#allocation8], %s477
          %s479 = sshll.u32 [#allocation7], 4
          %s480 = int_to_ptr.vmem [resolvable:$true] %s479
          %485 = dma.hbm_to_vmem [thread:$0]  %s4, 1024, %s480, [#allocation8], 128, 128, 8
        $region28: #{_lambda_.1} parent=11 // pred_fallthru
          _
        // Predicated region
        $region29: #{_lambda_.1} parent=11 // pred_check
          %p486 = pneg %p162
        $region30: #{_lambda_.1} parent=11 // pred_check_branch
          %488 = sbr.rel (%p486) target = $region32
        $region31: #{_lambda_.1} parent=11 // pred_region
          %s490 = ssub.s32 1024, 1024
          %491 = vsyncadd [#allocation8], %s490
          %s492 = sshll.u32 [#allocation9], 4
          %s493 = int_to_ptr.vmem [resolvable:$true] %s492
          %498 = dma.hbm_to_vmem [thread:$0]  %s5, 1024, %s493, [#allocation8], 128, 128, 8
        $region32: #{_lambda_.1} parent=11 // pred_fallthru
          _
        // Predicated region
        $region33: #{_lambda_.1} parent=11 // pred_check
          %p499 = pneg %p183
        $region34: #{_lambda_.1} parent=11 // pred_check_branch
          %501 = sbr.rel (%p499) target = $region36
        $region35: #{_lambda_.1} parent=11 // pred_region
          %s503 = ssub.s32 1024, 1024
          %504 = vsyncadd [#allocation11], %s503
          %s505 = sshll.u32 [#allocation10], 4
          %s506 = int_to_ptr.vmem [resolvable:$true] %s505
          %511 = dma.hbm_to_vmem [thread:$0]  %s6, 1024, %s506, [#allocation11], 128, 128, 8
        $region36: #{_lambda_.1} parent=11 // pred_fallthru
          _
        // Predicated region
        $region37: #{_lambda_.1} parent=11 // pred_check
          %p512 = pneg %p204
        $region38: #{_lambda_.1} parent=11 // pred_check_branch
          %514 = sbr.rel (%p512) target = $region40
        $region39: #{_lambda_.1} parent=11 // pred_region
          %s516 = ssub.s32 256, 256
          %517 = vsyncadd [#allocation11], %s516
          %s518 = sshll.u32 [#allocation12], 4
          %s519 = int_to_ptr.vmem [resolvable:$true] %s518
          %524 = dma.hbm_to_vmem [thread:$0]  %s7, 256, %s519, [#allocation11], 128, 128, 8
        $region40: #{_lambda_.1} parent=11 // pred_fallthru
          _
        // Predicated region
        $region41: #{_lambda_.1} parent=11 // pred_check
          %p525 = pneg %p225
        $region42: #{_lambda_.1} parent=11 // pred_check_branch
          %527 = sbr.rel (%p525) target = $region44
        $region43: #{_lambda_.1} parent=11 // pred_region
          %s529 = ssub.s32 1024, 1024
          %530 = vsyncadd [#allocation14], %s529
          %s531 = sshll.u32 [#allocation13], 4
          %s532 = int_to_ptr.vmem [resolvable:$true] %s531
          %537 = dma.hbm_to_vmem [thread:$0]  %s8, 1024, %s532, [#allocation14], 128, 128, 8
        $region44: #{_lambda_.1} parent=11 // pred_fallthru
          _
        // Predicated region
        $region45: #{_lambda_.1} parent=11 // pred_check
          %p538 = pneg %p246
        $region46: #{_lambda_.1} parent=11 // pred_check_branch
          %540 = sbr.rel (%p538) target = $region48
        $region47: #{_lambda_.1} parent=11 // pred_region
          _
        $region48: #{_lambda_.1} parent=11 // pred_fallthru
          _
        // Predicated region
        $region49: #{_lambda_.1} parent=11 // pred_check
          %p541 = pneg %p267
        $region50: #{_lambda_.1} parent=11 // pred_check_branch
          %543 = sbr.rel (%p541) target = $region52
        $region51: #{_lambda_.1} parent=11 // pred_region
          %s545 = ssub.s32 512, 512
          %546 = vsyncadd [#allocation14], %s545
          %s547 = sshll.u32 [#allocation15], 4
          %s548 = int_to_ptr.vmem [resolvable:$true] %s547
          %553 = dma.hbm_to_vmem [thread:$0]  %s10, 512, %s548, [#allocation14], 128, 128, 8
        $region52: #{_lambda_.1} parent=11 // pred_fallthru
          _
        // Predicated region
        $region53: #{_lambda_.1} parent=11 // pred_check
          %p554 = pneg %p288
        $region54: #{_lambda_.1} parent=11 // pred_check_branch
          %556 = sbr.rel (%p554) target = $region56
        $region55: #{_lambda_.1} parent=11 // pred_region
          %s558 = ssub.s32 512, 512
          %559 = vsyncadd [#allocation17], %s558
          %s560 = sshll.u32 [#allocation16], 4
          %s561 = int_to_ptr.vmem [resolvable:$true] %s560
          %566 = dma.hbm_to_vmem [thread:$0]  %s11, 512, %s561, [#allocation17], 128, 128, 8
        $region56: #{_lambda_.1} parent=11 // pred_fallthru
          _
        // Predicated region
        $region57: #{_lambda_.1} parent=11 // pred_check
          %p567 = pneg %p309
        $region58: #{_lambda_.1} parent=11 // pred_check_branch
          %569 = sbr.rel (%p567) target = $region60
        $region59: #{_lambda_.1} parent=11 // pred_region
          %s571 = ssub.s32 512, 512
          %572 = vsyncadd [#allocation17], %s571
          %s573 = sshll.u32 [#allocation18], 4
          %s574 = int_to_ptr.vmem [resolvable:$true] %s573
          %579 = dma.hbm_to_vmem [thread:$0]  %s12, 512, %s574, [#allocation17], 128, 128, 8
        $region60: #{_lambda_.1} parent=11 // pred_fallthru
          _
        // Predicated region
        $region61: #{_lambda_.1} parent=11 // pred_check
          %p580 = pneg %p330
        $region62: #{_lambda_.1} parent=11 // pred_check_branch
          %582 = sbr.rel (%p580) target = $region64
        $region63: #{_lambda_.1} parent=11 // pred_region
          %s584 = ssub.s32 128, 128
          %585 = vsyncadd [#allocation20], %s584
          %s587 = sshll.u32 [#allocation19], 4
          %s588 = int_to_ptr.vmem [resolvable:$true] %s587
          %590 = dma.hbm_to_vmem [thread:$0]  %s13, 128, %s588, [#allocation20]
        $region64: #{_lambda_.1} parent=11 // pred_fallthru
          _
        // Predicated region
        $region65: #{_lambda_.1} parent=11 // pred_check
          %p591 = pneg %p351
        $region66: #{_lambda_.1} parent=11 // pred_check_branch
          %593 = sbr.rel (%p591) target = $region68
        $region67: #{_lambda_.1} parent=11 // pred_region
          %s595 = ssub.s32 512, 512
          %596 = vsyncadd [#allocation20], %s595
          %s597 = sshll.u32 [#allocation21], 4
          %s598 = int_to_ptr.vmem [resolvable:$true] %s597
          %603 = dma.hbm_to_vmem [thread:$0]  %s14, 512, %s598, [#allocation20], 128, 128, 8
        $region68: #{_lambda_.1} parent=11 // pred_fallthru
          _
        // Predicated region
        $region69: #{_lambda_.1} parent=11 // pred_check
          %p604 = pneg %p372
        $region70: #{_lambda_.1} parent=11 // pred_check_branch
          %606 = sbr.rel (%p604) target = $region72
        $region71: #{_lambda_.1} parent=11 // pred_region
          %s608 = ssub.s32 512, 512
          %609 = vsyncadd [#allocation23], %s608
          %s610 = sshll.u32 [#allocation22], 4
          %s611 = int_to_ptr.vmem [resolvable:$true] %s610
          %616 = dma.hbm_to_vmem [thread:$0]  %s15, 512, %s611, [#allocation23], 128, 128, 8
        $region72: #{_lambda_.1} parent=11 // pred_fallthru
          _
        // Predicated region
        $region73: #{_lambda_.1} parent=11 // pred_check
          %p617 = pneg %p393
        $region74: #{_lambda_.1} parent=11 // pred_check_branch
          %619 = sbr.rel (%p617) target = $region76
        $region75: #{_lambda_.1} parent=11 // pred_region
          _
        $region76: #{_lambda_.1} parent=11 // pred_fallthru
          _
      $region12: #{_lambda_.1} parent=5 // pred_fallthru
        _
      %p620 = scmp.lt.s32.totalorder %s31, 2
      // Predicated region
      $region77: #{_lambda_.1} parent=5 // pred_check
        %p621 = pneg %p620
      $region78: #{_lambda_.1} parent=5 // pred_check_branch
        %623 = sbr.rel (%p621) target = $region80
      $region79: #{_lambda_.1} parent=5 // pred_region
        // Predicated region
        $region81: #{_lambda_.1} parent=79 // pred_check
          %p624 = pneg %p51
        $region82: #{_lambda_.1} parent=79 // pred_check_branch
          %626 = sbr.rel (%p624) target = $region84
        $region83: #{_lambda_.1} parent=79 // pred_region
          %p627 = scmp.lt.s32.totalorder %s31, 1
          %s628 = scalar_select %p627, %s31, 1
          %s629 = smul.addr %s628, 2
          %s630 = scalar_lea.vmem %s0, %s629
        $region84: #{_lambda_.1} parent=79 // pred_fallthru
          _
      $region80: #{_lambda_.1} parent=5 // pred_fallthru
        _
      %p631 = scmp.le.s32.totalorder 1, %s31
      %p632 = scmp.lt.s32.totalorder %s31, 3
      %p633 = pnand %p631, %p632
      %p634 = pneg %p633
      // Predicated region
      $region85: #{_lambda_.1} parent=5 // pred_check
        _
      $region86: #{_lambda_.1} parent=5 // pred_check_branch
        %636 = sbr.rel (%p633) target = $region88
      $region87: #{_lambda_.1} parent=5 // pred_region
        %s637 = ssub.s32 %s31, 1
        // Predicated region
        $region89: #{_lambda_.1} parent=87 // pred_check
          %p638 = pneg %p78
        $region90: #{_lambda_.1} parent=87 // pred_check_branch
          %640 = sbr.rel (%p638) target = $region92
        $region91: #{_lambda_.1} parent=87 // pred_region
          %641 = dma.done [#allocation3], 512
        $region92: #{_lambda_.1} parent=87 // pred_fallthru
          _
        // Predicated region
        $region93: #{_lambda_.1} parent=87 // pred_check
          %p642 = pneg %p99
        $region94: #{_lambda_.1} parent=87 // pred_check_branch
          %644 = sbr.rel (%p642) target = $region96
        $region95: #{_lambda_.1} parent=87 // pred_region
          %645 = dma.done [#allocation5], 1024
        $region96: #{_lambda_.1} parent=87 // pred_fallthru
          _
        // Predicated region
        $region97: #{_lambda_.1} parent=87 // pred_check
          %p646 = pneg %p120
        $region98: #{_lambda_.1} parent=87 // pred_check_branch
          %648 = sbr.rel (%p646) target = $region100
        $region99: #{_lambda_.1} parent=87 // pred_region
          %649 = dma.done [#allocation5], 256
        $region100: #{_lambda_.1} parent=87 // pred_fallthru
          _
        // Predicated region
        $region101: #{_lambda_.1} parent=87 // pred_check
          %p650 = pneg %p141
        $region102: #{_lambda_.1} parent=87 // pred_check_branch
          %652 = sbr.rel (%p650) target = $region104
        $region103: #{_lambda_.1} parent=87 // pred_region
          %653 = dma.done [#allocation8], 1024
        $region104: #{_lambda_.1} parent=87 // pred_fallthru
          _
        // Predicated region
        $region105: #{_lambda_.1} parent=87 // pred_check
          %p654 = pneg %p162
        $region106: #{_lambda_.1} parent=87 // pred_check_branch
          %656 = sbr.rel (%p654) target = $region108
        $region107: #{_lambda_.1} parent=87 // pred_region
          %657 = dma.done [#allocation8], 1024
        $region108: #{_lambda_.1} parent=87 // pred_fallthru
          _
        // Predicated region
        $region109: #{_lambda_.1} parent=87 // pred_check
          %p658 = pneg %p183
        $region110: #{_lambda_.1} parent=87 // pred_check_branch
          %660 = sbr.rel (%p658) target = $region112
        $region111: #{_lambda_.1} parent=87 // pred_region
          %661 = dma.done [#allocation11], 1024
        $region112: #{_lambda_.1} parent=87 // pred_fallthru
          _
        // Predicated region
        $region113: #{_lambda_.1} parent=87 // pred_check
          %p662 = pneg %p204
        $region114: #{_lambda_.1} parent=87 // pred_check_branch
          %664 = sbr.rel (%p662) target = $region116
        $region115: #{_lambda_.1} parent=87 // pred_region
          %665 = dma.done [#allocation11], 256
        $region116: #{_lambda_.1} parent=87 // pred_fallthru
          _
        // Predicated region
        $region117: #{_lambda_.1} parent=87 // pred_check
          %p666 = pneg %p225
        $region118: #{_lambda_.1} parent=87 // pred_check_branch
          %668 = sbr.rel (%p666) target = $region120
        $region119: #{_lambda_.1} parent=87 // pred_region
          %669 = dma.done [#allocation14], 1024
        $region120: #{_lambda_.1} parent=87 // pred_fallthru
          _
        // Predicated region
        $region121: #{_lambda_.1} parent=87 // pred_check
          %p670 = pneg %p267
        $region122: #{_lambda_.1} parent=87 // pred_check_branch
          %672 = sbr.rel (%p670) target = $region124
        $region123: #{_lambda_.1} parent=87 // pred_region
          %673 = dma.done [#allocation14], 512
        $region124: #{_lambda_.1} parent=87 // pred_fallthru
          _
        // Predicated region
        $region125: #{_lambda_.1} parent=87 // pred_check
          %p674 = pneg %p288
        $region126: #{_lambda_.1} parent=87 // pred_check_branch
          %676 = sbr.rel (%p674) target = $region128
        $region127: #{_lambda_.1} parent=87 // pred_region
          %677 = dma.done [#allocation17], 512
        $region128: #{_lambda_.1} parent=87 // pred_fallthru
          _
        // Predicated region
        $region129: #{_lambda_.1} parent=87 // pred_check
          %p678 = pneg %p309
        $region130: #{_lambda_.1} parent=87 // pred_check_branch
          %680 = sbr.rel (%p678) target = $region132
        $region131: #{_lambda_.1} parent=87 // pred_region
          %681 = dma.done [#allocation17], 512
        $region132: #{_lambda_.1} parent=87 // pred_fallthru
          _
        // Predicated region
        $region133: #{_lambda_.1} parent=87 // pred_check
          %p682 = pneg %p330
        $region134: #{_lambda_.1} parent=87 // pred_check_branch
          %684 = sbr.rel (%p682) target = $region136
        $region135: #{_lambda_.1} parent=87 // pred_region
          %685 = dma.done [#allocation20], 128
        $region136: #{_lambda_.1} parent=87 // pred_fallthru
          _
        // Predicated region
        $region137: #{_lambda_.1} parent=87 // pred_check
          %p686 = pneg %p351
        $region138: #{_lambda_.1} parent=87 // pred_check_branch
          %688 = sbr.rel (%p686) target = $region140
        $region139: #{_lambda_.1} parent=87 // pred_region
          %689 = dma.done [#allocation20], 512
        $region140: #{_lambda_.1} parent=87 // pred_fallthru
          _
        // Predicated region
        $region141: #{_lambda_.1} parent=87 // pred_check
          %p690 = pneg %p372
        $region142: #{_lambda_.1} parent=87 // pred_check_branch
          %692 = sbr.rel (%p690) target = $region144
        $region143: #{_lambda_.1} parent=87 // pred_region
          %693 = dma.done [#allocation23], 512
        $region144: #{_lambda_.1} parent=87 // pred_fallthru
          _
        %p694 = scmp.lt.s32.totalorder %s36, 1
        %s695 = scalar_select %p694, %s36, 1
        %s696 = smul.addr %s695, 2
        %s697 = scalar_lea.vmem %s0, %s696
        %p698 = pneg %p57
        %p699 = pneg %p54
        %p700 = pneg %p78
        %p701 = pneg %p75
        %p702 = pneg %p99
        %p703 = pneg %p96
        %p704 = pneg %p120
        %p705 = pneg %p117
        %p706 = pneg %p141
        %p707 = pneg %p138
        %p708 = pneg %p162
        %p709 = pneg %p159
        %p710 = pneg %p183
        %p711 = pneg %p180
        %p712 = pneg %p204
        %p713 = pneg %p201
        %p714 = pneg %p225
        %p715 = pneg %p222
        %p716 = pneg %p246
        %p717 = pneg %p243
        %p718 = pneg %p267
        %p719 = pneg %p264
        %p720 = pneg %p288
        %p721 = pneg %p285
        %p722 = pneg %p309
        %p723 = pneg %p306
        %p724 = pneg %p330
        %p725 = pneg %p327
        %p726 = pneg %p351
        %p727 = pneg %p348
        %p728 = pneg %p372
        %p729 = pneg %p369
        %p730 = pneg %p393
        %p731 = pneg %p390
        %p732 = pneg %p419
        %p733 = pneg %p416
        %p734 = scmp.lt.s32.totalorder %s36, 1
        %s735 = scalar_select %p734, %s36, 1
        %s736 = smul.addr %s735, 4
        %s737 = smul.addr %s736, 8
        %s738 = scalar_lea.vmem %s17, %s737
        %p739 = scmp.lt.s32.totalorder %s36, 1
        %s740 = scalar_select %p739, %s36, 1
        %s741 = smul.addr %s740, 2
        %s742 = scalar_lea.vmem %s0, %s741
        %p743 = scmp.lt.s32.totalorder %s36, 1
        %s744 = scalar_select %p743, %s36, 1
        %s745 = smul.addr %s744, 4
        %s746 = smul.addr %s745, 8
        %s747 = scalar_lea.vmem %s17, %s746
        %v749 = vld [vmem:[%s742] sm:$0x3]
        %v751 = vlaneseq
        %v752 = vshrl.u32 %v751, 7
        %v753 = vsub.s32 0, %v752
        %v754 = vrot.slane %v749, %v753
        %v755 = vlaneseq
        %v756 = vshrl.u32 %v755, 7
        %v757 = vsub.s32 1, %v756
        %v758 = vrot.slane %v749, %v757
        %761 = vrot.lane.b32.xlu0 %v754, 17
        %v762 = vpop.permute.xlu0 %761
        %763 = vrot.lane.b32.xlu0 %v758, 17
        %v764 = vpop.permute.xlu0 %763
        %v765 = vlaneseq
        %v766 = vand.u32 %v765, 127
        %vm767 = vcmp.lt.s32.totalorder %v766, 17
        %v768 = vsel %vm767, %v762, %v764
        %v769 = vsel %vm767, %v764, %v762
        %v770 = vld [vmem:[#allocation2] ss:$8 sm:$0x3]
        %v772 = vlaneseq
        %v773 = vshrl.u32 %v772, 7
        %v774 = vsub.s32 0, %v773
        %v775 = vrot.slane %v770, %v774
        %v776 = vlaneseq
        %v777 = vshrl.u32 %v776, 7
        %v778 = vsub.s32 1, %v777
        %v779 = vrot.slane %v770, %v778
        %v782 = vmul.f32 %v769, %v775
        %v783 = vmul.f32 %v768, %v779
        %v784 = vld [vmem:[#allocation6] sm:$0xff]
        %v785 = vld [vmem:[#allocation6 + $0x8] sm:$0xff]
        %787 = vset.pattern.permute.xlu0 0
        %788 = vperm.xlu0 %787, %v784
        %v789 = vpop.permute.xlu0 %788
        %792 = vset.pattern.permute.xlu0 0
        %793 = vperm.xlu0 %792, %v785
        %v794 = vpop.permute.xlu0 %793
        %v796 = vmul.f32 %v789, %v782
        %v797 = vmul.f32 %v789, %v783
        %v798 = vmul.f32 %v794, %v782
        %v799 = vmul.f32 %v794, %v783
        %v800 = vadd.f32 %v796, 0.0
        %v801 = vadd.f32 %v797, 0.0
        %v802 = vadd.f32 %v798, 0.0
        %v803 = vadd.f32 %v799, 0.0
        %804 = vrot.lane.b32.xlu0 %v754, 16
        %v805 = vpop.permute.xlu0 %804
        %806 = vrot.lane.b32.xlu0 %v758, 16
        %v807 = vpop.permute.xlu0 %806
        %vm808 = vcmp.lt.s32.totalorder %v766, 16
        %v809 = vsel %vm808, %v805, %v807
        %v810 = vsel %vm808, %v807, %v805
        %s811 = scalar_lea.vmem [#allocation2], 1
        %v812 = vld [vmem:[%s811] ss:$8 sm:$0x3]
        %v814 = vlaneseq
        %v815 = vshrl.u32 %v814, 7
        %v816 = vsub.s32 0, %v815
        %v817 = vrot.slane %v812, %v816
        %v818 = vlaneseq
        %v819 = vshrl.u32 %v818, 7
        %v820 = vsub.s32 1, %v819
        %v821 = vrot.slane %v812, %v820
        %v824 = vmul.f32 %v810, %v817
        %v825 = vmul.f32 %v809, %v821
        %826 = vset.pattern.permute.xlu0 1
        %827 = vperm.xlu0 %826, %v784
        %v828 = vpop.permute.xlu0 %827
        %830 = vset.pattern.permute.xlu0 1
        %831 = vperm.xlu0 %830, %v785
        %v832 = vpop.permute.xlu0 %831
        %v834 = vmul.f32 %v828, %v824
        %v835 = vmul.f32 %v828, %v825
        %v836 = vmul.f32 %v832, %v824
        %v837 = vmul.f32 %v832, %v825
        %v838 = vadd.f32 %v800, %v834
        %v839 = vadd.f32 %v801, %v835
        %v840 = vadd.f32 %v802, %v836
        %v841 = vadd.f32 %v803, %v837
        %842 = vrot.lane.b32.xlu0 %v754, 15
        %v843 = vpop.permute.xlu0 %842
        %844 = vrot.lane.b32.xlu0 %v758, 15
        %v845 = vpop.permute.xlu0 %844
        %vm846 = vcmp.lt.s32.totalorder %v766, 15
        %v847 = vsel %vm846, %v843, %v845
        %v848 = vsel %vm846, %v845, %v843
        %s849 = scalar_lea.vmem [#allocation2], 2
        %v850 = vld [vmem:[%s849] ss:$8 sm:$0x3]
        %v852 = vlaneseq
        %v853 = vshrl.u32 %v852, 7
        %v854 = vsub.s32 0, %v853
        %v855 = vrot.slane %v850, %v854
        %v856 = vlaneseq
        %v857 = vshrl.u32 %v856, 7
        %v858 = vsub.s32 1, %v857
        %v859 = vrot.slane %v850, %v858
        %v862 = vmul.f32 %v848, %v855
        %v863 = vmul.f32 %v847, %v859
        %864 = vset.pattern.permute.xlu0 2
        %865 = vperm.xlu0 %864, %v784
        %v866 = vpop.permute.xlu0 %865
        %868 = vset.pattern.permute.xlu0 2
        %869 = vperm.xlu0 %868, %v785
        %v870 = vpop.permute.xlu0 %869
        %v872 = vmul.f32 %v866, %v862
        %v873 = vmul.f32 %v866, %v863
        %v874 = vmul.f32 %v870, %v862
        %v875 = vmul.f32 %v870, %v863
        %v876 = vadd.f32 %v838, %v872
        %v877 = vadd.f32 %v839, %v873
        %v878 = vadd.f32 %v840, %v874
        %v879 = vadd.f32 %v841, %v875
        %880 = vrot.lane.b32.xlu0 %v754, 1
        %v881 = vpop.permute.xlu0 %880
        %882 = vrot.lane.b32.xlu0 %v758, 1
        %v883 = vpop.permute.xlu0 %882
        %vm884 = vcmp.lt.s32.totalorder %v766, 1
        %v885 = vsel %vm884, %v881, %v883
        %v886 = vsel %vm884, %v883, %v881
        %s887 = scalar_lea.vmem [#allocation2], 3
        %v888 = vld [vmem:[%s887] ss:$8 sm:$0x3]
        %v890 = vlaneseq
        %v891 = vshrl.u32 %v890, 7
        %v892 = vsub.s32 0, %v891
        %v893 = vrot.slane %v888, %v892
        %v894 = vlaneseq
        %v895 = vshrl.u32 %v894, 7
        %v896 = vsub.s32 1, %v895
        %v897 = vrot.slane %v888, %v896
        %v900 = vmul.f32 %v886, %v893
        %v901 = vmul.f32 %v885, %v897
        %902 = vset.pattern.permute.xlu0 3
        %903 = vperm.xlu0 %902, %v784
        %v904 = vpop.permute.xlu0 %903
        %906 = vset.pattern.permute.xlu0 3
        %907 = vperm.xlu0 %906, %v785
        %v908 = vpop.permute.xlu0 %907
        %v910 = vmul.f32 %v904, %v900
        %v911 = vmul.f32 %v904, %v901
        %v912 = vmul.f32 %v908, %v900
        %v913 = vmul.f32 %v908, %v901
        %v914 = vadd.f32 %v876, %v910
        %v915 = vadd.f32 %v877, %v911
        %v916 = vadd.f32 %v878, %v912
        %v917 = vadd.f32 %v879, %v913
        %918 = vset.pattern.permute.xlu0 4
        %919 = vperm.xlu0 %918, %v784
        %v920 = vpop.permute.xlu0 %919
        %922 = vset.pattern.permute.xlu0 4
        %923 = vperm.xlu0 %922, %v785
        %v924 = vpop.permute.xlu0 %923
        %v926 = vmul.f32 %v920, %v754
        %v927 = vmul.f32 %v920, %v758
        %v928 = vmul.f32 %v924, %v754
        %v929 = vmul.f32 %v924, %v758
        %v930 = vadd.f32 %v914, %v926
        %v931 = vadd.f32 %v915, %v927
        %v932 = vadd.f32 %v916, %v928
        %v933 = vadd.f32 %v917, %v929
        %934 = vrot.lane.b32.xlu0 %v754, 127
        %v935 = vpop.permute.xlu0 %934
        %936 = vrot.lane.b32.xlu0 %v758, 127
        %v937 = vpop.permute.xlu0 %936
        %vm938 = vcmp.lt.s32.totalorder %v766, 127
        %v939 = vsel %vm938, %v935, %v937
        %v940 = vsel %vm938, %v937, %v935
        %s941 = scalar_lea.vmem [#allocation2], 5
        %v942 = vld [vmem:[%s941] ss:$8 sm:$0x3]
        %v944 = vlaneseq
        %v945 = vshrl.u32 %v944, 7
        %v946 = vsub.s32 0, %v945
        %v947 = vrot.slane %v942, %v946
        %v948 = vlaneseq
        %v949 = vshrl.u32 %v948, 7
        %v950 = vsub.s32 1, %v949
        %v951 = vrot.slane %v942, %v950
        %v954 = vmul.f32 %v939, %v947
        %v955 = vmul.f32 %v940, %v951
        %956 = vset.pattern.permute.xlu0 5
        %957 = vperm.xlu0 %956, %v784
        %v958 = vpop.permute.xlu0 %957
        %960 = vset.pattern.permute.xlu0 5
        %961 = vperm.xlu0 %960, %v785
        %v962 = vpop.permute.xlu0 %961
        %v964 = vmul.f32 %v958, %v954
        %v965 = vmul.f32 %v958, %v955
        %v966 = vmul.f32 %v962, %v954
        %v967 = vmul.f32 %v962, %v955
        %v968 = vadd.f32 %v930, %v964
        %v969 = vadd.f32 %v931, %v965
        %v970 = vadd.f32 %v932, %v966
        %v971 = vadd.f32 %v933, %v967
        %972 = vrot.lane.b32.xlu0 %v754, 113
        %v973 = vpop.permute.xlu0 %972
        %974 = vrot.lane.b32.xlu0 %v758, 113
        %v975 = vpop.permute.xlu0 %974
        %vm976 = vcmp.lt.s32.totalorder %v766, 113
        %v977 = vsel %vm976, %v973, %v975
        %v978 = vsel %vm976, %v975, %v973
        %s979 = scalar_lea.vmem [#allocation2], 6
        %v980 = vld [vmem:[%s979] ss:$8 sm:$0x3]
        %v982 = vlaneseq
        %v983 = vshrl.u32 %v982, 7
        %v984 = vsub.s32 0, %v983
        %v985 = vrot.slane %v980, %v984
        %v986 = vlaneseq
        %v987 = vshrl.u32 %v986, 7
        %v988 = vsub.s32 1, %v987
        %v989 = vrot.slane %v980, %v988
        %v992 = vmul.f32 %v977, %v985
        %v993 = vmul.f32 %v978, %v989
        %994 = vset.pattern.permute.xlu0 6
        %995 = vperm.xlu0 %994, %v784
        %v996 = vpop.permute.xlu0 %995
        %998 = vset.pattern.permute.xlu0 6
        %999 = vperm.xlu0 %998, %v785
        %v1000 = vpop.permute.xlu0 %999
        %v1002 = vmul.f32 %v996, %v992
        %v1003 = vmul.f32 %v996, %v993
        %v1004 = vmul.f32 %v1000, %v992
        %v1005 = vmul.f32 %v1000, %v993
        %v1006 = vadd.f32 %v968, %v1002
        %v1007 = vadd.f32 %v969, %v1003
        %v1008 = vadd.f32 %v970, %v1004
        %v1009 = vadd.f32 %v971, %v1005
        %1010 = vrot.lane.b32.xlu0 %v754, 112
        %v1011 = vpop.permute.xlu0 %1010
        %1012 = vrot.lane.b32.xlu0 %v758, 112
        %v1013 = vpop.permute.xlu0 %1012
        %vm1014 = vcmp.lt.s32.totalorder %v766, 112
        %v1015 = vsel %vm1014, %v1011, %v1013
        %v1016 = vsel %vm1014, %v1013, %v1011
        %s1017 = scalar_lea.vmem [#allocation2], 7
        %v1018 = vld [vmem:[%s1017] ss:$8 sm:$0x3]
        %v1020 = vlaneseq
        %v1021 = vshrl.u32 %v1020, 7
        %v1022 = vsub.s32 0, %v1021
        %v1023 = vrot.slane %v1018, %v1022
        %v1024 = vlaneseq
        %v1025 = vshrl.u32 %v1024, 7
        %v1026 = vsub.s32 1, %v1025
        %v1027 = vrot.slane %v1018, %v1026
        %v1030 = vmul.f32 %v1015, %v1023
        %v1031 = vmul.f32 %v1016, %v1027
        %1032 = vset.pattern.permute.xlu0 7
        %1033 = vperm.xlu0 %1032, %v784
        %v1034 = vpop.permute.xlu0 %1033
        %1036 = vset.pattern.permute.xlu0 7
        %1037 = vperm.xlu0 %1036, %v785
        %v1038 = vpop.permute.xlu0 %1037
        %v1040 = vmul.f32 %v1034, %v1030
        %v1041 = vmul.f32 %v1034, %v1031
        %v1042 = vmul.f32 %v1038, %v1030
        %v1043 = vmul.f32 %v1038, %v1031
        %v1044 = vadd.f32 %v1006, %v1040
        %v1045 = vadd.f32 %v1007, %v1041
        %v1046 = vadd.f32 %v1008, %v1042
        %v1047 = vadd.f32 %v1009, %v1043
        %1048 = vrot.lane.b32.xlu0 %v754, 111
        %v1049 = vpop.permute.xlu0 %1048
        %1050 = vrot.lane.b32.xlu0 %v758, 111
        %v1051 = vpop.permute.xlu0 %1050
        %vm1052 = vcmp.lt.s32.totalorder %v766, 111
        %v1053 = vsel %vm1052, %v1049, %v1051
        %v1054 = vsel %vm1052, %v1051, %v1049
        %s1055 = scalar_lea.vmem [#allocation2], 16
        %v1056 = vld [vmem:[%s1055] ss:$8 sm:$0x3]
        %v1058 = vlaneseq
        %v1059 = vshrl.u32 %v1058, 7
        %v1060 = vsub.s32 0, %v1059
        %v1061 = vrot.slane %v1056, %v1060
        %v1062 = vlaneseq
        %v1063 = vshrl.u32 %v1062, 7
        %v1064 = vsub.s32 1, %v1063
        %v1065 = vrot.slane %v1056, %v1064
        %v1068 = vmul.f32 %v1053, %v1061
        %v1069 = vmul.f32 %v1054, %v1065
        %1070 = vset.pattern.permute.xlu0 8
        %1071 = vperm.xlu0 %1070, %v784
        %v1072 = vpop.permute.xlu0 %1071
        %1074 = vset.pattern.permute.xlu0 8
        %1075 = vperm.xlu0 %1074, %v785
        %v1076 = vpop.permute.xlu0 %1075
        %v1078 = vmul.f32 %v1072, %v1068
        %v1079 = vmul.f32 %v1072, %v1069
        %v1080 = vmul.f32 %v1076, %v1068
        %v1081 = vmul.f32 %v1076, %v1069
        %v1082 = vadd.f32 %v1044, %v1078
        %v1083 = vadd.f32 %v1045, %v1079
        %v1084 = vadd.f32 %v1046, %v1080
        %v1085 = vadd.f32 %v1047, %v1081
        %v1086 = vmax.f32 %v1082, 0.0
        %v1087 = vmax.f32 %v1083, 0.0
        %v1088 = vmax.f32 %v1084, 0.0
        %v1089 = vmax.f32 %v1085, 0.0
        %v1090 = vld [vmem:[#allocation7] sm:$0xff]
        %v1091 = vld [vmem:[#allocation7 + $0x8] sm:$0xff]
        %v1092 = vld [vmem:[#allocation7 + $0x10] sm:$0xff]
        %v1093 = vld [vmem:[#allocation7 + $0x18] sm:$0xff]
        %v1094 = vld [vmem:[#allocation7 + $0x20] sm:$0xff]
        %v1095 = vld [vmem:[#allocation7 + $0x28] sm:$0xff]
        %v1096 = vld [vmem:[#allocation7 + $0x30] sm:$0xff]
        %v1097 = vld [vmem:[#allocation7 + $0x38] sm:$0xff]
        %v1098 = vpack.c.bf16 %v1091, %v1090
        %v1099 = vpack.c.bf16 %v1093, %v1092
        %v1100 = vpack.c.bf16 %v1095, %v1094
        %v1101 = vpack.c.bf16 %v1097, %v1096
        %v1102 = vpack.c.bf16 %v1088, %v1086
        %v1103 = vpack.c.bf16 %v1089, %v1087
        %vm1104 = vcmask 130048
        %v1106 = vsel %vm1104, %v1098, 0
        %v1109 = vsel %vm1104, %v1099, 0
        %v1112 = vsel %vm1104, %v1100, 0
        %v1115 = vsel %vm1104, %v1101, 0
        %1117 = vmatprep.subr.bf16.mxu0 %v1103
        %1118 = vmatpush1.bf16.msra.mxu0 %v1102
        %1119 = vmatprep.subr.bf16.mxu0 0
        %1120 = vmatpush1.bf16.msra.mxu0 0
        %1121 = vmatprep.subr.bf16.mxu0 0
        %1122 = vmatpush1.bf16.msra.mxu0 0
        %1123 = vmatprep.subr.bf16.mxu0 0
        %1124 = vmatpush1.bf16.msra.mxu0 0
        %1125 = vmatprep.subr.bf16.mxu0 0
        %1126 = vmatpush1.bf16.msra.mxu0 0
        %1127 = vmatprep.subr.bf16.mxu0 0
        %1128 = vmatpush1.bf16.msra.mxu0 0
        %1129 = vmatprep.subr.bf16.mxu0 0
        %1130 = vmatpush1.bf16.msra.mxu0 0
        %1131 = vmatprep.subr.bf16.mxu0 0
        %1132 = vmatpush1.bf16.msra.mxu0 0
        %1133 = vmatprep.subr.bf16.mxu0 0
        %1134 = vmatpush1.bf16.msra.mxu0 0
        %1135 = vmatprep.subr.bf16.mxu0 0
        %1136 = vmatpush1.bf16.msra.mxu0 0
        %1137 = vmatprep.subr.bf16.mxu0 0
        %1138 = vmatpush1.bf16.msra.mxu0 0
        %1139 = vmatprep.subr.bf16.mxu0 0
        %1140 = vmatpush1.bf16.msra.mxu0 0
        %1141 = vmatprep.subr.bf16.mxu0 0
        %1142 = vmatpush1.bf16.msra.mxu0 0
        %1143 = vmatprep.subr.bf16.mxu0 0
        %1144 = vmatpush1.bf16.msra.mxu0 0
        %1145 = vmatprep.subr.bf16.mxu0 0
        %1146 = vmatpush1.bf16.msra.mxu0 0
        %1147 = vmatprep.subr.bf16.mxu0 0
        %1148 = vmatpush1.bf16.msra.mxu0 0
        %1149 = vmatprep.mubr.bf16.mxu0 0
        %1150 = vmatmul.mubr.bf16.gmra.mrb[0].mxu0 %v1106
        %v1151 = vpop.f32.mrb[0].mxu0
        %v1152 = vadd.f32 0.0, %v1151
        %v1153 = vpop.f32.mrb[0].mxu0
        %v1154 = vadd.f32 0.0, %v1153
        %v1155 = vpop.f32.mrb[0].mxu0
        %v1156 = vadd.f32 0.0, %v1155
        %v1157 = vpop.f32.mrb[0].mxu0
        %v1158 = vadd.f32 0.0, %v1157
        %1159 = vmatprep.mubr.bf16.mxu0 0
        %1160 = vmatmul.mubr.bf16.gmra.mrb[0].mxu0 %v1109
        %v1161 = vpop.f32.mrb[0].mxu0
        %v1162 = vadd.f32 0.0, %v1161
        %v1163 = vpop.f32.mrb[0].mxu0
        %v1164 = vadd.f32 0.0, %v1163
        %v1165 = vpop.f32.mrb[0].mxu0
        %v1166 = vadd.f32 0.0, %v1165
        %v1167 = vpop.f32.mrb[0].mxu0
        %v1168 = vadd.f32 0.0, %v1167
        %1169 = vmatprep.mubr.bf16.mxu0 0
        %1170 = vmatmul.mubr.bf16.gmra.mrb[0].mxu0 %v1112
        %v1171 = vpop.f32.mrb[0].mxu0
        %v1172 = vadd.f32 0.0, %v1171
        %v1173 = vpop.f32.mrb[0].mxu0
        %v1174 = vadd.f32 0.0, %v1173
        %v1175 = vpop.f32.mrb[0].mxu0
        %v1176 = vadd.f32 0.0, %v1175
        %v1177 = vpop.f32.mrb[0].mxu0
        %v1178 = vadd.f32 0.0, %v1177
        %1179 = vmatprep.mubr.bf16.mxu0 0
        %1180 = vmatmul.mubr.bf16.gmra.mrb[0].mxu0 %v1115
        %v1181 = vpop.f32.mrb[0].mxu0
        %v1182 = vadd.f32 0.0, %v1181
        %v1183 = vpop.f32.mrb[0].mxu0
        %v1184 = vadd.f32 0.0, %v1183
        %v1185 = vpop.f32.mrb[0].mxu0
        %v1186 = vadd.f32 0.0, %v1185
        %v1187 = vpop.f32.mrb[0].mxu0
        %v1188 = vadd.f32 0.0, %v1187
        %1189 = vdwg.mxu0
        %v1190 = vmax.f32 %v1152, 0.0
        %v1191 = vmax.f32 %v1154, 0.0
        %v1192 = vmax.f32 %v1156, 0.0
        %v1193 = vmax.f32 %v1158, 0.0
        %v1194 = vmax.f32 %v1162, 0.0
        %v1195 = vmax.f32 %v1164, 0.0
        %v1196 = vmax.f32 %v1166, 0.0
        %v1197 = vmax.f32 %v1168, 0.0
        %v1198 = vmax.f32 %v1172, 0.0
        %v1199 = vmax.f32 %v1174, 0.0
        %v1200 = vmax.f32 %v1176, 0.0
        %v1201 = vmax.f32 %v1178, 0.0
        %v1202 = vmax.f32 %v1182, 0.0
        %v1203 = vmax.f32 %v1184, 0.0
        %v1204 = vmax.f32 %v1186, 0.0
        %v1205 = vmax.f32 %v1188, 0.0
        %1206 = vrot.lane.b32.xlu0 %v1190, 17
        %v1207 = vpop.permute.xlu0 %1206
        %1208 = vrot.lane.b32.xlu0 %v1192, 17
        %v1209 = vpop.permute.xlu0 %1208
        %1210 = vrot.lane.b32.xlu0 %v1194, 17
        %v1211 = vpop.permute.xlu0 %1210
        %1212 = vrot.lane.b32.xlu0 %v1196, 17
        %v1213 = vpop.permute.xlu0 %1212
        %1214 = vrot.lane.b32.xlu0 %v1198, 17
        %v1215 = vpop.permute.xlu0 %1214
        %1216 = vrot.lane.b32.xlu0 %v1200, 17
        %v1217 = vpop.permute.xlu0 %1216
        %1218 = vrot.lane.b32.xlu0 %v1202, 17
        %v1219 = vpop.permute.xlu0 %1218
        %1220 = vrot.lane.b32.xlu0 %v1204, 17
        %v1221 = vpop.permute.xlu0 %1220
        %1222 = vrot.lane.b32.xlu0 %v1191, 17
        %v1223 = vpop.permute.xlu0 %1222
        %1224 = vrot.lane.b32.xlu0 %v1193, 17
        %v1225 = vpop.permute.xlu0 %1224
        %1226 = vrot.lane.b32.xlu0 %v1195, 17
        %v1227 = vpop.permute.xlu0 %1226
        %1228 = vrot.lane.b32.xlu0 %v1197, 17
        %v1229 = vpop.permute.xlu0 %1228
        %1230 = vrot.lane.b32.xlu0 %v1199, 17
        %v1231 = vpop.permute.xlu0 %1230
        %1232 = vrot.lane.b32.xlu0 %v1201, 17
        %v1233 = vpop.permute.xlu0 %1232
        %1234 = vrot.lane.b32.xlu0 %v1203, 17
        %v1235 = vpop.permute.xlu0 %1234
        %1236 = vrot.lane.b32.xlu0 %v1205, 17
        %v1237 = vpop.permute.xlu0 %1236
        %v1238 = vsel %vm767, %v1207, %v1223
        %v1239 = vsel %vm767, %v1209, %v1225
        %v1240 = vsel %vm767, %v1211, %v1227
        %v1241 = vsel %vm767, %v1213, %v1229
        %v1242 = vsel %vm767, %v1215, %v1231
        %v1243 = vsel %vm767, %v1217, %v1233
        %v1244 = vsel %vm767, %v1219, %v1235
        %v1245 = vsel %vm767, %v1221, %v1237
        %v1246 = vsel %vm767, %v1223, %v1207
        %v1247 = vsel %vm767, %v1225, %v1209
        %v1248 = vsel %vm767, %v1227, %v1211
        %v1249 = vsel %vm767, %v1229, %v1213
        %v1250 = vsel %vm767, %v1231, %v1215
        %v1251 = vsel %vm767, %v1233, %v1217
        %v1252 = vsel %vm767, %v1235, %v1219
        %v1253 = vsel %vm767, %v1237, %v1221
        %v1254 = vmul.f32 %v1246, %v775
        %v1255 = vmul.f32 %v1238, %v779
        %v1256 = vmul.f32 %v1247, %v775
        %v1257 = vmul.f32 %v1239, %v779
        %v1258 = vmul.f32 %v1248, %v775
        %v1259 = vmul.f32 %v1240, %v779
        %v1260 = vmul.f32 %v1249, %v775
        %v1261 = vmul.f32 %v1241, %v779
        %v1262 = vmul.f32 %v1250, %v775
        %v1263 = vmul.f32 %v1242, %v779
        %v1264 = vmul.f32 %v1251, %v775
        %v1265 = vmul.f32 %v1243, %v779
        %v1266 = vmul.f32 %v1252, %v775
        %v1267 = vmul.f32 %v1244, %v779
        %v1268 = vmul.f32 %v1253, %v775
        %v1269 = vmul.f32 %v1245, %v779
        %v1270 = vld [vmem:[#allocation9] sm:$0xff]
        %v1271 = vld [vmem:[#allocation9 + $0x8] sm:$0xff]
        %v1272 = vld [vmem:[#allocation9 + $0x10] sm:$0xff]
        %v1273 = vld [vmem:[#allocation9 + $0x18] sm:$0xff]
        %v1274 = vld [vmem:[#allocation9 + $0x20] sm:$0xff]
        %v1275 = vld [vmem:[#allocation9 + $0x28] sm:$0xff]
        %v1276 = vld [vmem:[#allocation9 + $0x30] sm:$0xff]
        %v1277 = vld [vmem:[#allocation9 + $0x38] sm:$0xff]
        %1279 = vset.pattern.permute.xlu0 0
        %1280 = vperm.xlu0 %1279, %v1270
        %v1281 = vpop.permute.xlu0 %1280
        %1284 = vset.pattern.permute.xlu0 0
        %1285 = vperm.xlu0 %1284, %v1271
        %v1286 = vpop.permute.xlu0 %1285
        %1289 = vset.pattern.permute.xlu0 0
        %1290 = vperm.xlu0 %1289, %v1272
        %v1291 = vpop.permute.xlu0 %1290
        %1294 = vset.pattern.permute.xlu0 0
        %1295 = vperm.xlu0 %1294, %v1273
        %v1296 = vpop.permute.xlu0 %1295
        %1299 = vset.pattern.permute.xlu0 0
        %1300 = vperm.xlu0 %1299, %v1274
        %v1301 = vpop.permute.xlu0 %1300
        %1304 = vset.pattern.permute.xlu0 0
        %1305 = vperm.xlu0 %1304, %v1275
        %v1306 = vpop.permute.xlu0 %1305
        %1309 = vset.pattern.permute.xlu0 0
        %1310 = vperm.xlu0 %1309, %v1276
        %v1311 = vpop.permute.xlu0 %1310
        %1314 = vset.pattern.permute.xlu0 0
        %1315 = vperm.xlu0 %1314, %v1277
        %v1316 = vpop.permute.xlu0 %1315
        %v1318 = vmul.f32 %v1281, %v1254
        %v1319 = vmul.f32 %v1281, %v1255
        %v1320 = vmul.f32 %v1286, %v1256
        %v1321 = vmul.f32 %v1286, %v1257
        %v1322 = vmul.f32 %v1291, %v1258
        %v1323 = vmul.f32 %v1291, %v1259
        %v1324 = vmul.f32 %v1296, %v1260
        %v1325 = vmul.f32 %v1296, %v1261
        %v1326 = vmul.f32 %v1301, %v1262
        %v1327 = vmul.f32 %v1301, %v1263
        %v1328 = vmul.f32 %v1306, %v1264
        %v1329 = vmul.f32 %v1306, %v1265
        %v1330 = vmul.f32 %v1311, %v1266
        %v1331 = vmul.f32 %v1311, %v1267
        %v1332 = vmul.f32 %v1316, %v1268
        %v1333 = vmul.f32 %v1316, %v1269
        %v1334 = vadd.f32 %v1318, 0.0
        %v1335 = vadd.f32 %v1319, 0.0
        %v1336 = vadd.f32 %v1320, 0.0
        %v1337 = vadd.f32 %v1321, 0.0
        %v1338 = vadd.f32 %v1322, 0.0
        %v1339 = vadd.f32 %v1323, 0.0
        %v1340 = vadd.f32 %v1324, 0.0
        %v1341 = vadd.f32 %v1325, 0.0
        %v1342 = vadd.f32 %v1326, 0.0
        %v1343 = vadd.f32 %v1327, 0.0
        %v1344 = vadd.f32 %v1328, 0.0
        %v1345 = vadd.f32 %v1329, 0.0
        %v1346 = vadd.f32 %v1330, 0.0
        %v1347 = vadd.f32 %v1331, 0.0
        %v1348 = vadd.f32 %v1332, 0.0
        %v1349 = vadd.f32 %v1333, 0.0
        %1350 = vrot.lane.b32.xlu0 %v1190, 16
        %v1351 = vpop.permute.xlu0 %1350
        %1352 = vrot.lane.b32.xlu0 %v1192, 16
        %v1353 = vpop.permute.xlu0 %1352
        %1354 = vrot.lane.b32.xlu0 %v1194, 16
        %v1355 = vpop.permute.xlu0 %1354
        %1356 = vrot.lane.b32.xlu0 %v1196, 16
        %v1357 = vpop.permute.xlu0 %1356
        %1358 = vrot.lane.b32.xlu0 %v1198, 16
        %v1359 = vpop.permute.xlu0 %1358
        %1360 = vrot.lane.b32.xlu0 %v1200, 16
        %v1361 = vpop.permute.xlu0 %1360
        %1362 = vrot.lane.b32.xlu0 %v1202, 16
        %v1363 = vpop.permute.xlu0 %1362
        %1364 = vrot.lane.b32.xlu0 %v1204, 16
        %v1365 = vpop.permute.xlu0 %1364
        %1366 = vrot.lane.b32.xlu0 %v1191, 16
        %v1367 = vpop.permute.xlu0 %1366
        %1368 = vrot.lane.b32.xlu0 %v1193, 16
        %v1369 = vpop.permute.xlu0 %1368
        %1370 = vrot.lane.b32.xlu0 %v1195, 16
        %v1371 = vpop.permute.xlu0 %1370
        %1372 = vrot.lane.b32.xlu0 %v1197, 16
        %v1373 = vpop.permute.xlu0 %1372
        %1374 = vrot.lane.b32.xlu0 %v1199, 16
        %v1375 = vpop.permute.xlu0 %1374
        %1376 = vrot.lane.b32.xlu0 %v1201, 16
        %v1377 = vpop.permute.xlu0 %1376
        %1378 = vrot.lane.b32.xlu0 %v1203, 16
        %v1379 = vpop.permute.xlu0 %1378
        %1380 = vrot.lane.b32.xlu0 %v1205, 16
        %v1381 = vpop.permute.xlu0 %1380
        %v1382 = vsel %vm808, %v1351, %v1367
        %v1383 = vsel %vm808, %v1353, %v1369
        %v1384 = vsel %vm808, %v1355, %v1371
        %v1385 = vsel %vm808, %v1357, %v1373
        %v1386 = vsel %vm808, %v1359, %v1375
        %v1387 = vsel %vm808, %v1361, %v1377
        %v1388 = vsel %vm808, %v1363, %v1379
        %v1389 = vsel %vm808, %v1365, %v1381
        %v1390 = vsel %vm808, %v1367, %v1351
        %v1391 = vsel %vm808, %v1369, %v1353
        %v1392 = vsel %vm808, %v1371, %v1355
        %v1393 = vsel %vm808, %v1373, %v1357
        %v1394 = vsel %vm808, %v1375, %v1359
        %v1395 = vsel %vm808, %v1377, %v1361
        %v1396 = vsel %vm808, %v1379, %v1363
        %v1397 = vsel %vm808, %v1381, %v1365
        %v1398 = vmul.f32 %v1390, %v817
        %v1399 = vmul.f32 %v1382, %v821
        %v1400 = vmul.f32 %v1391, %v817
        %v1401 = vmul.f32 %v1383, %v821
        %v1402 = vmul.f32 %v1392, %v817
        %v1403 = vmul.f32 %v1384, %v821
        %v1404 = vmul.f32 %v1393, %v817
        %v1405 = vmul.f32 %v1385, %v821
        %v1406 = vmul.f32 %v1394, %v817
        %v1407 = vmul.f32 %v1386, %v821
        %v1408 = vmul.f32 %v1395, %v817
        %v1409 = vmul.f32 %v1387, %v821
        %v1410 = vmul.f32 %v1396, %v817
        %v1411 = vmul.f32 %v1388, %v821
        %v1412 = vmul.f32 %v1397, %v817
        %v1413 = vmul.f32 %v1389, %v821
        %1414 = vset.pattern.permute.xlu0 1
        %1415 = vperm.xlu0 %1414, %v1270
        %v1416 = vpop.permute.xlu0 %1415
        %1418 = vset.pattern.permute.xlu0 1
        %1419 = vperm.xlu0 %1418, %v1271
        %v1420 = vpop.permute.xlu0 %1419
        %1422 = vset.pattern.permute.xlu0 1
        %1423 = vperm.xlu0 %1422, %v1272
        %v1424 = vpop.permute.xlu0 %1423
        %1426 = vset.pattern.permute.xlu0 1
        %1427 = vperm.xlu0 %1426, %v1273
        %v1428 = vpop.permute.xlu0 %1427
        %1430 = vset.pattern.permute.xlu0 1
        %1431 = vperm.xlu0 %1430, %v1274
        %v1432 = vpop.permute.xlu0 %1431
        %1434 = vset.pattern.permute.xlu0 1
        %1435 = vperm.xlu0 %1434, %v1275
        %v1436 = vpop.permute.xlu0 %1435
        %1438 = vset.pattern.permute.xlu0 1
        %1439 = vperm.xlu0 %1438, %v1276
        %v1440 = vpop.permute.xlu0 %1439
        %1442 = vset.pattern.permute.xlu0 1
        %1443 = vperm.xlu0 %1442, %v1277
        %v1444 = vpop.permute.xlu0 %1443
        %v1446 = vmul.f32 %v1416, %v1398
        %v1447 = vmul.f32 %v1416, %v1399
        %v1448 = vmul.f32 %v1420, %v1400
        %v1449 = vmul.f32 %v1420, %v1401
        %v1450 = vmul.f32 %v1424, %v1402
        %v1451 = vmul.f32 %v1424, %v1403
        %v1452 = vmul.f32 %v1428, %v1404
        %v1453 = vmul.f32 %v1428, %v1405
        %v1454 = vmul.f32 %v1432, %v1406
        %v1455 = vmul.f32 %v1432, %v1407
        %v1456 = vmul.f32 %v1436, %v1408
        %v1457 = vmul.f32 %v1436, %v1409
        %v1458 = vmul.f32 %v1440, %v1410
        %v1459 = vmul.f32 %v1440, %v1411
        %v1460 = vmul.f32 %v1444, %v1412
        %v1461 = vmul.f32 %v1444, %v1413
        %v1462 = vadd.f32 %v1334, %v1446
        %v1463 = vadd.f32 %v1335, %v1447
        %v1464 = vadd.f32 %v1336, %v1448
        %v1465 = vadd.f32 %v1337, %v1449
        %v1466 = vadd.f32 %v1338, %v1450
        %v1467 = vadd.f32 %v1339, %v1451
        %v1468 = vadd.f32 %v1340, %v1452
        %v1469 = vadd.f32 %v1341, %v1453
        %v1470 = vadd.f32 %v1342, %v1454
        %v1471 = vadd.f32 %v1343, %v1455
        %v1472 = vadd.f32 %v1344, %v1456
        %v1473 = vadd.f32 %v1345, %v1457
        %v1474 = vadd.f32 %v1346, %v1458
        %v1475 = vadd.f32 %v1347, %v1459
        %v1476 = vadd.f32 %v1348, %v1460
        %v1477 = vadd.f32 %v1349, %v1461
        %1478 = vrot.lane.b32.xlu0 %v1190, 15
        %v1479 = vpop.permute.xlu0 %1478
        %1480 = vrot.lane.b32.xlu0 %v1192, 15
        %v1481 = vpop.permute.xlu0 %1480
        %1482 = vrot.lane.b32.xlu0 %v1194, 15
        %v1483 = vpop.permute.xlu0 %1482
        %1484 = vrot.lane.b32.xlu0 %v1196, 15
        %v1485 = vpop.permute.xlu0 %1484
        %1486 = vrot.lane.b32.xlu0 %v1198, 15
        %v1487 = vpop.permute.xlu0 %1486
        %1488 = vrot.lane.b32.xlu0 %v1200, 15
        %v1489 = vpop.permute.xlu0 %1488
        %1490 = vrot.lane.b32.xlu0 %v1202, 15
        %v1491 = vpop.permute.xlu0 %1490
        %1492 = vrot.lane.b32.xlu0 %v1204, 15
        %v1493 = vpop.permute.xlu0 %1492
        %1494 = vrot.lane.b32.xlu0 %v1191, 15
        %v1495 = vpop.permute.xlu0 %1494
        %1496 = vrot.lane.b32.xlu0 %v1193, 15
        %v1497 = vpop.permute.xlu0 %1496
        %1498 = vrot.lane.b32.xlu0 %v1195, 15
        %v1499 = vpop.permute.xlu0 %1498
        %1500 = vrot.lane.b32.xlu0 %v1197, 15
        %v1501 = vpop.permute.xlu0 %1500
        %1502 = vrot.lane.b32.xlu0 %v1199, 15
        %v1503 = vpop.permute.xlu0 %1502
        %1504 = vrot.lane.b32.xlu0 %v1201, 15
        %v1505 = vpop.permute.xlu0 %1504
        %1506 = vrot.lane.b32.xlu0 %v1203, 15
        %v1507 = vpop.permute.xlu0 %1506
        %1508 = vrot.lane.b32.xlu0 %v1205, 15
        %v1509 = vpop.permute.xlu0 %1508
        %v1510 = vsel %vm846, %v1479, %v1495
        %v1511 = vsel %vm846, %v1481, %v1497
        %v1512 = vsel %vm846, %v1483, %v1499
        %v1513 = vsel %vm846, %v1485, %v1501
        %v1514 = vsel %vm846, %v1487, %v1503
        %v1515 = vsel %vm846, %v1489, %v1505
        %v1516 = vsel %vm846, %v1491, %v1507
        %v1517 = vsel %vm846, %v1493, %v1509
        %v1518 = vsel %vm846, %v1495, %v1479
        %v1519 = vsel %vm846, %v1497, %v1481
        %v1520 = vsel %vm846, %v1499, %v1483
        %v1521 = vsel %vm846, %v1501, %v1485
        %v1522 = vsel %vm846, %v1503, %v1487
        %v1523 = vsel %vm846, %v1505, %v1489
        %v1524 = vsel %vm846, %v1507, %v1491
        %v1525 = vsel %vm846, %v1509, %v1493
        %v1526 = vmul.f32 %v1518, %v855
        %v1527 = vmul.f32 %v1510, %v859
        %v1528 = vmul.f32 %v1519, %v855
        %v1529 = vmul.f32 %v1511, %v859
        %v1530 = vmul.f32 %v1520, %v855
        %v1531 = vmul.f32 %v1512, %v859
        %v1532 = vmul.f32 %v1521, %v855
        %v1533 = vmul.f32 %v1513, %v859
        %v1534 = vmul.f32 %v1522, %v855
        %v1535 = vmul.f32 %v1514, %v859
        %v1536 = vmul.f32 %v1523, %v855
        %v1537 = vmul.f32 %v1515, %v859
        %v1538 = vmul.f32 %v1524, %v855
        %v1539 = vmul.f32 %v1516, %v859
        %v1540 = vmul.f32 %v1525, %v855
        %v1541 = vmul.f32 %v1517, %v859
        %1542 = vset.pattern.permute.xlu0 2
        %1543 = vperm.xlu0 %1542, %v1270
        %v1544 = vpop.permute.xlu0 %1543
        %1546 = vset.pattern.permute.xlu0 2
        %1547 = vperm.xlu0 %1546, %v1271
        %v1548 = vpop.permute.xlu0 %1547
        %1550 = vset.pattern.permute.xlu0 2
        %1551 = vperm.xlu0 %1550, %v1272
        %v1552 = vpop.permute.xlu0 %1551
        %1554 = vset.pattern.permute.xlu0 2
        %1555 = vperm.xlu0 %1554, %v1273
        %v1556 = vpop.permute.xlu0 %1555
        %1558 = vset.pattern.permute.xlu0 2
        %1559 = vperm.xlu0 %1558, %v1274
        %v1560 = vpop.permute.xlu0 %1559
        %1562 = vset.pattern.permute.xlu0 2
        %1563 = vperm.xlu0 %1562, %v1275
        %v1564 = vpop.permute.xlu0 %1563
        %1566 = vset.pattern.permute.xlu0 2
        %1567 = vperm.xlu0 %1566, %v1276
        %v1568 = vpop.permute.xlu0 %1567
        %1570 = vset.pattern.permute.xlu0 2
        %1571 = vperm.xlu0 %1570, %v1277
        %v1572 = vpop.permute.xlu0 %1571
        %v1574 = vmul.f32 %v1544, %v1526
        %v1575 = vmul.f32 %v1544, %v1527
        %v1576 = vmul.f32 %v1548, %v1528
        %v1577 = vmul.f32 %v1548, %v1529
        %v1578 = vmul.f32 %v1552, %v1530
        %v1579 = vmul.f32 %v1552, %v1531
        %v1580 = vmul.f32 %v1556, %v1532
        %v1581 = vmul.f32 %v1556, %v1533
        %v1582 = vmul.f32 %v1560, %v1534
        %v1583 = vmul.f32 %v1560, %v1535
        %v1584 = vmul.f32 %v1564, %v1536
        %v1585 = vmul.f32 %v1564, %v1537
        %v1586 = vmul.f32 %v1568, %v1538
        %v1587 = vmul.f32 %v1568, %v1539
        %v1588 = vmul.f32 %v1572, %v1540
        %v1589 = vmul.f32 %v1572, %v1541
        %v1590 = vadd.f32 %v1462, %v1574
        %v1591 = vadd.f32 %v1463, %v1575
        %v1592 = vadd.f32 %v1464, %v1576
        %v1593 = vadd.f32 %v1465, %v1577
        %v1594 = vadd.f32 %v1466, %v1578
        %v1595 = vadd.f32 %v1467, %v1579
        %v1596 = vadd.f32 %v1468, %v1580
        %v1597 = vadd.f32 %v1469, %v1581
        %v1598 = vadd.f32 %v1470, %v1582
        %v1599 = vadd.f32 %v1471, %v1583
        %v1600 = vadd.f32 %v1472, %v1584
        %v1601 = vadd.f32 %v1473, %v1585
        %v1602 = vadd.f32 %v1474, %v1586
        %v1603 = vadd.f32 %v1475, %v1587
        %v1604 = vadd.f32 %v1476, %v1588
        %v1605 = vadd.f32 %v1477, %v1589
        %1606 = vrot.lane.b32.xlu0 %v1190, 1
        %v1607 = vpop.permute.xlu0 %1606
        %1608 = vrot.lane.b32.xlu0 %v1192, 1
        %v1609 = vpop.permute.xlu0 %1608
        %1610 = vrot.lane.b32.xlu0 %v1194, 1
        %v1611 = vpop.permute.xlu0 %1610
        %1612 = vrot.lane.b32.xlu0 %v1196, 1
        %v1613 = vpop.permute.xlu0 %1612
        %1614 = vrot.lane.b32.xlu0 %v1198, 1
        %v1615 = vpop.permute.xlu0 %1614
        %1616 = vrot.lane.b32.xlu0 %v1200, 1
        %v1617 = vpop.permute.xlu0 %1616
        %1618 = vrot.lane.b32.xlu0 %v1202, 1
        %v1619 = vpop.permute.xlu0 %1618
        %1620 = vrot.lane.b32.xlu0 %v1204, 1
        %v1621 = vpop.permute.xlu0 %1620
        %1622 = vrot.lane.b32.xlu0 %v1191, 1
        %v1623 = vpop.permute.xlu0 %1622
        %1624 = vrot.lane.b32.xlu0 %v1193, 1
        %v1625 = vpop.permute.xlu0 %1624
        %1626 = vrot.lane.b32.xlu0 %v1195, 1
        %v1627 = vpop.permute.xlu0 %1626
        %1628 = vrot.lane.b32.xlu0 %v1197, 1
        %v1629 = vpop.permute.xlu0 %1628
        %1630 = vrot.lane.b32.xlu0 %v1199, 1
        %v1631 = vpop.permute.xlu0 %1630
        %1632 = vrot.lane.b32.xlu0 %v1201, 1
        %v1633 = vpop.permute.xlu0 %1632
        %1634 = vrot.lane.b32.xlu0 %v1203, 1
        %v1635 = vpop.permute.xlu0 %1634
        %1636 = vrot.lane.b32.xlu0 %v1205, 1
        %v1637 = vpop.permute.xlu0 %1636
        %v1638 = vsel %vm884, %v1607, %v1623
        %v1639 = vsel %vm884, %v1609, %v1625
        %v1640 = vsel %vm884, %v1611, %v1627
        %v1641 = vsel %vm884, %v1613, %v1629
        %v1642 = vsel %vm884, %v1615, %v1631
        %v1643 = vsel %vm884, %v1617, %v1633
        %v1644 = vsel %vm884, %v1619, %v1635
        %v1645 = vsel %vm884, %v1621, %v1637
        %v1646 = vsel %vm884, %v1623, %v1607
        %v1647 = vsel %vm884, %v1625, %v1609
        %v1648 = vsel %vm884, %v1627, %v1611
        %v1649 = vsel %vm884, %v1629, %v1613
        %v1650 = vsel %vm884, %v1631, %v1615
        %v1651 = vsel %vm884, %v1633, %v1617
        %v1652 = vsel %vm884, %v1635, %v1619
        %v1653 = vsel %vm884, %v1637, %v1621
        %v1654 = vmul.f32 %v1646, %v893
        %v1655 = vmul.f32 %v1638, %v897
        %v1656 = vmul.f32 %v1647, %v893
        %v1657 = vmul.f32 %v1639, %v897
        %v1658 = vmul.f32 %v1648, %v893
        %v1659 = vmul.f32 %v1640, %v897
        %v1660 = vmul.f32 %v1649, %v893
        %v1661 = vmul.f32 %v1641, %v897
        %v1662 = vmul.f32 %v1650, %v893
        %v1663 = vmul.f32 %v1642, %v897
        %v1664 = vmul.f32 %v1651, %v893
        %v1665 = vmul.f32 %v1643, %v897
        %v1666 = vmul.f32 %v1652, %v893
        %v1667 = vmul.f32 %v1644, %v897
        %v1668 = vmul.f32 %v1653, %v893
        %v1669 = vmul.f32 %v1645, %v897
        %1670 = vset.pattern.permute.xlu0 3
        %1671 = vperm.xlu0 %1670, %v1270
        %v1672 = vpop.permute.xlu0 %1671
        %1674 = vset.pattern.permute.xlu0 3
        %1675 = vperm.xlu0 %1674, %v1271
        %v1676 = vpop.permute.xlu0 %1675
        %1678 = vset.pattern.permute.xlu0 3
        %1679 = vperm.xlu0 %1678, %v1272
        %v1680 = vpop.permute.xlu0 %1679
        %1682 = vset.pattern.permute.xlu0 3
        %1683 = vperm.xlu0 %1682, %v1273
        %v1684 = vpop.permute.xlu0 %1683
        %1686 = vset.pattern.permute.xlu0 3
        %1687 = vperm.xlu0 %1686, %v1274
        %v1688 = vpop.permute.xlu0 %1687
        %1690 = vset.pattern.permute.xlu0 3
        %1691 = vperm.xlu0 %1690, %v1275
        %v1692 = vpop.permute.xlu0 %1691
        %1694 = vset.pattern.permute.xlu0 3
        %1695 = vperm.xlu0 %1694, %v1276
        %v1696 = vpop.permute.xlu0 %1695
        %1698 = vset.pattern.permute.xlu0 3
        %1699 = vperm.xlu0 %1698, %v1277
        %v1700 = vpop.permute.xlu0 %1699
        %v1702 = vmul.f32 %v1672, %v1654
        %v1703 = vmul.f32 %v1672, %v1655
        %v1704 = vmul.f32 %v1676, %v1656
        %v1705 = vmul.f32 %v1676, %v1657
        %v1706 = vmul.f32 %v1680, %v1658
        %v1707 = vmul.f32 %v1680, %v1659
        %v1708 = vmul.f32 %v1684, %v1660
        %v1709 = vmul.f32 %v1684, %v1661
        %v1710 = vmul.f32 %v1688, %v1662
        %v1711 = vmul.f32 %v1688, %v1663
        %v1712 = vmul.f32 %v1692, %v1664
        %v1713 = vmul.f32 %v1692, %v1665
        %v1714 = vmul.f32 %v1696, %v1666
        %v1715 = vmul.f32 %v1696, %v1667
        %v1716 = vmul.f32 %v1700, %v1668
        %v1717 = vmul.f32 %v1700, %v1669
        %v1718 = vadd.f32 %v1590, %v1702
        %v1719 = vadd.f32 %v1591, %v1703
        %v1720 = vadd.f32 %v1592, %v1704
        %v1721 = vadd.f32 %v1593, %v1705
        %v1722 = vadd.f32 %v1594, %v1706
        %v1723 = vadd.f32 %v1595, %v1707
        %v1724 = vadd.f32 %v1596, %v1708
        %v1725 = vadd.f32 %v1597, %v1709
        %v1726 = vadd.f32 %v1598, %v1710
        %v1727 = vadd.f32 %v1599, %v1711
        %v1728 = vadd.f32 %v1600, %v1712
        %v1729 = vadd.f32 %v1601, %v1713
        %v1730 = vadd.f32 %v1602, %v1714
        %v1731 = vadd.f32 %v1603, %v1715
        %v1732 = vadd.f32 %v1604, %v1716
        %v1733 = vadd.f32 %v1605, %v1717
        %1734 = vset.pattern.permute.xlu0 4
        %1735 = vperm.xlu0 %1734, %v1270
        %v1736 = vpop.permute.xlu0 %1735
        %1738 = vset.pattern.permute.xlu0 4
        %1739 = vperm.xlu0 %1738, %v1271
        %v1740 = vpop.permute.xlu0 %1739
        %1742 = vset.pattern.permute.xlu0 4
        %1743 = vperm.xlu0 %1742, %v1272
        %v1744 = vpop.permute.xlu0 %1743
        %1746 = vset.pattern.permute.xlu0 4
        %1747 = vperm.xlu0 %1746, %v1273
        %v1748 = vpop.permute.xlu0 %1747
        %1750 = vset.pattern.permute.xlu0 4
        %1751 = vperm.xlu0 %1750, %v1274
        %v1752 = vpop.permute.xlu0 %1751
        %1754 = vset.pattern.permute.xlu0 4
        %1755 = vperm.xlu0 %1754, %v1275
        %v1756 = vpop.permute.xlu0 %1755
        %1758 = vset.pattern.permute.xlu0 4
        %1759 = vperm.xlu0 %1758, %v1276
        %v1760 = vpop.permute.xlu0 %1759
        %1762 = vset.pattern.permute.xlu0 4
        %1763 = vperm.xlu0 %1762, %v1277
        %v1764 = vpop.permute.xlu0 %1763
        %v1766 = vmul.f32 %v1736, %v1190
        %v1767 = vmul.f32 %v1736, %v1191
        %v1768 = vmul.f32 %v1740, %v1192
        %v1769 = vmul.f32 %v1740, %v1193
        %v1770 = vmul.f32 %v1744, %v1194
        %v1771 = vmul.f32 %v1744, %v1195
        %v1772 = vmul.f32 %v1748, %v1196
        %v1773 = vmul.f32 %v1748, %v1197
        %v1774 = vmul.f32 %v1752, %v1198
        %v1775 = vmul.f32 %v1752, %v1199
        %v1776 = vmul.f32 %v1756, %v1200
        %v1777 = vmul.f32 %v1756, %v1201
        %v1778 = vmul.f32 %v1760, %v1202
        %v1779 = vmul.f32 %v1760, %v1203
        %v1780 = vmul.f32 %v1764, %v1204
        %v1781 = vmul.f32 %v1764, %v1205
        %v1782 = vadd.f32 %v1718, %v1766
        %v1783 = vadd.f32 %v1719, %v1767
        %v1784 = vadd.f32 %v1720, %v1768
        %v1785 = vadd.f32 %v1721, %v1769
        %v1786 = vadd.f32 %v1722, %v1770
        %v1787 = vadd.f32 %v1723, %v1771
        %v1788 = vadd.f32 %v1724, %v1772
        %v1789 = vadd.f32 %v1725, %v1773
        %v1790 = vadd.f32 %v1726, %v1774
        %v1791 = vadd.f32 %v1727, %v1775
        %v1792 = vadd.f32 %v1728, %v1776
        %v1793 = vadd.f32 %v1729, %v1777
        %v1794 = vadd.f32 %v1730, %v1778
        %v1795 = vadd.f32 %v1731, %v1779
        %v1796 = vadd.f32 %v1732, %v1780
        %v1797 = vadd.f32 %v1733, %v1781
        %1798 = vrot.lane.b32.xlu0 %v1190, 127
        %v1799 = vpop.permute.xlu0 %1798
        %1800 = vrot.lane.b32.xlu0 %v1192, 127
        %v1801 = vpop.permute.xlu0 %1800
        %1802 = vrot.lane.b32.xlu0 %v1194, 127
        %v1803 = vpop.permute.xlu0 %1802
        %1804 = vrot.lane.b32.xlu0 %v1196, 127
        %v1805 = vpop.permute.xlu0 %1804
        %1806 = vrot.lane.b32.xlu0 %v1198, 127
        %v1807 = vpop.permute.xlu0 %1806
        %1808 = vrot.lane.b32.xlu0 %v1200, 127
        %v1809 = vpop.permute.xlu0 %1808
        %1810 = vrot.lane.b32.xlu0 %v1202, 127
        %v1811 = vpop.permute.xlu0 %1810
        %1812 = vrot.lane.b32.xlu0 %v1204, 127
        %v1813 = vpop.permute.xlu0 %1812
        %1814 = vrot.lane.b32.xlu0 %v1191, 127
        %v1815 = vpop.permute.xlu0 %1814
        %1816 = vrot.lane.b32.xlu0 %v1193, 127
        %v1817 = vpop.permute.xlu0 %1816
        %1818 = vrot.lane.b32.xlu0 %v1195, 127
        %v1819 = vpop.permute.xlu0 %1818
        %1820 = vrot.lane.b32.xlu0 %v1197, 127
        %v1821 = vpop.permute.xlu0 %1820
        %1822 = vrot.lane.b32.xlu0 %v1199, 127
        %v1823 = vpop.permute.xlu0 %1822
        %1824 = vrot.lane.b32.xlu0 %v1201, 127
        %v1825 = vpop.permute.xlu0 %1824
        %1826 = vrot.lane.b32.xlu0 %v1203, 127
        %v1827 = vpop.permute.xlu0 %1826
        %1828 = vrot.lane.b32.xlu0 %v1205, 127
        %v1829 = vpop.permute.xlu0 %1828
        %v1830 = vsel %vm938, %v1799, %v1815
        %v1831 = vsel %vm938, %v1801, %v1817
        %v1832 = vsel %vm938, %v1803, %v1819
        %v1833 = vsel %vm938, %v1805, %v1821
        %v1834 = vsel %vm938, %v1807, %v1823
        %v1835 = vsel %vm938, %v1809, %v1825
        %v1836 = vsel %vm938, %v1811, %v1827
        %v1837 = vsel %vm938, %v1813, %v1829
        %v1838 = vsel %vm938, %v1815, %v1799
        %v1839 = vsel %vm938, %v1817, %v1801
        %v1840 = vsel %vm938, %v1819, %v1803
        %v1841 = vsel %vm938, %v1821, %v1805
        %v1842 = vsel %vm938, %v1823, %v1807
        %v1843 = vsel %vm938, %v1825, %v1809
        %v1844 = vsel %vm938, %v1827, %v1811
        %v1845 = vsel %vm938, %v1829, %v1813
        %v1846 = vmul.f32 %v1830, %v947
        %v1847 = vmul.f32 %v1838, %v951
        %v1848 = vmul.f32 %v1831, %v947
        %v1849 = vmul.f32 %v1839, %v951
        %v1850 = vmul.f32 %v1832, %v947
        %v1851 = vmul.f32 %v1840, %v951
        %v1852 = vmul.f32 %v1833, %v947
        %v1853 = vmul.f32 %v1841, %v951
        %v1854 = vmul.f32 %v1834, %v947
        %v1855 = vmul.f32 %v1842, %v951
        %v1856 = vmul.f32 %v1835, %v947
        %v1857 = vmul.f32 %v1843, %v951
        %v1858 = vmul.f32 %v1836, %v947
        %v1859 = vmul.f32 %v1844, %v951
        %v1860 = vmul.f32 %v1837, %v947
        %v1861 = vmul.f32 %v1845, %v951
        %1862 = vset.pattern.permute.xlu0 5
        %1863 = vperm.xlu0 %1862, %v1270
        %v1864 = vpop.permute.xlu0 %1863
        %1866 = vset.pattern.permute.xlu0 5
        %1867 = vperm.xlu0 %1866, %v1271
        %v1868 = vpop.permute.xlu0 %1867
        %1870 = vset.pattern.permute.xlu0 5
        %1871 = vperm.xlu0 %1870, %v1272
        %v1872 = vpop.permute.xlu0 %1871
        %1874 = vset.pattern.permute.xlu0 5
        %1875 = vperm.xlu0 %1874, %v1273
        %v1876 = vpop.permute.xlu0 %1875
        %1878 = vset.pattern.permute.xlu0 5
        %1879 = vperm.xlu0 %1878, %v1274
        %v1880 = vpop.permute.xlu0 %1879
        %1882 = vset.pattern.permute.xlu0 5
        %1883 = vperm.xlu0 %1882, %v1275
        %v1884 = vpop.permute.xlu0 %1883
        %1886 = vset.pattern.permute.xlu0 5
        %1887 = vperm.xlu0 %1886, %v1276
        %v1888 = vpop.permute.xlu0 %1887
        %1890 = vset.pattern.permute.xlu0 5
        %1891 = vperm.xlu0 %1890, %v1277
        %v1892 = vpop.permute.xlu0 %1891
        %v1894 = vmul.f32 %v1864, %v1846
        %v1895 = vmul.f32 %v1864, %v1847
        %v1896 = vmul.f32 %v1868, %v1848
        %v1897 = vmul.f32 %v1868, %v1849
        %v1898 = vmul.f32 %v1872, %v1850
        %v1899 = vmul.f32 %v1872, %v1851
        %v1900 = vmul.f32 %v1876, %v1852
        %v1901 = vmul.f32 %v1876, %v1853
        %v1902 = vmul.f32 %v1880, %v1854
        %v1903 = vmul.f32 %v1880, %v1855
        %v1904 = vmul.f32 %v1884, %v1856
        %v1905 = vmul.f32 %v1884, %v1857
        %v1906 = vmul.f32 %v1888, %v1858
        %v1907 = vmul.f32 %v1888, %v1859
        %v1908 = vmul.f32 %v1892, %v1860
        %v1909 = vmul.f32 %v1892, %v1861
        %v1910 = vadd.f32 %v1782, %v1894
        %v1911 = vadd.f32 %v1783, %v1895
        %v1912 = vadd.f32 %v1784, %v1896
        %v1913 = vadd.f32 %v1785, %v1897
        %v1914 = vadd.f32 %v1786, %v1898
        %v1915 = vadd.f32 %v1787, %v1899
        %v1916 = vadd.f32 %v1788, %v1900
        %v1917 = vadd.f32 %v1789, %v1901
        %v1918 = vadd.f32 %v1790, %v1902
        %v1919 = vadd.f32 %v1791, %v1903
        %v1920 = vadd.f32 %v1792, %v1904
        %v1921 = vadd.f32 %v1793, %v1905
        %v1922 = vadd.f32 %v1794, %v1906
        %v1923 = vadd.f32 %v1795, %v1907
        %v1924 = vadd.f32 %v1796, %v1908
        %v1925 = vadd.f32 %v1797, %v1909
        %1926 = vrot.lane.b32.xlu0 %v1190, 113
        %v1927 = vpop.permute.xlu0 %1926
        %1928 = vrot.lane.b32.xlu0 %v1192, 113
        %v1929 = vpop.permute.xlu0 %1928
        %1930 = vrot.lane.b32.xlu0 %v1194, 113
        %v1931 = vpop.permute.xlu0 %1930
        %1932 = vrot.lane.b32.xlu0 %v1196, 113
        %v1933 = vpop.permute.xlu0 %1932
        %1934 = vrot.lane.b32.xlu0 %v1198, 113
        %v1935 = vpop.permute.xlu0 %1934
        %1936 = vrot.lane.b32.xlu0 %v1200, 113
        %v1937 = vpop.permute.xlu0 %1936
        %1938 = vrot.lane.b32.xlu0 %v1202, 113
        %v1939 = vpop.permute.xlu0 %1938
        %1940 = vrot.lane.b32.xlu0 %v1204, 113
        %v1941 = vpop.permute.xlu0 %1940
        %1942 = vrot.lane.b32.xlu0 %v1191, 113
        %v1943 = vpop.permute.xlu0 %1942
        %1944 = vrot.lane.b32.xlu0 %v1193, 113
        %v1945 = vpop.permute.xlu0 %1944
        %1946 = vrot.lane.b32.xlu0 %v1195, 113
        %v1947 = vpop.permute.xlu0 %1946
        %1948 = vrot.lane.b32.xlu0 %v1197, 113
        %v1949 = vpop.permute.xlu0 %1948
        %1950 = vrot.lane.b32.xlu0 %v1199, 113
        %v1951 = vpop.permute.xlu0 %1950
        %1952 = vrot.lane.b32.xlu0 %v1201, 113
        %v1953 = vpop.permute.xlu0 %1952
        %1954 = vrot.lane.b32.xlu0 %v1203, 113
        %v1955 = vpop.permute.xlu0 %1954
        %1956 = vrot.lane.b32.xlu0 %v1205, 113
        %v1957 = vpop.permute.xlu0 %1956
        %v1958 = vsel %vm976, %v1927, %v1943
        %v1959 = vsel %vm976, %v1929, %v1945
        %v1960 = vsel %vm976, %v1931, %v1947
        %v1961 = vsel %vm976, %v1933, %v1949
        %v1962 = vsel %vm976, %v1935, %v1951
        %v1963 = vsel %vm976, %v1937, %v1953
        %v1964 = vsel %vm976, %v1939, %v1955
        %v1965 = vsel %vm976, %v1941, %v1957
        %v1966 = vsel %vm976, %v1943, %v1927
        %v1967 = vsel %vm976, %v1945, %v1929
        %v1968 = vsel %vm976, %v1947, %v1931
        %v1969 = vsel %vm976, %v1949, %v1933
        %v1970 = vsel %vm976, %v1951, %v1935
        %v1971 = vsel %vm976, %v1953, %v1937
        %v1972 = vsel %vm976, %v1955, %v1939
        %v1973 = vsel %vm976, %v1957, %v1941
        %v1974 = vmul.f32 %v1958, %v985
        %v1975 = vmul.f32 %v1966, %v989
        %v1976 = vmul.f32 %v1959, %v985
        %v1977 = vmul.f32 %v1967, %v989
        %v1978 = vmul.f32 %v1960, %v985
        %v1979 = vmul.f32 %v1968, %v989
        %v1980 = vmul.f32 %v1961, %v985
        %v1981 = vmul.f32 %v1969, %v989
        %v1982 = vmul.f32 %v1962, %v985
        %v1983 = vmul.f32 %v1970, %v989
        %v1984 = vmul.f32 %v1963, %v985
        %v1985 = vmul.f32 %v1971, %v989
        %v1986 = vmul.f32 %v1964, %v985
        %v1987 = vmul.f32 %v1972, %v989
        %v1988 = vmul.f32 %v1965, %v985
        %v1989 = vmul.f32 %v1973, %v989
        %1990 = vset.pattern.permute.xlu0 6
        %1991 = vperm.xlu0 %1990, %v1270
        %v1992 = vpop.permute.xlu0 %1991
        %1994 = vset.pattern.permute.xlu0 6
        %1995 = vperm.xlu0 %1994, %v1271
        %v1996 = vpop.permute.xlu0 %1995
        %1998 = vset.pattern.permute.xlu0 6
        %1999 = vperm.xlu0 %1998, %v1272
        %v2000 = vpop.permute.xlu0 %1999
        %2002 = vset.pattern.permute.xlu0 6
        %2003 = vperm.xlu0 %2002, %v1273
        %v2004 = vpop.permute.xlu0 %2003
        %2006 = vset.pattern.permute.xlu0 6
        %2007 = vperm.xlu0 %2006, %v1274
        %v2008 = vpop.permute.xlu0 %2007
        %2010 = vset.pattern.permute.xlu0 6
        %2011 = vperm.xlu0 %2010, %v1275
        %v2012 = vpop.permute.xlu0 %2011
        %2014 = vset.pattern.permute.xlu0 6
        %2015 = vperm.xlu0 %2014, %v1276
        %v2016 = vpop.permute.xlu0 %2015
        %2018 = vset.pattern.permute.xlu0 6
        %2019 = vperm.xlu0 %2018, %v1277
        %v2020 = vpop.permute.xlu0 %2019
        %v2022 = vmul.f32 %v1992, %v1974
        %v2023 = vmul.f32 %v1992, %v1975
        %v2024 = vmul.f32 %v1996, %v1976
        %v2025 = vmul.f32 %v1996, %v1977
        %v2026 = vmul.f32 %v2000, %v1978
        %v2027 = vmul.f32 %v2000, %v1979
        %v2028 = vmul.f32 %v2004, %v1980
        %v2029 = vmul.f32 %v2004, %v1981
        %v2030 = vmul.f32 %v2008, %v1982
        %v2031 = vmul.f32 %v2008, %v1983
        %v2032 = vmul.f32 %v2012, %v1984
        %v2033 = vmul.f32 %v2012, %v1985
        %v2034 = vmul.f32 %v2016, %v1986
        %v2035 = vmul.f32 %v2016, %v1987
        %v2036 = vmul.f32 %v2020, %v1988
        %v2037 = vmul.f32 %v2020, %v1989
        %v2038 = vadd.f32 %v1910, %v2022
        %v2039 = vadd.f32 %v1911, %v2023
        %v2040 = vadd.f32 %v1912, %v2024
        %v2041 = vadd.f32 %v1913, %v2025
        %v2042 = vadd.f32 %v1914, %v2026
        %v2043 = vadd.f32 %v1915, %v2027
        %v2044 = vadd.f32 %v1916, %v2028
        %v2045 = vadd.f32 %v1917, %v2029
        %v2046 = vadd.f32 %v1918, %v2030
        %v2047 = vadd.f32 %v1919, %v2031
        %v2048 = vadd.f32 %v1920, %v2032
        %v2049 = vadd.f32 %v1921, %v2033
        %v2050 = vadd.f32 %v1922, %v2034
        %v2051 = vadd.f32 %v1923, %v2035
        %v2052 = vadd.f32 %v1924, %v2036
        %v2053 = vadd.f32 %v1925, %v2037
        %2054 = vrot.lane.b32.xlu0 %v1190, 112
        %v2055 = vpop.permute.xlu0 %2054
        %2056 = vrot.lane.b32.xlu0 %v1192, 112
        %v2057 = vpop.permute.xlu0 %2056
        %2058 = vrot.lane.b32.xlu0 %v1194, 112
        %v2059 = vpop.permute.xlu0 %2058
        %2060 = vrot.lane.b32.xlu0 %v1196, 112
        %v2061 = vpop.permute.xlu0 %2060
        %2062 = vrot.lane.b32.xlu0 %v1198, 112
        %v2063 = vpop.permute.xlu0 %2062
        %2064 = vrot.lane.b32.xlu0 %v1200, 112
        %v2065 = vpop.permute.xlu0 %2064
        %2066 = vrot.lane.b32.xlu0 %v1202, 112
        %v2067 = vpop.permute.xlu0 %2066
        %2068 = vrot.lane.b32.xlu0 %v1204, 112
        %v2069 = vpop.permute.xlu0 %2068
        %2070 = vrot.lane.b32.xlu0 %v1191, 112
        %v2071 = vpop.permute.xlu0 %2070
        %2072 = vrot.lane.b32.xlu0 %v1193, 112
        %v2073 = vpop.permute.xlu0 %2072
        %2074 = vrot.lane.b32.xlu0 %v1195, 112
        %v2075 = vpop.permute.xlu0 %2074
        %2076 = vrot.lane.b32.xlu0 %v1197, 112
        %v2077 = vpop.permute.xlu0 %2076
        %2078 = vrot.lane.b32.xlu0 %v1199, 112
        %v2079 = vpop.permute.xlu0 %2078
        %2080 = vrot.lane.b32.xlu0 %v1201, 112
        %v2081 = vpop.permute.xlu0 %2080
        %2082 = vrot.lane.b32.xlu0 %v1203, 112
        %v2083 = vpop.permute.xlu0 %2082
        %2084 = vrot.lane.b32.xlu0 %v1205, 112
        %v2085 = vpop.permute.xlu0 %2084
        %v2086 = vsel %vm1014, %v2055, %v2071
        %v2087 = vsel %vm1014, %v2057, %v2073
        %v2088 = vsel %vm1014, %v2059, %v2075
        %v2089 = vsel %vm1014, %v2061, %v2077
        %v2090 = vsel %vm1014, %v2063, %v2079
        %v2091 = vsel %vm1014, %v2065, %v2081
        %v2092 = vsel %vm1014, %v2067, %v2083
        %v2093 = vsel %vm1014, %v2069, %v2085
        %v2094 = vsel %vm1014, %v2071, %v2055
        %v2095 = vsel %vm1014, %v2073, %v2057
        %v2096 = vsel %vm1014, %v2075, %v2059
        %v2097 = vsel %vm1014, %v2077, %v2061
        %v2098 = vsel %vm1014, %v2079, %v2063
        %v2099 = vsel %vm1014, %v2081, %v2065
        %v2100 = vsel %vm1014, %v2083, %v2067
        %v2101 = vsel %vm1014, %v2085, %v2069
        %v2102 = vmul.f32 %v2086, %v1023
        %v2103 = vmul.f32 %v2094, %v1027
        %v2104 = vmul.f32 %v2087, %v1023
        %v2105 = vmul.f32 %v2095, %v1027
        %v2106 = vmul.f32 %v2088, %v1023
        %v2107 = vmul.f32 %v2096, %v1027
        %v2108 = vmul.f32 %v2089, %v1023
        %v2109 = vmul.f32 %v2097, %v1027
        %v2110 = vmul.f32 %v2090, %v1023
        %v2111 = vmul.f32 %v2098, %v1027
        %v2112 = vmul.f32 %v2091, %v1023
        %v2113 = vmul.f32 %v2099, %v1027
        %v2114 = vmul.f32 %v2092, %v1023
        %v2115 = vmul.f32 %v2100, %v1027
        %v2116 = vmul.f32 %v2093, %v1023
        %v2117 = vmul.f32 %v2101, %v1027
        %2118 = vset.pattern.permute.xlu0 7
        %2119 = vperm.xlu0 %2118, %v1270
        %v2120 = vpop.permute.xlu0 %2119
        %2122 = vset.pattern.permute.xlu0 7
        %2123 = vperm.xlu0 %2122, %v1271
        %v2124 = vpop.permute.xlu0 %2123
        %2126 = vset.pattern.permute.xlu0 7
        %2127 = vperm.xlu0 %2126, %v1272
        %v2128 = vpop.permute.xlu0 %2127
        %2130 = vset.pattern.permute.xlu0 7
        %2131 = vperm.xlu0 %2130, %v1273
        %v2132 = vpop.permute.xlu0 %2131
        %2134 = vset.pattern.permute.xlu0 7
        %2135 = vperm.xlu0 %2134, %v1274
        %v2136 = vpop.permute.xlu0 %2135
        %2138 = vset.pattern.permute.xlu0 7
        %2139 = vperm.xlu0 %2138, %v1275
        %v2140 = vpop.permute.xlu0 %2139
        %2142 = vset.pattern.permute.xlu0 7
        %2143 = vperm.xlu0 %2142, %v1276
        %v2144 = vpop.permute.xlu0 %2143
        %2146 = vset.pattern.permute.xlu0 7
        %2147 = vperm.xlu0 %2146, %v1277
        %v2148 = vpop.permute.xlu0 %2147
        %v2150 = vmul.f32 %v2120, %v2102
        %v2151 = vmul.f32 %v2120, %v2103
        %v2152 = vmul.f32 %v2124, %v2104
        %v2153 = vmul.f32 %v2124, %v2105
        %v2154 = vmul.f32 %v2128, %v2106
        %v2155 = vmul.f32 %v2128, %v2107
        %v2156 = vmul.f32 %v2132, %v2108
        %v2157 = vmul.f32 %v2132, %v2109
        %v2158 = vmul.f32 %v2136, %v2110
        %v2159 = vmul.f32 %v2136, %v2111
        %v2160 = vmul.f32 %v2140, %v2112
        %v2161 = vmul.f32 %v2140, %v2113
        %v2162 = vmul.f32 %v2144, %v2114
        %v2163 = vmul.f32 %v2144, %v2115
        %v2164 = vmul.f32 %v2148, %v2116
        %v2165 = vmul.f32 %v2148, %v2117
        %v2166 = vadd.f32 %v2038, %v2150
        %v2167 = vadd.f32 %v2039, %v2151
        %v2168 = vadd.f32 %v2040, %v2152
        %v2169 = vadd.f32 %v2041, %v2153
        %v2170 = vadd.f32 %v2042, %v2154
        %v2171 = vadd.f32 %v2043, %v2155
        %v2172 = vadd.f32 %v2044, %v2156
        %v2173 = vadd.f32 %v2045, %v2157
        %v2174 = vadd.f32 %v2046, %v2158
        %v2175 = vadd.f32 %v2047, %v2159
        %v2176 = vadd.f32 %v2048, %v2160
        %v2177 = vadd.f32 %v2049, %v2161
        %v2178 = vadd.f32 %v2050, %v2162
        %v2179 = vadd.f32 %v2051, %v2163
        %v2180 = vadd.f32 %v2052, %v2164
        %v2181 = vadd.f32 %v2053, %v2165
        %2182 = vrot.lane.b32.xlu0 %v1190, 111
        %v2183 = vpop.permute.xlu0 %2182
        %2184 = vrot.lane.b32.xlu0 %v1192, 111
        %v2185 = vpop.permute.xlu0 %2184
        %2186 = vrot.lane.b32.xlu0 %v1194, 111
        %v2187 = vpop.permute.xlu0 %2186
        %2188 = vrot.lane.b32.xlu0 %v1196, 111
        %v2189 = vpop.permute.xlu0 %2188
        %2190 = vrot.lane.b32.xlu0 %v1198, 111
        %v2191 = vpop.permute.xlu0 %2190
        %2192 = vrot.lane.b32.xlu0 %v1200, 111
        %v2193 = vpop.permute.xlu0 %2192
        %2194 = vrot.lane.b32.xlu0 %v1202, 111
        %v2195 = vpop.permute.xlu0 %2194
        %2196 = vrot.lane.b32.xlu0 %v1204, 111
        %v2197 = vpop.permute.xlu0 %2196
        %2198 = vrot.lane.b32.xlu0 %v1191, 111
        %v2199 = vpop.permute.xlu0 %2198
        %2200 = vrot.lane.b32.xlu0 %v1193, 111
        %v2201 = vpop.permute.xlu0 %2200
        %2202 = vrot.lane.b32.xlu0 %v1195, 111
        %v2203 = vpop.permute.xlu0 %2202
        %2204 = vrot.lane.b32.xlu0 %v1197, 111
        %v2205 = vpop.permute.xlu0 %2204
        %2206 = vrot.lane.b32.xlu0 %v1199, 111
        %v2207 = vpop.permute.xlu0 %2206
        %2208 = vrot.lane.b32.xlu0 %v1201, 111
        %v2209 = vpop.permute.xlu0 %2208
        %2210 = vrot.lane.b32.xlu0 %v1203, 111
        %v2211 = vpop.permute.xlu0 %2210
        %2212 = vrot.lane.b32.xlu0 %v1205, 111
        %v2213 = vpop.permute.xlu0 %2212
        %v2214 = vsel %vm1052, %v2183, %v2199
        %v2215 = vsel %vm1052, %v2185, %v2201
        %v2216 = vsel %vm1052, %v2187, %v2203
        %v2217 = vsel %vm1052, %v2189, %v2205
        %v2218 = vsel %vm1052, %v2191, %v2207
        %v2219 = vsel %vm1052, %v2193, %v2209
        %v2220 = vsel %vm1052, %v2195, %v2211
        %v2221 = vsel %vm1052, %v2197, %v2213
        %v2222 = vsel %vm1052, %v2199, %v2183
        %v2223 = vsel %vm1052, %v2201, %v2185
        %v2224 = vsel %vm1052, %v2203, %v2187
        %v2225 = vsel %vm1052, %v2205, %v2189
        %v2226 = vsel %vm1052, %v2207, %v2191
        %v2227 = vsel %vm1052, %v2209, %v2193
        %v2228 = vsel %vm1052, %v2211, %v2195
        %v2229 = vsel %vm1052, %v2213, %v2197
        %v2230 = vmul.f32 %v2214, %v1061
        %v2231 = vmul.f32 %v2222, %v1065
        %v2232 = vmul.f32 %v2215, %v1061
        %v2233 = vmul.f32 %v2223, %v1065
        %v2234 = vmul.f32 %v2216, %v1061
        %v2235 = vmul.f32 %v2224, %v1065
        %v2236 = vmul.f32 %v2217, %v1061
        %v2237 = vmul.f32 %v2225, %v1065
        %v2238 = vmul.f32 %v2218, %v1061
        %v2239 = vmul.f32 %v2226, %v1065
        %v2240 = vmul.f32 %v2219, %v1061
        %v2241 = vmul.f32 %v2227, %v1065
        %v2242 = vmul.f32 %v2220, %v1061
        %v2243 = vmul.f32 %v2228, %v1065
        %v2244 = vmul.f32 %v2221, %v1061
        %v2245 = vmul.f32 %v2229, %v1065
        %2246 = vset.pattern.permute.xlu0 8
        %2247 = vperm.xlu0 %2246, %v1270
        %v2248 = vpop.permute.xlu0 %2247
        %2250 = vset.pattern.permute.xlu0 8
        %2251 = vperm.xlu0 %2250, %v1271
        %v2252 = vpop.permute.xlu0 %2251
        %2254 = vset.pattern.permute.xlu0 8
        %2255 = vperm.xlu0 %2254, %v1272
        %v2256 = vpop.permute.xlu0 %2255
        %2258 = vset.pattern.permute.xlu0 8
        %2259 = vperm.xlu0 %2258, %v1273
        %v2260 = vpop.permute.xlu0 %2259
        %2262 = vset.pattern.permute.xlu0 8
        %2263 = vperm.xlu0 %2262, %v1274
        %v2264 = vpop.permute.xlu0 %2263
        %2266 = vset.pattern.permute.xlu0 8
        %2267 = vperm.xlu0 %2266, %v1275
        %v2268 = vpop.permute.xlu0 %2267
        %2270 = vset.pattern.permute.xlu0 8
        %2271 = vperm.xlu0 %2270, %v1276
        %v2272 = vpop.permute.xlu0 %2271
        %2274 = vset.pattern.permute.xlu0 8
        %2275 = vperm.xlu0 %2274, %v1277
        %v2276 = vpop.permute.xlu0 %2275
        %v2278 = vmul.f32 %v2248, %v2230
        %v2279 = vmul.f32 %v2248, %v2231
        %v2280 = vmul.f32 %v2252, %v2232
        %v2281 = vmul.f32 %v2252, %v2233
        %v2282 = vmul.f32 %v2256, %v2234
        %v2283 = vmul.f32 %v2256, %v2235
        %v2284 = vmul.f32 %v2260, %v2236
        %v2285 = vmul.f32 %v2260, %v2237
        %v2286 = vmul.f32 %v2264, %v2238
        %v2287 = vmul.f32 %v2264, %v2239
        %v2288 = vmul.f32 %v2268, %v2240
        %v2289 = vmul.f32 %v2268, %v2241
        %v2290 = vmul.f32 %v2272, %v2242
        %v2291 = vmul.f32 %v2272, %v2243
        %v2292 = vmul.f32 %v2276, %v2244
        %v2293 = vmul.f32 %v2276, %v2245
        %v2294 = vadd.f32 %v2166, %v2278
        %v2295 = vadd.f32 %v2167, %v2279
        %v2296 = vadd.f32 %v2168, %v2280
        %v2297 = vadd.f32 %v2169, %v2281
        %v2298 = vadd.f32 %v2170, %v2282
        %v2299 = vadd.f32 %v2171, %v2283
        %v2300 = vadd.f32 %v2172, %v2284
        %v2301 = vadd.f32 %v2173, %v2285
        %v2302 = vadd.f32 %v2174, %v2286
        %v2303 = vadd.f32 %v2175, %v2287
        %v2304 = vadd.f32 %v2176, %v2288
        %v2305 = vadd.f32 %v2177, %v2289
        %v2306 = vadd.f32 %v2178, %v2290
        %v2307 = vadd.f32 %v2179, %v2291
        %v2308 = vadd.f32 %v2180, %v2292
        %v2309 = vadd.f32 %v2181, %v2293
        %v2310 = vmax.f32 %v2294, 0.0
        %v2311 = vmax.f32 %v2295, 0.0
        %v2312 = vmax.f32 %v2296, 0.0
        %v2313 = vmax.f32 %v2297, 0.0
        %v2314 = vmax.f32 %v2298, 0.0
        %v2315 = vmax.f32 %v2299, 0.0
        %v2316 = vmax.f32 %v2300, 0.0
        %v2317 = vmax.f32 %v2301, 0.0
        %v2318 = vmax.f32 %v2302, 0.0
        %v2319 = vmax.f32 %v2303, 0.0
        %v2320 = vmax.f32 %v2304, 0.0
        %v2321 = vmax.f32 %v2305, 0.0
        %v2322 = vmax.f32 %v2306, 0.0
        %v2323 = vmax.f32 %v2307, 0.0
        %v2324 = vmax.f32 %v2308, 0.0
        %v2325 = vmax.f32 %v2309, 0.0
        %v2326 = vld [vmem:[#allocation10] sm:$0xff]
        %v2327 = vld [vmem:[#allocation10 + $0x8] sm:$0xff]
        %v2328 = vld [vmem:[#allocation10 + $0x10] sm:$0xff]
        %v2329 = vld [vmem:[#allocation10 + $0x18] sm:$0xff]
        %v2330 = vld [vmem:[#allocation10 + $0x20] sm:$0xff]
        %v2331 = vld [vmem:[#allocation10 + $0x28] sm:$0xff]
        %v2332 = vld [vmem:[#allocation10 + $0x30] sm:$0xff]
        %v2333 = vld [vmem:[#allocation10 + $0x38] sm:$0xff]
        %v2334 = vpack.c.bf16 %v2327, %v2326
        %v2335 = vpack.c.bf16 %v2329, %v2328
        %v2336 = vpack.c.bf16 %v2331, %v2330
        %v2337 = vpack.c.bf16 %v2333, %v2332
        %v2338 = vpack.c.bf16 %v2312, %v2310
        %v2339 = vpack.c.bf16 %v2313, %v2311
        %v2340 = vpack.c.bf16 %v2316, %v2314
        %v2341 = vpack.c.bf16 %v2317, %v2315
        %v2342 = vpack.c.bf16 %v2320, %v2318
        %v2343 = vpack.c.bf16 %v2321, %v2319
        %v2344 = vpack.c.bf16 %v2324, %v2322
        %v2345 = vpack.c.bf16 %v2325, %v2323
        %vm2346 = vcmask 523264
        %v2348 = vsel %vm2346, %v2334, 0
        %v2351 = vsel %vm2346, %v2335, 0
        %v2354 = vsel %vm2346, %v2336, 0
        %v2357 = vsel %vm2346, %v2337, 0
        %2359 = vmatprep.subr.bf16.mxu0 %v2339
        %2360 = vmatpush1.bf16.msra.mxu0 %v2338
        %2361 = vmatprep.subr.bf16.mxu0 %v2341
        %2362 = vmatpush1.bf16.msra.mxu0 %v2340
        %2363 = vmatprep.subr.bf16.mxu0 %v2343
        %2364 = vmatpush1.bf16.msra.mxu0 %v2342
        %2365 = vmatprep.subr.bf16.mxu0 %v2345
        %2366 = vmatpush1.bf16.msra.mxu0 %v2344
        %2367 = vmatprep.subr.bf16.mxu0 0
        %2368 = vmatpush1.bf16.msra.mxu0 0
        %2369 = vmatprep.subr.bf16.mxu0 0
        %2370 = vmatpush1.bf16.msra.mxu0 0
        %2371 = vmatprep.subr.bf16.mxu0 0
        %2372 = vmatpush1.bf16.msra.mxu0 0
        %2373 = vmatprep.subr.bf16.mxu0 0
        %2374 = vmatpush1.bf16.msra.mxu0 0
        %2375 = vmatprep.subr.bf16.mxu0 0
        %2376 = vmatpush1.bf16.msra.mxu0 0
        %2377 = vmatprep.subr.bf16.mxu0 0
        %2378 = vmatpush1.bf16.msra.mxu0 0
        %2379 = vmatprep.subr.bf16.mxu0 0
        %2380 = vmatpush1.bf16.msra.mxu0 0
        %2381 = vmatprep.subr.bf16.mxu0 0
        %2382 = vmatpush1.bf16.msra.mxu0 0
        %2383 = vmatprep.subr.bf16.mxu0 0
        %2384 = vmatpush1.bf16.msra.mxu0 0
        %2385 = vmatprep.subr.bf16.mxu0 0
        %2386 = vmatpush1.bf16.msra.mxu0 0
        %2387 = vmatprep.subr.bf16.mxu0 0
        %2388 = vmatpush1.bf16.msra.mxu0 0
        %2389 = vmatprep.subr.bf16.mxu0 0
        %2390 = vmatpush1.bf16.msra.mxu0 0
        %2391 = vmatprep.mubr.bf16.mxu0 0
        %2392 = vmatmul.mubr.bf16.gmra.mrb[0].mxu0 %v2348
        %v2393 = vpop.f32.mrb[0].mxu0
        %v2394 = vadd.f32 0.0, %v2393
        %v2395 = vpop.f32.mrb[0].mxu0
        %v2396 = vadd.f32 0.0, %v2395
        %v2397 = vpop.f32.mrb[0].mxu0
        %v2398 = vadd.f32 0.0, %v2397
        %v2399 = vpop.f32.mrb[0].mxu0
        %v2400 = vadd.f32 0.0, %v2399
        %2401 = vmatprep.mubr.bf16.mxu0 0
        %2402 = vmatmul.mubr.bf16.gmra.mrb[0].mxu0 %v2351
        %v2403 = vpop.f32.mrb[0].mxu0
        %v2404 = vadd.f32 0.0, %v2403
        %v2405 = vpop.f32.mrb[0].mxu0
        %v2406 = vadd.f32 0.0, %v2405
        %v2407 = vpop.f32.mrb[0].mxu0
        %v2408 = vadd.f32 0.0, %v2407
        %v2409 = vpop.f32.mrb[0].mxu0
        %v2410 = vadd.f32 0.0, %v2409
        %2411 = vmatprep.mubr.bf16.mxu0 0
        %2412 = vmatmul.mubr.bf16.gmra.mrb[0].mxu0 %v2354
        %v2413 = vpop.f32.mrb[0].mxu0
        %v2414 = vadd.f32 0.0, %v2413
        %v2415 = vpop.f32.mrb[0].mxu0
        %v2416 = vadd.f32 0.0, %v2415
        %v2417 = vpop.f32.mrb[0].mxu0
        %v2418 = vadd.f32 0.0, %v2417
        %v2419 = vpop.f32.mrb[0].mxu0
        %v2420 = vadd.f32 0.0, %v2419
        %2421 = vmatprep.mubr.bf16.mxu0 0
        %2422 = vmatmul.mubr.bf16.gmra.mrb[0].mxu0 %v2357
        %v2423 = vpop.f32.mrb[0].mxu0
        %v2424 = vadd.f32 0.0, %v2423
        %v2425 = vpop.f32.mrb[0].mxu0
        %v2426 = vadd.f32 0.0, %v2425
        %v2427 = vpop.f32.mrb[0].mxu0
        %v2428 = vadd.f32 0.0, %v2427
        %v2429 = vpop.f32.mrb[0].mxu0
        %v2430 = vadd.f32 0.0, %v2429
        %2431 = vdwg.mxu0
        %v2432 = vadd.f32 %v2394, %v2396
        %2433 = vadd.xlane.f32.xlu0 %v2432
        %v2434 = vpop.xlane.xlu0 %2433
        %v2435 = vadd.f32 %v2398, %v2400
        %2436 = vadd.xlane.f32.xlu0 %v2435
        %v2437 = vpop.xlane.xlu0 %2436
        %v2438 = vadd.f32 %v2404, %v2406
        %2439 = vadd.xlane.f32.xlu0 %v2438
        %v2440 = vpop.xlane.xlu0 %2439
        %v2441 = vadd.f32 %v2408, %v2410
        %2442 = vadd.xlane.f32.xlu0 %v2441
        %v2443 = vpop.xlane.xlu0 %2442
        %v2444 = vadd.f32 %v2414, %v2416
        %2445 = vadd.xlane.f32.xlu0 %v2444
        %v2446 = vpop.xlane.xlu0 %2445
        %v2447 = vadd.f32 %v2418, %v2420
        %2448 = vadd.xlane.f32.xlu0 %v2447
        %v2449 = vpop.xlane.xlu0 %2448
        %v2450 = vadd.f32 %v2424, %v2426
        %2451 = vadd.xlane.f32.xlu0 %v2450
        %v2452 = vpop.xlane.xlu0 %2451
        %v2453 = vadd.f32 %v2428, %v2430
        %2454 = vadd.xlane.f32.xlu0 %v2453
        %v2455 = vpop.xlane.xlu0 %2454
        %v2456 = vmul.f32 %v2434, 0.00390625
        %v2457 = vmul.f32 %v2437, 0.00390625
        %v2458 = vmul.f32 %v2440, 0.00390625
        %v2459 = vmul.f32 %v2443, 0.00390625
        %v2460 = vmul.f32 %v2446, 0.00390625
        %v2461 = vmul.f32 %v2449, 0.00390625
        %v2462 = vmul.f32 %v2452, 0.00390625
        %v2463 = vmul.f32 %v2455, 0.00390625
        %v2464 = vld [vmem:[#allocation12] sm:$0xff]
        %v2465 = vld [vmem:[#allocation12 + $0x8] sm:$0xff]
        %v2467 = vsel %vm2346, %v2464, 0
        %v2470 = vsel %vm2346, %v2465, 0
        %2472 = vmatprep.subr.mxu0 %v2456
        %2473 = vmatpush1.msra.mxu0 %v2456
        %2474 = vmatprep.subr.mxu0 %v2457
        %2475 = vmatpush1.msra.mxu0 %v2457
        %2476 = vmatprep.subr.mxu0 %v2458
        %2477 = vmatpush1.msra.mxu0 %v2458
        %2478 = vmatprep.subr.mxu0 %v2459
        %2479 = vmatpush1.msra.mxu0 %v2459
        %2480 = vmatprep.subr.mxu0 %v2460
        %2481 = vmatpush1.msra.mxu0 %v2460
        %2482 = vmatprep.subr.mxu0 %v2461
        %2483 = vmatpush1.msra.mxu0 %v2461
        %2484 = vmatprep.subr.mxu0 %v2462
        %2485 = vmatpush1.msra.mxu0 %v2462
        %2486 = vmatprep.subr.mxu0 %v2463
        %2487 = vmatpush1.msra.mxu0 %v2463
        %2488 = vmatprep.subr.mxu0 0.0
        %2489 = vmatpush1.msra.mxu0 0.0
        %2490 = vmatprep.subr.mxu0 0.0
        %2491 = vmatpush1.msra.mxu0 0.0
        %2492 = vmatprep.subr.mxu0 0.0
        %2493 = vmatpush1.msra.mxu0 0.0
        %2494 = vmatprep.subr.mxu0 0.0
        %2495 = vmatpush1.msra.mxu0 0.0
        %2496 = vmatprep.subr.mxu0 0.0
        %2497 = vmatpush1.msra.mxu0 0.0
        %2498 = vmatprep.subr.mxu0 0.0
        %2499 = vmatpush1.msra.mxu0 0.0
        %2500 = vmatprep.subr.mxu0 0.0
        %2501 = vmatpush1.msra.mxu0 0.0
        %2502 = vmatprep.subr.mxu0 0.0
        %2503 = vmatpush1.msra.mxu0 0.0
        %2504 = vmatprep.subr.mxu0 0.0
        %2505 = vmatpush1.msra.mxu0 0.0
        %2506 = vmatprep.subr.mxu0 0.0
        %2507 = vmatpush1.msra.mxu0 0.0
        %2508 = vmatprep.subr.mxu0 0.0
        %2509 = vmatpush1.msra.mxu0 0.0
        %2510 = vmatprep.subr.mxu0 0.0
        %2511 = vmatpush1.msra.mxu0 0.0
        %2512 = vmatprep.subr.mxu0 0.0
        %2513 = vmatpush1.msra.mxu0 0.0
        %2514 = vmatprep.subr.mxu0 0.0
        %2515 = vmatpush1.msra.mxu0 0.0
        %2516 = vmatprep.subr.mxu0 0.0
        %2517 = vmatpush1.msra.mxu0 0.0
        %2518 = vmatprep.subr.mxu0 0.0
        %2519 = vmatpush1.msra.mxu0 0.0
        %2520 = vmatprep.subr.mxu0 0.0
        %2521 = vmatpush1.msra.mxu0 0.0
        %2522 = vmatprep.subr.mxu0 0.0
        %2523 = vmatpush1.msra.mxu0 0.0
        %2524 = vmatprep.subr.mxu0 0.0
        %2525 = vmatpush1.msra.mxu0 0.0
        %2526 = vmatprep.subr.mxu0 0.0
        %2527 = vmatpush1.msra.mxu0 0.0
        %2528 = vmatprep.subr.mxu0 0.0
        %2529 = vmatpush1.msra.mxu0 0.0
        %2530 = vmatprep.subr.mxu0 0.0
        %2531 = vmatpush1.msra.mxu0 0.0
        %2532 = vmatprep.subr.mxu0 0.0
        %2533 = vmatpush1.msra.mxu0 0.0
        %2534 = vmatprep.subr.mxu0 0.0
        %2535 = vmatpush1.msra.mxu0 0.0
        %2536 = vmatprep.mubr.f32.mxu0 0.0
        %2537 = vmatmul.mubr.f32.gmra.mrb[0].mxu0 %v2467
        %v2538 = vpop.f32.mrb[0].mxu0
        %v2539 = vadd.f32 0.0, %v2538
        %v2540 = vpop.f32.mrb[0].mxu0
        %v2541 = vadd.f32 0.0, %v2540
        %2542 = vmatprep.mubr.f32.mxu0 0.0
        %2543 = vmatmul.mubr.f32.gmra.mrb[0].mxu0 %v2470
        %v2544 = vpop.f32.mrb[0].mxu0
        %v2545 = vadd.f32 0.0, %v2544
        %v2546 = vpop.f32.mrb[0].mxu0
        %v2547 = vadd.f32 0.0, %v2546
        %2548 = vdwg.mxu0
        %v2549 = vmax.f32 %v2539, 0.0
        %v2550 = vmax.f32 %v2541, 0.0
        %v2551 = vmax.f32 %v2545, 0.0
        %v2552 = vmax.f32 %v2547, 0.0
        %v2553 = vld [vmem:[#allocation13] sm:$0xff]
        %v2554 = vld [vmem:[#allocation13 + $0x8] sm:$0xff]
        %v2555 = vld [vmem:[#allocation13 + $0x10] sm:$0xff]
        %v2556 = vld [vmem:[#allocation13 + $0x18] sm:$0xff]
        %v2557 = vld [vmem:[#allocation13 + $0x20] sm:$0xff]
        %v2558 = vld [vmem:[#allocation13 + $0x28] sm:$0xff]
        %v2559 = vld [vmem:[#allocation13 + $0x30] sm:$0xff]
        %v2560 = vld [vmem:[#allocation13 + $0x38] sm:$0xff]
        %v2562 = vsel %vm1104, %v2553, 0
        %v2565 = vsel %vm1104, %v2554, 0
        %v2568 = vsel %vm1104, %v2555, 0
        %v2571 = vsel %vm1104, %v2556, 0
        %v2574 = vsel %vm1104, %v2557, 0
        %v2577 = vsel %vm1104, %v2558, 0
        %v2580 = vsel %vm1104, %v2559, 0
        %v2583 = vsel %vm1104, %v2560, 0
        %2585 = vmatprep.subr.mxu0 %v2550
        %2586 = vmatpush1.msra.mxu0 %v2549
        %2587 = vmatprep.subr.mxu0 %v2552
        %2588 = vmatpush1.msra.mxu0 %v2551
        %2589 = vmatprep.subr.mxu0 0.0
        %2590 = vmatpush1.msra.mxu0 0.0
        %2591 = vmatprep.subr.mxu0 0.0
        %2592 = vmatpush1.msra.mxu0 0.0
        %2593 = vmatprep.subr.mxu0 0.0
        %2594 = vmatpush1.msra.mxu0 0.0
        %2595 = vmatprep.subr.mxu0 0.0
        %2596 = vmatpush1.msra.mxu0 0.0
        %2597 = vmatprep.subr.mxu0 0.0
        %2598 = vmatpush1.msra.mxu0 0.0
        %2599 = vmatprep.subr.mxu0 0.0
        %2600 = vmatpush1.msra.mxu0 0.0
        %2601 = vmatprep.subr.mxu0 0.0
        %2602 = vmatpush1.msra.mxu0 0.0
        %2603 = vmatprep.subr.mxu0 0.0
        %2604 = vmatpush1.msra.mxu0 0.0
        %2605 = vmatprep.subr.mxu0 0.0
        %2606 = vmatpush1.msra.mxu0 0.0
        %2607 = vmatprep.subr.mxu0 0.0
        %2608 = vmatpush1.msra.mxu0 0.0
        %2609 = vmatprep.subr.mxu0 0.0
        %2610 = vmatpush1.msra.mxu0 0.0
        %2611 = vmatprep.subr.mxu0 0.0
        %2612 = vmatpush1.msra.mxu0 0.0
        %2613 = vmatprep.subr.mxu0 0.0
        %2614 = vmatpush1.msra.mxu0 0.0
        %2615 = vmatprep.subr.mxu0 0.0
        %2616 = vmatpush1.msra.mxu0 0.0
        %2617 = vmatprep.subr.mxu0 0.0
        %2618 = vmatpush1.msra.mxu0 0.0
        %2619 = vmatprep.subr.mxu0 0.0
        %2620 = vmatpush1.msra.mxu0 0.0
        %2621 = vmatprep.subr.mxu0 0.0
        %2622 = vmatpush1.msra.mxu0 0.0
        %2623 = vmatprep.subr.mxu0 0.0
        %2624 = vmatpush1.msra.mxu0 0.0
        %2625 = vmatprep.subr.mxu0 0.0
        %2626 = vmatpush1.msra.mxu0 0.0
        %2627 = vmatprep.subr.mxu0 0.0
        %2628 = vmatpush1.msra.mxu0 0.0
        %2629 = vmatprep.subr.mxu0 0.0
        %2630 = vmatpush1.msra.mxu0 0.0
        %2631 = vmatprep.subr.mxu0 0.0
        %2632 = vmatpush1.msra.mxu0 0.0
        %2633 = vmatprep.subr.mxu0 0.0
        %2634 = vmatpush1.msra.mxu0 0.0
        %2635 = vmatprep.subr.mxu0 0.0
        %2636 = vmatpush1.msra.mxu0 0.0
        %2637 = vmatprep.subr.mxu0 0.0
        %2638 = vmatpush1.msra.mxu0 0.0
        %2639 = vmatprep.subr.mxu0 0.0
        %2640 = vmatpush1.msra.mxu0 0.0
        %2641 = vmatprep.subr.mxu0 0.0
        %2642 = vmatpush1.msra.mxu0 0.0
        %2643 = vmatprep.subr.mxu0 0.0
        %2644 = vmatpush1.msra.mxu0 0.0
        %2645 = vmatprep.subr.mxu0 0.0
        %2646 = vmatpush1.msra.mxu0 0.0
        %2647 = vmatprep.subr.mxu0 0.0
        %2648 = vmatpush1.msra.mxu0 0.0
        %2649 = vmatprep.mubr.f32.mxu0 0.0
        %2650 = vmatmul.mubr.f32.gmra.mrb[0].mxu0 %v2562
        %v2651 = vpop.f32.mrb[0].mxu0
        %v2652 = vadd.f32 3.0, %v2651
        %v2653 = vpop.f32.mrb[0].mxu0
        %v2654 = vadd.f32 3.0, %v2653
        %2655 = vmatprep.mubr.f32.mxu0 0.0
        %2656 = vmatmul.mubr.f32.gmra.mrb[0].mxu0 %v2565
        %v2657 = vpop.f32.mrb[0].mxu0
        %v2658 = vadd.f32 3.0, %v2657
        %v2659 = vpop.f32.mrb[0].mxu0
        %v2660 = vadd.f32 3.0, %v2659
        %2661 = vmatprep.mubr.f32.mxu0 0.0
        %2662 = vmatmul.mubr.f32.gmra.mrb[0].mxu0 %v2568
        %v2663 = vpop.f32.mrb[0].mxu0
        %v2664 = vadd.f32 3.0, %v2663
        %v2665 = vpop.f32.mrb[0].mxu0
        %v2666 = vadd.f32 3.0, %v2665
        %2667 = vmatprep.mubr.f32.mxu0 0.0
        %2668 = vmatmul.mubr.f32.gmra.mrb[0].mxu0 %v2571
        %v2669 = vpop.f32.mrb[0].mxu0
        %v2670 = vadd.f32 3.0, %v2669
        %v2671 = vpop.f32.mrb[0].mxu0
        %v2672 = vadd.f32 3.0, %v2671
        %2673 = vmatprep.mubr.f32.mxu0 0.0
        %2674 = vmatmul.mubr.f32.gmra.mrb[0].mxu0 %v2574
        %v2675 = vpop.f32.mrb[0].mxu0
        %v2676 = vadd.f32 3.0, %v2675
        %v2677 = vpop.f32.mrb[0].mxu0
        %v2678 = vadd.f32 3.0, %v2677
        %2679 = vmatprep.mubr.f32.mxu0 0.0
        %2680 = vmatmul.mubr.f32.gmra.mrb[0].mxu0 %v2577
        %v2681 = vpop.f32.mrb[0].mxu0
        %v2682 = vadd.f32 3.0, %v2681
        %v2683 = vpop.f32.mrb[0].mxu0
        %v2684 = vadd.f32 3.0, %v2683
        %2685 = vmatprep.mubr.f32.mxu0 0.0
        %2686 = vmatmul.mubr.f32.gmra.mrb[0].mxu0 %v2580
        %v2687 = vpop.f32.mrb[0].mxu0
        %v2688 = vadd.f32 3.0, %v2687
        %v2689 = vpop.f32.mrb[0].mxu0
        %v2690 = vadd.f32 3.0, %v2689
        %2691 = vmatprep.mubr.f32.mxu0 0.0
        %2692 = vmatmul.mubr.f32.gmra.mrb[0].mxu0 %v2583
        %v2693 = vpop.f32.mrb[0].mxu0
        %v2694 = vadd.f32 3.0, %v2693
        %v2695 = vpop.f32.mrb[0].mxu0
        %v2696 = vadd.f32 3.0, %v2695
        %2697 = vdwg.mxu0
        %v2698 = vmax.f32 %v2652, 0.0
        %v2699 = vmax.f32 %v2654, 0.0
        %v2700 = vmax.f32 %v2658, 0.0
        %v2701 = vmax.f32 %v2660, 0.0
        %v2702 = vmax.f32 %v2664, 0.0
        %v2703 = vmax.f32 %v2666, 0.0
        %v2704 = vmax.f32 %v2670, 0.0
        %v2705 = vmax.f32 %v2672, 0.0
        %v2706 = vmax.f32 %v2676, 0.0
        %v2707 = vmax.f32 %v2678, 0.0
        %v2708 = vmax.f32 %v2682, 0.0
        %v2709 = vmax.f32 %v2684, 0.0
        %v2710 = vmax.f32 %v2688, 0.0
        %v2711 = vmax.f32 %v2690, 0.0
        %v2712 = vmax.f32 %v2694, 0.0
        %v2713 = vmax.f32 %v2696, 0.0
        %v2714 = vmin.f32 %v2698, 6.0
        %v2715 = vmin.f32 %v2699, 6.0
        %v2716 = vmin.f32 %v2700, 6.0
        %v2717 = vmin.f32 %v2701, 6.0
        %v2718 = vmin.f32 %v2702, 6.0
        %v2719 = vmin.f32 %v2703, 6.0
        %v2720 = vmin.f32 %v2704, 6.0
        %v2721 = vmin.f32 %v2705, 6.0
        %v2722 = vmin.f32 %v2706, 6.0
        %v2723 = vmin.f32 %v2707, 6.0
        %v2724 = vmin.f32 %v2708, 6.0
        %v2725 = vmin.f32 %v2709, 6.0
        %v2726 = vmin.f32 %v2710, 6.0
        %v2727 = vmin.f32 %v2711, 6.0
        %v2728 = vmin.f32 %v2712, 6.0
        %v2729 = vmin.f32 %v2713, 6.0
        %v2730 = vmul.f32 %v2714, 0.16666667
        %v2731 = vmul.f32 %v2715, 0.16666667
        %v2732 = vmul.f32 %v2716, 0.16666667
        %v2733 = vmul.f32 %v2717, 0.16666667
        %v2734 = vmul.f32 %v2718, 0.16666667
        %v2735 = vmul.f32 %v2719, 0.16666667
        %v2736 = vmul.f32 %v2720, 0.16666667
        %v2737 = vmul.f32 %v2721, 0.16666667
        %v2738 = vmul.f32 %v2722, 0.16666667
        %v2739 = vmul.f32 %v2723, 0.16666667
        %v2740 = vmul.f32 %v2724, 0.16666667
        %v2741 = vmul.f32 %v2725, 0.16666667
        %v2742 = vmul.f32 %v2726, 0.16666667
        %v2743 = vmul.f32 %v2727, 0.16666667
        %v2744 = vmul.f32 %v2728, 0.16666667
        %v2745 = vmul.f32 %v2729, 0.16666667
        %v2746 = vmul.f32 %v2394, %v2730
        %v2747 = vmul.f32 %v2396, %v2731
        %v2748 = vmul.f32 %v2398, %v2732
        %v2749 = vmul.f32 %v2400, %v2733
        %v2750 = vmul.f32 %v2404, %v2734
        %v2751 = vmul.f32 %v2406, %v2735
        %v2752 = vmul.f32 %v2408, %v2736
        %v2753 = vmul.f32 %v2410, %v2737
        %v2754 = vmul.f32 %v2414, %v2738
        %v2755 = vmul.f32 %v2416, %v2739
        %v2756 = vmul.f32 %v2418, %v2740
        %v2757 = vmul.f32 %v2420, %v2741
        %v2758 = vmul.f32 %v2424, %v2742
        %v2759 = vmul.f32 %v2426, %v2743
        %v2760 = vmul.f32 %v2428, %v2744
        %v2761 = vmul.f32 %v2430, %v2745
        %v2762 = vld [vmem:[%s9] sm:$0xff]
        %v2763 = vld [vmem:[%s9 + $0x8] sm:$0xff]
        %v2764 = vld [vmem:[%s9 + $0x10] sm:$0xff]
        %v2765 = vld [vmem:[%s9 + $0x18] sm:$0xff]
        %v2766 = vld [vmem:[%s9 + $0x20] sm:$0xff]
        %v2767 = vld [vmem:[%s9 + $0x28] sm:$0xff]
        %v2768 = vld [vmem:[%s9 + $0x30] sm:$0xff]
        %v2769 = vld [vmem:[%s9 + $0x38] sm:$0xff]
        %v2770 = vpack.c.bf16 %v2763, %v2762
        %v2771 = vpack.c.bf16 %v2765, %v2764
        %v2772 = vpack.c.bf16 %v2767, %v2766
        %v2773 = vpack.c.bf16 %v2769, %v2768
        %v2775 = vsel %vm1104, %v2770, 0
        %v2778 = vsel %vm1104, %v2771, 0
        %v2781 = vsel %vm1104, %v2772, 0
        %v2784 = vsel %vm1104, %v2773, 0
        %2786 = vmatprep.subr.bf16.mxu0 %v1103
        %2787 = vmatpush1.bf16.msra.mxu0 %v1102
        %2788 = vmatprep.subr.bf16.mxu0 0
        %2789 = vmatpush1.bf16.msra.mxu0 0
        %2790 = vmatprep.subr.bf16.mxu0 0
        %2791 = vmatpush1.bf16.msra.mxu0 0
        %2792 = vmatprep.subr.bf16.mxu0 0
        %2793 = vmatpush1.bf16.msra.mxu0 0
        %2794 = vmatprep.subr.bf16.mxu0 0
        %2795 = vmatpush1.bf16.msra.mxu0 0
        %2796 = vmatprep.subr.bf16.mxu0 0
        %2797 = vmatpush1.bf16.msra.mxu0 0
        %2798 = vmatprep.subr.bf16.mxu0 0
        %2799 = vmatpush1.bf16.msra.mxu0 0
        %2800 = vmatprep.subr.bf16.mxu0 0
        %2801 = vmatpush1.bf16.msra.mxu0 0
        %2802 = vmatprep.subr.bf16.mxu0 0
        %2803 = vmatpush1.bf16.msra.mxu0 0
        %2804 = vmatprep.subr.bf16.mxu0 0
        %2805 = vmatpush1.bf16.msra.mxu0 0
        %2806 = vmatprep.subr.bf16.mxu0 0
        %2807 = vmatpush1.bf16.msra.mxu0 0
        %2808 = vmatprep.subr.bf16.mxu0 0
        %2809 = vmatpush1.bf16.msra.mxu0 0
        %2810 = vmatprep.subr.bf16.mxu0 0
        %2811 = vmatpush1.bf16.msra.mxu0 0
        %2812 = vmatprep.subr.bf16.mxu0 0
        %2813 = vmatpush1.bf16.msra.mxu0 0
        %2814 = vmatprep.subr.bf16.mxu0 0
        %2815 = vmatpush1.bf16.msra.mxu0 0
        %2816 = vmatprep.subr.bf16.mxu0 0
        %2817 = vmatpush1.bf16.msra.mxu0 0
        %2818 = vmatprep.mubr.bf16.mxu0 0
        %2819 = vmatmul.mubr.bf16.gmra.mrb[0].mxu0 %v2775
        %v2820 = vpop.f32.mrb[0].mxu0
        %v2821 = vadd.f32 0.0, %v2820
        %v2822 = vpop.f32.mrb[0].mxu0
        %v2823 = vadd.f32 0.0, %v2822
        %v2824 = vpop.f32.mrb[0].mxu0
        %v2825 = vadd.f32 0.0, %v2824
        %v2826 = vpop.f32.mrb[0].mxu0
        %v2827 = vadd.f32 0.0, %v2826
        %2828 = vmatprep.mubr.bf16.mxu0 0
        %2829 = vmatmul.mubr.bf16.gmra.mrb[0].mxu0 %v2778
        %v2830 = vpop.f32.mrb[0].mxu0
        %v2831 = vadd.f32 0.0, %v2830
        %v2832 = vpop.f32.mrb[0].mxu0
        %v2833 = vadd.f32 0.0, %v2832
        %v2834 = vpop.f32.mrb[0].mxu0
        %v2835 = vadd.f32 0.0, %v2834
        %v2836 = vpop.f32.mrb[0].mxu0
        %v2837 = vadd.f32 0.0, %v2836
        %2838 = vmatprep.mubr.bf16.mxu0 0
        %2839 = vmatmul.mubr.bf16.gmra.mrb[0].mxu0 %v2781
        %v2840 = vpop.f32.mrb[0].mxu0
        %v2841 = vadd.f32 0.0, %v2840
        %v2842 = vpop.f32.mrb[0].mxu0
        %v2843 = vadd.f32 0.0, %v2842
        %v2844 = vpop.f32.mrb[0].mxu0
        %v2845 = vadd.f32 0.0, %v2844
        %v2846 = vpop.f32.mrb[0].mxu0
        %v2847 = vadd.f32 0.0, %v2846
        %2848 = vmatprep.mubr.bf16.mxu0 0
        %2849 = vmatmul.mubr.bf16.gmra.mrb[0].mxu0 %v2784
        %v2850 = vpop.f32.mrb[0].mxu0
        %v2851 = vadd.f32 0.0, %v2850
        %v2852 = vpop.f32.mrb[0].mxu0
        %v2853 = vadd.f32 0.0, %v2852
        %v2854 = vpop.f32.mrb[0].mxu0
        %v2855 = vadd.f32 0.0, %v2854
        %v2856 = vpop.f32.mrb[0].mxu0
        %v2857 = vadd.f32 0.0, %v2856
        %2858 = vdwg.mxu0
        %v2859 = vadd.f32 %v2746, %v2821
        %v2860 = vadd.f32 %v2747, %v2823
        %v2861 = vadd.f32 %v2748, %v2825
        %v2862 = vadd.f32 %v2749, %v2827
        %v2863 = vadd.f32 %v2750, %v2831
        %v2864 = vadd.f32 %v2751, %v2833
        %v2865 = vadd.f32 %v2752, %v2835
        %v2866 = vadd.f32 %v2753, %v2837
        %v2867 = vadd.f32 %v2754, %v2841
        %v2868 = vadd.f32 %v2755, %v2843
        %v2869 = vadd.f32 %v2756, %v2845
        %v2870 = vadd.f32 %v2757, %v2847
        %v2871 = vadd.f32 %v2758, %v2851
        %v2872 = vadd.f32 %v2759, %v2853
        %v2873 = vadd.f32 %v2760, %v2855
        %v2874 = vadd.f32 %v2761, %v2857
        %v2875 = vld [vmem:[#allocation15] sm:$0xff]
        %v2876 = vld [vmem:[#allocation15 + $0x8] sm:$0xff]
        %v2877 = vld [vmem:[#allocation15 + $0x10] sm:$0xff]
        %v2878 = vld [vmem:[#allocation15 + $0x18] sm:$0xff]
        %v2879 = vpack.c.bf16 %v2876, %v2875
        %v2880 = vpack.c.bf16 %v2878, %v2877
        %v2881 = vpack.c.bf16 %v2861, %v2859
        %v2882 = vpack.c.bf16 %v2862, %v2860
        %v2883 = vpack.c.bf16 %v2865, %v2863
        %v2884 = vpack.c.bf16 %v2866, %v2864
        %v2885 = vpack.c.bf16 %v2869, %v2867
        %v2886 = vpack.c.bf16 %v2870, %v2868
        %v2887 = vpack.c.bf16 %v2873, %v2871
        %v2888 = vpack.c.bf16 %v2874, %v2872
        %v2890 = vsel %vm2346, %v2879, 0
        %v2893 = vsel %vm2346, %v2880, 0
        %2895 = vmatprep.subr.bf16.mxu0 %v2882
        %2896 = vmatpush1.bf16.msra.mxu0 %v2881
        %2897 = vmatprep.subr.bf16.mxu0 %v2884
        %2898 = vmatpush1.bf16.msra.mxu0 %v2883
        %2899 = vmatprep.subr.bf16.mxu0 %v2886
        %2900 = vmatpush1.bf16.msra.mxu0 %v2885
        %2901 = vmatprep.subr.bf16.mxu0 %v2888
        %2902 = vmatpush1.bf16.msra.mxu0 %v2887
        %2903 = vmatprep.subr.bf16.mxu0 0
        %2904 = vmatpush1.bf16.msra.mxu0 0
        %2905 = vmatprep.subr.bf16.mxu0 0
        %2906 = vmatpush1.bf16.msra.mxu0 0
        %2907 = vmatprep.subr.bf16.mxu0 0
        %2908 = vmatpush1.bf16.msra.mxu0 0
        %2909 = vmatprep.subr.bf16.mxu0 0
        %2910 = vmatpush1.bf16.msra.mxu0 0
        %2911 = vmatprep.subr.bf16.mxu0 0
        %2912 = vmatpush1.bf16.msra.mxu0 0
        %2913 = vmatprep.subr.bf16.mxu0 0
        %2914 = vmatpush1.bf16.msra.mxu0 0
        %2915 = vmatprep.subr.bf16.mxu0 0
        %2916 = vmatpush1.bf16.msra.mxu0 0
        %2917 = vmatprep.subr.bf16.mxu0 0
        %2918 = vmatpush1.bf16.msra.mxu0 0
        %2919 = vmatprep.subr.bf16.mxu0 0
        %2920 = vmatpush1.bf16.msra.mxu0 0
        %2921 = vmatprep.subr.bf16.mxu0 0
        %2922 = vmatpush1.bf16.msra.mxu0 0
        %2923 = vmatprep.subr.bf16.mxu0 0
        %2924 = vmatpush1.bf16.msra.mxu0 0
        %2925 = vmatprep.subr.bf16.mxu0 0
        %2926 = vmatpush1.bf16.msra.mxu0 0
        %2927 = vmatprep.mubr.bf16.mxu0 0
        %2928 = vmatmul.mubr.bf16.gmra.mrb[0].mxu0 %v2890
        %v2929 = vpop.f32.mrb[0].mxu0
        %v2930 = vadd.f32 0.0, %v2929
        %v2931 = vpop.f32.mrb[0].mxu0
        %v2932 = vadd.f32 0.0, %v2931
        %v2933 = vpop.f32.mrb[0].mxu0
        %v2934 = vadd.f32 0.0, %v2933
        %v2935 = vpop.f32.mrb[0].mxu0
        %v2936 = vadd.f32 0.0, %v2935
        %2937 = vmatprep.mubr.bf16.mxu0 0
        %2938 = vmatmul.mubr.bf16.gmra.mrb[0].mxu0 %v2893
        %v2939 = vpop.f32.mrb[0].mxu0
        %v2940 = vadd.f32 0.0, %v2939
        %v2941 = vpop.f32.mrb[0].mxu0
        %v2942 = vadd.f32 0.0, %v2941
        %v2943 = vpop.f32.mrb[0].mxu0
        %v2944 = vadd.f32 0.0, %v2943
        %v2945 = vpop.f32.mrb[0].mxu0
        %v2946 = vadd.f32 0.0, %v2945
        %2947 = vdwg.mxu0
        %v2948 = vmax.f32 %v2930, 0.0
        %v2949 = vmax.f32 %v2932, 0.0
        %v2950 = vmax.f32 %v2934, 0.0
        %v2951 = vmax.f32 %v2936, 0.0
        %v2952 = vmax.f32 %v2940, 0.0
        %v2953 = vmax.f32 %v2942, 0.0
        %v2954 = vmax.f32 %v2944, 0.0
        %v2955 = vmax.f32 %v2946, 0.0
        %2956 = vrot.lane.b32.xlu0 %v2948, 34
        %v2957 = vpop.permute.xlu0 %2956
        %2958 = vrot.lane.b32.xlu0 %v2950, 34
        %v2959 = vpop.permute.xlu0 %2958
        %2960 = vrot.lane.b32.xlu0 %v2952, 34
        %v2961 = vpop.permute.xlu0 %2960
        %2962 = vrot.lane.b32.xlu0 %v2954, 34
        %v2963 = vpop.permute.xlu0 %2962
        %2964 = vrot.lane.b32.xlu0 %v2949, 34
        %v2965 = vpop.permute.xlu0 %2964
        %2966 = vrot.lane.b32.xlu0 %v2951, 34
        %v2967 = vpop.permute.xlu0 %2966
        %2968 = vrot.lane.b32.xlu0 %v2953, 34
        %v2969 = vpop.permute.xlu0 %2968
        %2970 = vrot.lane.b32.xlu0 %v2955, 34
        %v2971 = vpop.permute.xlu0 %2970
        %vm2972 = vcmp.lt.s32.totalorder %v766, 34
        %v2973 = vsel %vm2972, %v2957, %v2965
        %v2974 = vsel %vm2972, %v2959, %v2967
        %v2975 = vsel %vm2972, %v2961, %v2969
        %v2976 = vsel %vm2972, %v2963, %v2971
        %v2977 = vsel %vm2972, %v2965, %v2957
        %v2978 = vsel %vm2972, %v2967, %v2959
        %v2979 = vsel %vm2972, %v2969, %v2961
        %v2980 = vsel %vm2972, %v2971, %v2963
        %v2981 = vld [vmem:[#allocation4] ss:$8 sm:$0x3]
        %v2983 = vlaneseq
        %v2984 = vshrl.u32 %v2983, 7
        %v2985 = vsub.s32 0, %v2984
        %v2986 = vrot.slane %v2981, %v2985
        %v2987 = vlaneseq
        %v2988 = vshrl.u32 %v2987, 7
        %v2989 = vsub.s32 1, %v2988
        %v2990 = vrot.slane %v2981, %v2989
        %v2993 = vmul.f32 %v2977, %v2986
        %v2994 = vmul.f32 %v2973, %v2990
        %v2995 = vmul.f32 %v2978, %v2986
        %v2996 = vmul.f32 %v2974, %v2990
        %v2997 = vmul.f32 %v2979, %v2986
        %v2998 = vmul.f32 %v2975, %v2990
        %v2999 = vmul.f32 %v2980, %v2986
        %v3000 = vmul.f32 %v2976, %v2990
        %v3001 = vld [vmem:[#allocation16] sm:$0xff]
        %v3002 = vld [vmem:[#allocation16 + $0x8] sm:$0xff]
        %v3003 = vld [vmem:[#allocation16 + $0x10] sm:$0xff]
        %v3004 = vld [vmem:[#allocation16 + $0x18] sm:$0xff]
        %3006 = vset.pattern.permute.xlu0 0
        %3007 = vperm.xlu0 %3006, %v3001
        %v3008 = vpop.permute.xlu0 %3007
        %3011 = vset.pattern.permute.xlu0 0
        %3012 = vperm.xlu0 %3011, %v3002
        %v3013 = vpop.permute.xlu0 %3012
        %3016 = vset.pattern.permute.xlu0 0
        %3017 = vperm.xlu0 %3016, %v3003
        %v3018 = vpop.permute.xlu0 %3017
        %3021 = vset.pattern.permute.xlu0 0
        %3022 = vperm.xlu0 %3021, %v3004
        %v3023 = vpop.permute.xlu0 %3022
        %v3025 = vmul.f32 %v3008, %v2993
        %v3026 = vmul.f32 %v3008, %v2994
        %v3027 = vmul.f32 %v3013, %v2995
        %v3028 = vmul.f32 %v3013, %v2996
        %v3029 = vmul.f32 %v3018, %v2997
        %v3030 = vmul.f32 %v3018, %v2998
        %v3031 = vmul.f32 %v3023, %v2999
        %v3032 = vmul.f32 %v3023, %v3000
        %v3033 = vadd.f32 %v3025, 0.0
        %v3034 = vadd.f32 %v3026, 0.0
        %v3035 = vadd.f32 %v3027, 0.0
        %v3036 = vadd.f32 %v3028, 0.0
        %v3037 = vadd.f32 %v3029, 0.0
        %v3038 = vadd.f32 %v3030, 0.0
        %v3039 = vadd.f32 %v3031, 0.0
        %v3040 = vadd.f32 %v3032, 0.0
        %3041 = vrot.lane.b32.xlu0 %v2948, 33
        %v3042 = vpop.permute.xlu0 %3041
        %3043 = vrot.lane.b32.xlu0 %v2950, 33
        %v3044 = vpop.permute.xlu0 %3043
        %3045 = vrot.lane.b32.xlu0 %v2952, 33
        %v3046 = vpop.permute.xlu0 %3045
        %3047 = vrot.lane.b32.xlu0 %v2954, 33
        %v3048 = vpop.permute.xlu0 %3047
        %3049 = vrot.lane.b32.xlu0 %v2949, 33
        %v3050 = vpop.permute.xlu0 %3049
        %3051 = vrot.lane.b32.xlu0 %v2951, 33
        %v3052 = vpop.permute.xlu0 %3051
        %3053 = vrot.lane.b32.xlu0 %v2953, 33
        %v3054 = vpop.permute.xlu0 %3053
        %3055 = vrot.lane.b32.xlu0 %v2955, 33
        %v3056 = vpop.permute.xlu0 %3055
        %vm3057 = vcmp.lt.s32.totalorder %v766, 33
        %v3058 = vsel %vm3057, %v3042, %v3050
        %v3059 = vsel %vm3057, %v3044, %v3052
        %v3060 = vsel %vm3057, %v3046, %v3054
        %v3061 = vsel %vm3057, %v3048, %v3056
        %v3062 = vsel %vm3057, %v3050, %v3042
        %v3063 = vsel %vm3057, %v3052, %v3044
        %v3064 = vsel %vm3057, %v3054, %v3046
        %v3065 = vsel %vm3057, %v3056, %v3048
        %s3066 = scalar_lea.vmem [#allocation4], 1
        %v3067 = vld [vmem:[%s3066] ss:$8 sm:$0x3]
        %v3069 = vlaneseq
        %v3070 = vshrl.u32 %v3069, 7
        %v3071 = vsub.s32 0, %v3070
        %v3072 = vrot.slane %v3067, %v3071
        %v3073 = vlaneseq
        %v3074 = vshrl.u32 %v3073, 7
        %v3075 = vsub.s32 1, %v3074
        %v3076 = vrot.slane %v3067, %v3075
        %v3079 = vmul.f32 %v3062, %v3072
        %v3080 = vmul.f32 %v3058, %v3076
        %v3081 = vmul.f32 %v3063, %v3072
        %v3082 = vmul.f32 %v3059, %v3076
        %v3083 = vmul.f32 %v3064, %v3072
        %v3084 = vmul.f32 %v3060, %v3076
        %v3085 = vmul.f32 %v3065, %v3072
        %v3086 = vmul.f32 %v3061, %v3076
        %3087 = vset.pattern.permute.xlu0 1
        %3088 = vperm.xlu0 %3087, %v3001
        %v3089 = vpop.permute.xlu0 %3088
        %3091 = vset.pattern.permute.xlu0 1
        %3092 = vperm.xlu0 %3091, %v3002
        %v3093 = vpop.permute.xlu0 %3092
        %3095 = vset.pattern.permute.xlu0 1
        %3096 = vperm.xlu0 %3095, %v3003
        %v3097 = vpop.permute.xlu0 %3096
        %3099 = vset.pattern.permute.xlu0 1
        %3100 = vperm.xlu0 %3099, %v3004
        %v3101 = vpop.permute.xlu0 %3100
        %v3103 = vmul.f32 %v3089, %v3079
        %v3104 = vmul.f32 %v3089, %v3080
        %v3105 = vmul.f32 %v3093, %v3081
        %v3106 = vmul.f32 %v3093, %v3082
        %v3107 = vmul.f32 %v3097, %v3083
        %v3108 = vmul.f32 %v3097, %v3084
        %v3109 = vmul.f32 %v3101, %v3085
        %v3110 = vmul.f32 %v3101, %v3086
        %v3111 = vadd.f32 %v3033, %v3103
        %v3112 = vadd.f32 %v3034, %v3104
        %v3113 = vadd.f32 %v3035, %v3105
        %v3114 = vadd.f32 %v3036, %v3106
        %v3115 = vadd.f32 %v3037, %v3107
        %v3116 = vadd.f32 %v3038, %v3108
        %v3117 = vadd.f32 %v3039, %v3109
        %v3118 = vadd.f32 %v3040, %v3110
        %3119 = vrot.lane.b32.xlu0 %v2948, 32
        %v3120 = vpop.permute.xlu0 %3119
        %3121 = vrot.lane.b32.xlu0 %v2950, 32
        %v3122 = vpop.permute.xlu0 %3121
        %3123 = vrot.lane.b32.xlu0 %v2952, 32
        %v3124 = vpop.permute.xlu0 %3123
        %3125 = vrot.lane.b32.xlu0 %v2954, 32
        %v3126 = vpop.permute.xlu0 %3125
        %3127 = vrot.lane.b32.xlu0 %v2949, 32
        %v3128 = vpop.permute.xlu0 %3127
        %3129 = vrot.lane.b32.xlu0 %v2951, 32
        %v3130 = vpop.permute.xlu0 %3129
        %3131 = vrot.lane.b32.xlu0 %v2953, 32
        %v3132 = vpop.permute.xlu0 %3131
        %3133 = vrot.lane.b32.xlu0 %v2955, 32
        %v3134 = vpop.permute.xlu0 %3133
        %vm3135 = vcmp.lt.s32.totalorder %v766, 32
        %v3136 = vsel %vm3135, %v3120, %v3128
        %v3137 = vsel %vm3135, %v3122, %v3130
        %v3138 = vsel %vm3135, %v3124, %v3132
        %v3139 = vsel %vm3135, %v3126, %v3134
        %v3140 = vsel %vm3135, %v3128, %v3120
        %v3141 = vsel %vm3135, %v3130, %v3122
        %v3142 = vsel %vm3135, %v3132, %v3124
        %v3143 = vsel %vm3135, %v3134, %v3126
        %s3144 = scalar_lea.vmem [#allocation4], 2
        %v3145 = vld [vmem:[%s3144] ss:$8 sm:$0x3]
        %v3147 = vlaneseq
        %v3148 = vshrl.u32 %v3147, 7
        %v3149 = vsub.s32 0, %v3148
        %v3150 = vrot.slane %v3145, %v3149
        %v3151 = vlaneseq
        %v3152 = vshrl.u32 %v3151, 7
        %v3153 = vsub.s32 1, %v3152
        %v3154 = vrot.slane %v3145, %v3153
        %v3157 = vmul.f32 %v3140, %v3150
        %v3158 = vmul.f32 %v3136, %v3154
        %v3159 = vmul.f32 %v3141, %v3150
        %v3160 = vmul.f32 %v3137, %v3154
        %v3161 = vmul.f32 %v3142, %v3150
        %v3162 = vmul.f32 %v3138, %v3154
        %v3163 = vmul.f32 %v3143, %v3150
        %v3164 = vmul.f32 %v3139, %v3154
        %3165 = vset.pattern.permute.xlu0 2
        %3166 = vperm.xlu0 %3165, %v3001
        %v3167 = vpop.permute.xlu0 %3166
        %3169 = vset.pattern.permute.xlu0 2
        %3170 = vperm.xlu0 %3169, %v3002
        %v3171 = vpop.permute.xlu0 %3170
        %3173 = vset.pattern.permute.xlu0 2
        %3174 = vperm.xlu0 %3173, %v3003
        %v3175 = vpop.permute.xlu0 %3174
        %3177 = vset.pattern.permute.xlu0 2
        %3178 = vperm.xlu0 %3177, %v3004
        %v3179 = vpop.permute.xlu0 %3178
        %v3181 = vmul.f32 %v3167, %v3157
        %v3182 = vmul.f32 %v3167, %v3158
        %v3183 = vmul.f32 %v3171, %v3159
        %v3184 = vmul.f32 %v3171, %v3160
        %v3185 = vmul.f32 %v3175, %v3161
        %v3186 = vmul.f32 %v3175, %v3162
        %v3187 = vmul.f32 %v3179, %v3163
        %v3188 = vmul.f32 %v3179, %v3164
        %v3189 = vadd.f32 %v3111, %v3181
        %v3190 = vadd.f32 %v3112, %v3182
        %v3191 = vadd.f32 %v3113, %v3183
        %v3192 = vadd.f32 %v3114, %v3184
        %v3193 = vadd.f32 %v3115, %v3185
        %v3194 = vadd.f32 %v3116, %v3186
        %v3195 = vadd.f32 %v3117, %v3187
        %v3196 = vadd.f32 %v3118, %v3188
        %3197 = vrot.lane.b32.xlu0 %v2948, 31
        %v3198 = vpop.permute.xlu0 %3197
        %3199 = vrot.lane.b32.xlu0 %v2950, 31
        %v3200 = vpop.permute.xlu0 %3199
        %3201 = vrot.lane.b32.xlu0 %v2952, 31
        %v3202 = vpop.permute.xlu0 %3201
        %3203 = vrot.lane.b32.xlu0 %v2954, 31
        %v3204 = vpop.permute.xlu0 %3203
        %3205 = vrot.lane.b32.xlu0 %v2949, 31
        %v3206 = vpop.permute.xlu0 %3205
        %3207 = vrot.lane.b32.xlu0 %v2951, 31
        %v3208 = vpop.permute.xlu0 %3207
        %3209 = vrot.lane.b32.xlu0 %v2953, 31
        %v3210 = vpop.permute.xlu0 %3209
        %3211 = vrot.lane.b32.xlu0 %v2955, 31
        %v3212 = vpop.permute.xlu0 %3211
        %vm3213 = vcmp.lt.s32.totalorder %v766, 31
        %v3214 = vsel %vm3213, %v3198, %v3206
        %v3215 = vsel %vm3213, %v3200, %v3208
        %v3216 = vsel %vm3213, %v3202, %v3210
        %v3217 = vsel %vm3213, %v3204, %v3212
        %v3218 = vsel %vm3213, %v3206, %v3198
        %v3219 = vsel %vm3213, %v3208, %v3200
        %v3220 = vsel %vm3213, %v3210, %v3202
        %v3221 = vsel %vm3213, %v3212, %v3204
        %s3222 = scalar_lea.vmem [#allocation4], 3
        %v3223 = vld [vmem:[%s3222] ss:$8 sm:$0x3]
        %v3225 = vlaneseq
        %v3226 = vshrl.u32 %v3225, 7
        %v3227 = vsub.s32 0, %v3226
        %v3228 = vrot.slane %v3223, %v3227
        %v3229 = vlaneseq
        %v3230 = vshrl.u32 %v3229, 7
        %v3231 = vsub.s32 1, %v3230
        %v3232 = vrot.slane %v3223, %v3231
        %v3235 = vmul.f32 %v3218, %v3228
        %v3236 = vmul.f32 %v3214, %v3232
        %v3237 = vmul.f32 %v3219, %v3228
        %v3238 = vmul.f32 %v3215, %v3232
        %v3239 = vmul.f32 %v3220, %v3228
        %v3240 = vmul.f32 %v3216, %v3232
        %v3241 = vmul.f32 %v3221, %v3228
        %v3242 = vmul.f32 %v3217, %v3232
        %3243 = vset.pattern.permute.xlu0 3
        %3244 = vperm.xlu0 %3243, %v3001
        %v3245 = vpop.permute.xlu0 %3244
        %3247 = vset.pattern.permute.xlu0 3
        %3248 = vperm.xlu0 %3247, %v3002
        %v3249 = vpop.permute.xlu0 %3248
        %3251 = vset.pattern.permute.xlu0 3
        %3252 = vperm.xlu0 %3251, %v3003
        %v3253 = vpop.permute.xlu0 %3252
        %3255 = vset.pattern.permute.xlu0 3
        %3256 = vperm.xlu0 %3255, %v3004
        %v3257 = vpop.permute.xlu0 %3256
        %v3259 = vmul.f32 %v3245, %v3235
        %v3260 = vmul.f32 %v3245, %v3236
        %v3261 = vmul.f32 %v3249, %v3237
        %v3262 = vmul.f32 %v3249, %v3238
        %v3263 = vmul.f32 %v3253, %v3239
        %v3264 = vmul.f32 %v3253, %v3240
        %v3265 = vmul.f32 %v3257, %v3241
        %v3266 = vmul.f32 %v3257, %v3242
        %v3267 = vadd.f32 %v3189, %v3259
        %v3268 = vadd.f32 %v3190, %v3260
        %v3269 = vadd.f32 %v3191, %v3261
        %v3270 = vadd.f32 %v3192, %v3262
        %v3271 = vadd.f32 %v3193, %v3263
        %v3272 = vadd.f32 %v3194, %v3264
        %v3273 = vadd.f32 %v3195, %v3265
        %v3274 = vadd.f32 %v3196, %v3266
        %3275 = vrot.lane.b32.xlu0 %v2948, 30
        %v3276 = vpop.permute.xlu0 %3275
        %3277 = vrot.lane.b32.xlu0 %v2950, 30
        %v3278 = vpop.permute.xlu0 %3277
        %3279 = vrot.lane.b32.xlu0 %v2952, 30
        %v3280 = vpop.permute.xlu0 %3279
        %3281 = vrot.lane.b32.xlu0 %v2954, 30
        %v3282 = vpop.permute.xlu0 %3281
        %3283 = vrot.lane.b32.xlu0 %v2949, 30
        %v3284 = vpop.permute.xlu0 %3283
        %3285 = vrot.lane.b32.xlu0 %v2951, 30
        %v3286 = vpop.permute.xlu0 %3285
        %3287 = vrot.lane.b32.xlu0 %v2953, 30
        %v3288 = vpop.permute.xlu0 %3287
        %3289 = vrot.lane.b32.xlu0 %v2955, 30
        %v3290 = vpop.permute.xlu0 %3289
        %vm3291 = vcmp.lt.s32.totalorder %v766, 30
        %v3292 = vsel %vm3291, %v3276, %v3284
        %v3293 = vsel %vm3291, %v3278, %v3286
        %v3294 = vsel %vm3291, %v3280, %v3288
        %v3295 = vsel %vm3291, %v3282, %v3290
        %v3296 = vsel %vm3291, %v3284, %v3276
        %v3297 = vsel %vm3291, %v3286, %v3278
        %v3298 = vsel %vm3291, %v3288, %v3280
        %v3299 = vsel %vm3291, %v3290, %v3282
        %s3300 = scalar_lea.vmem [#allocation4], 4
        %v3301 = vld [vmem:[%s3300] ss:$8 sm:$0x3]
        %v3303 = vlaneseq
        %v3304 = vshrl.u32 %v3303, 7
        %v3305 = vsub.s32 0, %v3304
        %v3306 = vrot.slane %v3301, %v3305
        %v3307 = vlaneseq
        %v3308 = vshrl.u32 %v3307, 7
        %v3309 = vsub.s32 1, %v3308
        %v3310 = vrot.slane %v3301, %v3309
        %v3313 = vmul.f32 %v3296, %v3306
        %v3314 = vmul.f32 %v3292, %v3310
        %v3315 = vmul.f32 %v3297, %v3306
        %v3316 = vmul.f32 %v3293, %v3310
        %v3317 = vmul.f32 %v3298, %v3306
        %v3318 = vmul.f32 %v3294, %v3310
        %v3319 = vmul.f32 %v3299, %v3306
        %v3320 = vmul.f32 %v3295, %v3310
        %3321 = vset.pattern.permute.xlu0 4
        %3322 = vperm.xlu0 %3321, %v3001
        %v3323 = vpop.permute.xlu0 %3322
        %3325 = vset.pattern.permute.xlu0 4
        %3326 = vperm.xlu0 %3325, %v3002
        %v3327 = vpop.permute.xlu0 %3326
        %3329 = vset.pattern.permute.xlu0 4
        %3330 = vperm.xlu0 %3329, %v3003
        %v3331 = vpop.permute.xlu0 %3330
        %3333 = vset.pattern.permute.xlu0 4
        %3334 = vperm.xlu0 %3333, %v3004
        %v3335 = vpop.permute.xlu0 %3334
        %v3337 = vmul.f32 %v3323, %v3313
        %v3338 = vmul.f32 %v3323, %v3314
        %v3339 = vmul.f32 %v3327, %v3315
        %v3340 = vmul.f32 %v3327, %v3316
        %v3341 = vmul.f32 %v3331, %v3317
        %v3342 = vmul.f32 %v3331, %v3318
        %v3343 = vmul.f32 %v3335, %v3319
        %v3344 = vmul.f32 %v3335, %v3320
        %v3345 = vadd.f32 %v3267, %v3337
        %v3346 = vadd.f32 %v3268, %v3338
        %v3347 = vadd.f32 %v3269, %v3339
        %v3348 = vadd.f32 %v3270, %v3340
        %v3349 = vadd.f32 %v3271, %v3341
        %v3350 = vadd.f32 %v3272, %v3342
        %v3351 = vadd.f32 %v3273, %v3343
        %v3352 = vadd.f32 %v3274, %v3344
        %3353 = vrot.lane.b32.xlu0 %v2948, 18
        %v3354 = vpop.permute.xlu0 %3353
        %3355 = vrot.lane.b32.xlu0 %v2950, 18
        %v3356 = vpop.permute.xlu0 %3355
        %3357 = vrot.lane.b32.xlu0 %v2952, 18
        %v3358 = vpop.permute.xlu0 %3357
        %3359 = vrot.lane.b32.xlu0 %v2954, 18
        %v3360 = vpop.permute.xlu0 %3359
        %3361 = vrot.lane.b32.xlu0 %v2949, 18
        %v3362 = vpop.permute.xlu0 %3361
        %3363 = vrot.lane.b32.xlu0 %v2951, 18
        %v3364 = vpop.permute.xlu0 %3363
        %3365 = vrot.lane.b32.xlu0 %v2953, 18
        %v3366 = vpop.permute.xlu0 %3365
        %3367 = vrot.lane.b32.xlu0 %v2955, 18
        %v3368 = vpop.permute.xlu0 %3367
        %vm3369 = vcmp.lt.s32.totalorder %v766, 18
        %v3370 = vsel %vm3369, %v3354, %v3362
        %v3371 = vsel %vm3369, %v3356, %v3364
        %v3372 = vsel %vm3369, %v3358, %v3366
        %v3373 = vsel %vm3369, %v3360, %v3368
        %v3374 = vsel %vm3369, %v3362, %v3354
        %v3375 = vsel %vm3369, %v3364, %v3356
        %v3376 = vsel %vm3369, %v3366, %v3358
        %v3377 = vsel %vm3369, %v3368, %v3360
        %s3378 = scalar_lea.vmem [#allocation4], 5
        %v3379 = vld [vmem:[%s3378] ss:$8 sm:$0x3]
        %v3381 = vlaneseq
        %v3382 = vshrl.u32 %v3381, 7
        %v3383 = vsub.s32 0, %v3382
        %v3384 = vrot.slane %v3379, %v3383
        %v3385 = vlaneseq
        %v3386 = vshrl.u32 %v3385, 7
        %v3387 = vsub.s32 1, %v3386
        %v3388 = vrot.slane %v3379, %v3387
        %v3391 = vmul.f32 %v3374, %v3384
        %v3392 = vmul.f32 %v3370, %v3388
        %v3393 = vmul.f32 %v3375, %v3384
        %v3394 = vmul.f32 %v3371, %v3388
        %v3395 = vmul.f32 %v3376, %v3384
        %v3396 = vmul.f32 %v3372, %v3388
        %v3397 = vmul.f32 %v3377, %v3384
        %v3398 = vmul.f32 %v3373, %v3388
        %3399 = vset.pattern.permute.xlu0 5
        %3400 = vperm.xlu0 %3399, %v3001
        %v3401 = vpop.permute.xlu0 %3400
        %3403 = vset.pattern.permute.xlu0 5
        %3404 = vperm.xlu0 %3403, %v3002
        %v3405 = vpop.permute.xlu0 %3404
        %3407 = vset.pattern.permute.xlu0 5
        %3408 = vperm.xlu0 %3407, %v3003
        %v3409 = vpop.permute.xlu0 %3408
        %3411 = vset.pattern.permute.xlu0 5
        %3412 = vperm.xlu0 %3411, %v3004
        %v3413 = vpop.permute.xlu0 %3412
        %v3415 = vmul.f32 %v3401, %v3391
        %v3416 = vmul.f32 %v3401, %v3392
        %v3417 = vmul.f32 %v3405, %v3393
        %v3418 = vmul.f32 %v3405, %v3394
        %v3419 = vmul.f32 %v3409, %v3395
        %v3420 = vmul.f32 %v3409, %v3396
        %v3421 = vmul.f32 %v3413, %v3397
        %v3422 = vmul.f32 %v3413, %v3398
        %v3423 = vadd.f32 %v3345, %v3415
        %v3424 = vadd.f32 %v3346, %v3416
        %v3425 = vadd.f32 %v3347, %v3417
        %v3426 = vadd.f32 %v3348, %v3418
        %v3427 = vadd.f32 %v3349, %v3419
        %v3428 = vadd.f32 %v3350, %v3420
        %v3429 = vadd.f32 %v3351, %v3421
        %v3430 = vadd.f32 %v3352, %v3422
        %3431 = vrot.lane.b32.xlu0 %v2948, 17
        %v3432 = vpop.permute.xlu0 %3431
        %3433 = vrot.lane.b32.xlu0 %v2950, 17
        %v3434 = vpop.permute.xlu0 %3433
        %3435 = vrot.lane.b32.xlu0 %v2952, 17
        %v3436 = vpop.permute.xlu0 %3435
        %3437 = vrot.lane.b32.xlu0 %v2954, 17
        %v3438 = vpop.permute.xlu0 %3437
        %3439 = vrot.lane.b32.xlu0 %v2949, 17
        %v3440 = vpop.permute.xlu0 %3439
        %3441 = vrot.lane.b32.xlu0 %v2951, 17
        %v3442 = vpop.permute.xlu0 %3441
        %3443 = vrot.lane.b32.xlu0 %v2953, 17
        %v3444 = vpop.permute.xlu0 %3443
        %3445 = vrot.lane.b32.xlu0 %v2955, 17
        %v3446 = vpop.permute.xlu0 %3445
        %v3447 = vsel %vm767, %v3432, %v3440
        %v3448 = vsel %vm767, %v3434, %v3442
        %v3449 = vsel %vm767, %v3436, %v3444
        %v3450 = vsel %vm767, %v3438, %v3446
        %v3451 = vsel %vm767, %v3440, %v3432
        %v3452 = vsel %vm767, %v3442, %v3434
        %v3453 = vsel %vm767, %v3444, %v3436
        %v3454 = vsel %vm767, %v3446, %v3438
        %s3455 = scalar_lea.vmem [#allocation4], 6
        %v3456 = vld [vmem:[%s3455] ss:$8 sm:$0x3]
        %v3458 = vlaneseq
        %v3459 = vshrl.u32 %v3458, 7
        %v3460 = vsub.s32 0, %v3459
        %v3461 = vrot.slane %v3456, %v3460
        %v3462 = vlaneseq
        %v3463 = vshrl.u32 %v3462, 7
        %v3464 = vsub.s32 1, %v3463
        %v3465 = vrot.slane %v3456, %v3464
        %v3468 = vmul.f32 %v3451, %v3461
        %v3469 = vmul.f32 %v3447, %v3465
        %v3470 = vmul.f32 %v3452, %v3461
        %v3471 = vmul.f32 %v3448, %v3465
        %v3472 = vmul.f32 %v3453, %v3461
        %v3473 = vmul.f32 %v3449, %v3465
        %v3474 = vmul.f32 %v3454, %v3461
        %v3475 = vmul.f32 %v3450, %v3465
        %3476 = vset.pattern.permute.xlu0 6
        %3477 = vperm.xlu0 %3476, %v3001
        %v3478 = vpop.permute.xlu0 %3477
        %3480 = vset.pattern.permute.xlu0 6
        %3481 = vperm.xlu0 %3480, %v3002
        %v3482 = vpop.permute.xlu0 %3481
        %3484 = vset.pattern.permute.xlu0 6
        %3485 = vperm.xlu0 %3484, %v3003
        %v3486 = vpop.permute.xlu0 %3485
        %3488 = vset.pattern.permute.xlu0 6
        %3489 = vperm.xlu0 %3488, %v3004
        %v3490 = vpop.permute.xlu0 %3489
        %v3492 = vmul.f32 %v3478, %v3468
        %v3493 = vmul.f32 %v3478, %v3469
        %v3494 = vmul.f32 %v3482, %v3470
        %v3495 = vmul.f32 %v3482, %v3471
        %v3496 = vmul.f32 %v3486, %v3472
        %v3497 = vmul.f32 %v3486, %v3473
        %v3498 = vmul.f32 %v3490, %v3474
        %v3499 = vmul.f32 %v3490, %v3475
        %v3500 = vadd.f32 %v3423, %v3492
        %v3501 = vadd.f32 %v3424, %v3493
        %v3502 = vadd.f32 %v3425, %v3494
        %v3503 = vadd.f32 %v3426, %v3495
        %v3504 = vadd.f32 %v3427, %v3496
        %v3505 = vadd.f32 %v3428, %v3497
        %v3506 = vadd.f32 %v3429, %v3498
        %v3507 = vadd.f32 %v3430, %v3499
        %3508 = vrot.lane.b32.xlu0 %v2948, 16
        %v3509 = vpop.permute.xlu0 %3508
        %3510 = vrot.lane.b32.xlu0 %v2950, 16
        %v3511 = vpop.permute.xlu0 %3510
        %3512 = vrot.lane.b32.xlu0 %v2952, 16
        %v3513 = vpop.permute.xlu0 %3512
        %3514 = vrot.lane.b32.xlu0 %v2954, 16
        %v3515 = vpop.permute.xlu0 %3514
        %3516 = vrot.lane.b32.xlu0 %v2949, 16
        %v3517 = vpop.permute.xlu0 %3516
        %3518 = vrot.lane.b32.xlu0 %v2951, 16
        %v3519 = vpop.permute.xlu0 %3518
        %3520 = vrot.lane.b32.xlu0 %v2953, 16
        %v3521 = vpop.permute.xlu0 %3520
        %3522 = vrot.lane.b32.xlu0 %v2955, 16
        %v3523 = vpop.permute.xlu0 %3522
        %v3524 = vsel %vm808, %v3509, %v3517
        %v3525 = vsel %vm808, %v3511, %v3519
        %v3526 = vsel %vm808, %v3513, %v3521
        %v3527 = vsel %vm808, %v3515, %v3523
        %v3528 = vsel %vm808, %v3517, %v3509
        %v3529 = vsel %vm808, %v3519, %v3511
        %v3530 = vsel %vm808, %v3521, %v3513
        %v3531 = vsel %vm808, %v3523, %v3515
        %s3532 = scalar_lea.vmem [#allocation4], 7
        %v3533 = vld [vmem:[%s3532] ss:$8 sm:$0x3]
        %v3535 = vlaneseq
        %v3536 = vshrl.u32 %v3535, 7
        %v3537 = vsub.s32 0, %v3536
        %v3538 = vrot.slane %v3533, %v3537
        %v3539 = vlaneseq
        %v3540 = vshrl.u32 %v3539, 7
        %v3541 = vsub.s32 1, %v3540
        %v3542 = vrot.slane %v3533, %v3541
        %v3545 = vmul.f32 %v3528, %v3538
        %v3546 = vmul.f32 %v3524, %v3542
        %v3547 = vmul.f32 %v3529, %v3538
        %v3548 = vmul.f32 %v3525, %v3542
        %v3549 = vmul.f32 %v3530, %v3538
        %v3550 = vmul.f32 %v3526, %v3542
        %v3551 = vmul.f32 %v3531, %v3538
        %v3552 = vmul.f32 %v3527, %v3542
        %3553 = vset.pattern.permute.xlu0 7
        %3554 = vperm.xlu0 %3553, %v3001
        %v3555 = vpop.permute.xlu0 %3554
        %3557 = vset.pattern.permute.xlu0 7
        %3558 = vperm.xlu0 %3557, %v3002
        %v3559 = vpop.permute.xlu0 %3558
        %3561 = vset.pattern.permute.xlu0 7
        %3562 = vperm.xlu0 %3561, %v3003
        %v3563 = vpop.permute.xlu0 %3562
        %3565 = vset.pattern.permute.xlu0 7
        %3566 = vperm.xlu0 %3565, %v3004
        %v3567 = vpop.permute.xlu0 %3566
        %v3569 = vmul.f32 %v3555, %v3545
        %v3570 = vmul.f32 %v3555, %v3546
        %v3571 = vmul.f32 %v3559, %v3547
        %v3572 = vmul.f32 %v3559, %v3548
        %v3573 = vmul.f32 %v3563, %v3549
        %v3574 = vmul.f32 %v3563, %v3550
        %v3575 = vmul.f32 %v3567, %v3551
        %v3576 = vmul.f32 %v3567, %v3552
        %v3577 = vadd.f32 %v3500, %v3569
        %v3578 = vadd.f32 %v3501, %v3570
        %v3579 = vadd.f32 %v3502, %v3571
        %v3580 = vadd.f32 %v3503, %v3572
        %v3581 = vadd.f32 %v3504, %v3573
        %v3582 = vadd.f32 %v3505, %v3574
        %v3583 = vadd.f32 %v3506, %v3575
        %v3584 = vadd.f32 %v3507, %v3576
        %3585 = vrot.lane.b32.xlu0 %v2948, 15
        %v3586 = vpop.permute.xlu0 %3585
        %3587 = vrot.lane.b32.xlu0 %v2950, 15
        %v3588 = vpop.permute.xlu0 %3587
        %3589 = vrot.lane.b32.xlu0 %v2952, 15
        %v3590 = vpop.permute.xlu0 %3589
        %3591 = vrot.lane.b32.xlu0 %v2954, 15
        %v3592 = vpop.permute.xlu0 %3591
        %3593 = vrot.lane.b32.xlu0 %v2949, 15
        %v3594 = vpop.permute.xlu0 %3593
        %3595 = vrot.lane.b32.xlu0 %v2951, 15
        %v3596 = vpop.permute.xlu0 %3595
        %3597 = vrot.lane.b32.xlu0 %v2953, 15
        %v3598 = vpop.permute.xlu0 %3597
        %3599 = vrot.lane.b32.xlu0 %v2955, 15
        %v3600 = vpop.permute.xlu0 %3599
        %v3601 = vsel %vm846, %v3586, %v3594
        %v3602 = vsel %vm846, %v3588, %v3596
        %v3603 = vsel %vm846, %v3590, %v3598
        %v3604 = vsel %vm846, %v3592, %v3600
        %v3605 = vsel %vm846, %v3594, %v3586
        %v3606 = vsel %vm846, %v3596, %v3588
        %v3607 = vsel %vm846, %v3598, %v3590
        %v3608 = vsel %vm846, %v3600, %v3592
        %s3609 = scalar_lea.vmem [#allocation4], 16
        %v3610 = vld [vmem:[%s3609] ss:$8 sm:$0x3]
        %v3612 = vlaneseq
        %v3613 = vshrl.u32 %v3612, 7
        %v3614 = vsub.s32 0, %v3613
        %v3615 = vrot.slane %v3610, %v3614
        %v3616 = vlaneseq
        %v3617 = vshrl.u32 %v3616, 7
        %v3618 = vsub.s32 1, %v3617
        %v3619 = vrot.slane %v3610, %v3618
        %v3622 = vmul.f32 %v3605, %v3615
        %v3623 = vmul.f32 %v3601, %v3619
        %v3624 = vmul.f32 %v3606, %v3615
        %v3625 = vmul.f32 %v3602, %v3619
        %v3626 = vmul.f32 %v3607, %v3615
        %v3627 = vmul.f32 %v3603, %v3619
        %v3628 = vmul.f32 %v3608, %v3615
        %v3629 = vmul.f32 %v3604, %v3619
        %3630 = vset.pattern.permute.xlu0 8
        %3631 = vperm.xlu0 %3630, %v3001
        %v3632 = vpop.permute.xlu0 %3631
        %3634 = vset.pattern.permute.xlu0 8
        %3635 = vperm.xlu0 %3634, %v3002
        %v3636 = vpop.permute.xlu0 %3635
        %3638 = vset.pattern.permute.xlu0 8
        %3639 = vperm.xlu0 %3638, %v3003
        %v3640 = vpop.permute.xlu0 %3639
        %3642 = vset.pattern.permute.xlu0 8
        %3643 = vperm.xlu0 %3642, %v3004
        %v3644 = vpop.permute.xlu0 %3643
        %v3646 = vmul.f32 %v3632, %v3622
        %v3647 = vmul.f32 %v3632, %v3623
        %v3648 = vmul.f32 %v3636, %v3624
        %v3649 = vmul.f32 %v3636, %v3625
        %v3650 = vmul.f32 %v3640, %v3626
        %v3651 = vmul.f32 %v3640, %v3627
        %v3652 = vmul.f32 %v3644, %v3628
        %v3653 = vmul.f32 %v3644, %v3629
        %v3654 = vadd.f32 %v3577, %v3646
        %v3655 = vadd.f32 %v3578, %v3647
        %v3656 = vadd.f32 %v3579, %v3648
        %v3657 = vadd.f32 %v3580, %v3649
        %v3658 = vadd.f32 %v3581, %v3650
        %v3659 = vadd.f32 %v3582, %v3651
        %v3660 = vadd.f32 %v3583, %v3652
        %v3661 = vadd.f32 %v3584, %v3653
        %3662 = vrot.lane.b32.xlu0 %v2948, 14
        %v3663 = vpop.permute.xlu0 %3662
        %3664 = vrot.lane.b32.xlu0 %v2950, 14
        %v3665 = vpop.permute.xlu0 %3664
        %3666 = vrot.lane.b32.xlu0 %v2952, 14
        %v3667 = vpop.permute.xlu0 %3666
        %3668 = vrot.lane.b32.xlu0 %v2954, 14
        %v3669 = vpop.permute.xlu0 %3668
        %3670 = vrot.lane.b32.xlu0 %v2949, 14
        %v3671 = vpop.permute.xlu0 %3670
        %3672 = vrot.lane.b32.xlu0 %v2951, 14
        %v3673 = vpop.permute.xlu0 %3672
        %3674 = vrot.lane.b32.xlu0 %v2953, 14
        %v3675 = vpop.permute.xlu0 %3674
        %3676 = vrot.lane.b32.xlu0 %v2955, 14
        %v3677 = vpop.permute.xlu0 %3676
        %vm3678 = vcmp.lt.s32.totalorder %v766, 14
        %v3679 = vsel %vm3678, %v3663, %v3671
        %v3680 = vsel %vm3678, %v3665, %v3673
        %v3681 = vsel %vm3678, %v3667, %v3675
        %v3682 = vsel %vm3678, %v3669, %v3677
        %v3683 = vsel %vm3678, %v3671, %v3663
        %v3684 = vsel %vm3678, %v3673, %v3665
        %v3685 = vsel %vm3678, %v3675, %v3667
        %v3686 = vsel %vm3678, %v3677, %v3669
        %s3687 = scalar_lea.vmem [#allocation4], 17
        %v3688 = vld [vmem:[%s3687] ss:$8 sm:$0x3]
        %v3690 = vlaneseq
        %v3691 = vshrl.u32 %v3690, 7
        %v3692 = vsub.s32 0, %v3691
        %v3693 = vrot.slane %v3688, %v3692
        %v3694 = vlaneseq
        %v3695 = vshrl.u32 %v3694, 7
        %v3696 = vsub.s32 1, %v3695
        %v3697 = vrot.slane %v3688, %v3696
        %v3700 = vmul.f32 %v3683, %v3693
        %v3701 = vmul.f32 %v3679, %v3697
        %v3702 = vmul.f32 %v3684, %v3693
        %v3703 = vmul.f32 %v3680, %v3697
        %v3704 = vmul.f32 %v3685, %v3693
        %v3705 = vmul.f32 %v3681, %v3697
        %v3706 = vmul.f32 %v3686, %v3693
        %v3707 = vmul.f32 %v3682, %v3697
        %3708 = vset.pattern.permute.xlu0 9
        %3709 = vperm.xlu0 %3708, %v3001
        %v3710 = vpop.permute.xlu0 %3709
        %3712 = vset.pattern.permute.xlu0 9
        %3713 = vperm.xlu0 %3712, %v3002
        %v3714 = vpop.permute.xlu0 %3713
        %3716 = vset.pattern.permute.xlu0 9
        %3717 = vperm.xlu0 %3716, %v3003
        %v3718 = vpop.permute.xlu0 %3717
        %3720 = vset.pattern.permute.xlu0 9
        %3721 = vperm.xlu0 %3720, %v3004
        %v3722 = vpop.permute.xlu0 %3721
        %v3724 = vmul.f32 %v3710, %v3700
        %v3725 = vmul.f32 %v3710, %v3701
        %v3726 = vmul.f32 %v3714, %v3702
        %v3727 = vmul.f32 %v3714, %v3703
        %v3728 = vmul.f32 %v3718, %v3704
        %v3729 = vmul.f32 %v3718, %v3705
        %v3730 = vmul.f32 %v3722, %v3706
        %v3731 = vmul.f32 %v3722, %v3707
        %v3732 = vadd.f32 %v3654, %v3724
        %v3733 = vadd.f32 %v3655, %v3725
        %v3734 = vadd.f32 %v3656, %v3726
        %v3735 = vadd.f32 %v3657, %v3727
        %v3736 = vadd.f32 %v3658, %v3728
        %v3737 = vadd.f32 %v3659, %v3729
        %v3738 = vadd.f32 %v3660, %v3730
        %v3739 = vadd.f32 %v3661, %v3731
        %3740 = vrot.lane.b32.xlu0 %v2948, 2
        %v3741 = vpop.permute.xlu0 %3740
        %3742 = vrot.lane.b32.xlu0 %v2950, 2
        %v3743 = vpop.permute.xlu0 %3742
        %3744 = vrot.lane.b32.xlu0 %v2952, 2
        %v3745 = vpop.permute.xlu0 %3744
        %3746 = vrot.lane.b32.xlu0 %v2954, 2
        %v3747 = vpop.permute.xlu0 %3746
        %3748 = vrot.lane.b32.xlu0 %v2949, 2
        %v3749 = vpop.permute.xlu0 %3748
        %3750 = vrot.lane.b32.xlu0 %v2951, 2
        %v3751 = vpop.permute.xlu0 %3750
        %3752 = vrot.lane.b32.xlu0 %v2953, 2
        %v3753 = vpop.permute.xlu0 %3752
        %3754 = vrot.lane.b32.xlu0 %v2955, 2
        %v3755 = vpop.permute.xlu0 %3754
        %vm3756 = vcmp.lt.s32.totalorder %v766, 2
        %v3757 = vsel %vm3756, %v3741, %v3749
        %v3758 = vsel %vm3756, %v3743, %v3751
        %v3759 = vsel %vm3756, %v3745, %v3753
        %v3760 = vsel %vm3756, %v3747, %v3755
        %v3761 = vsel %vm3756, %v3749, %v3741
        %v3762 = vsel %vm3756, %v3751, %v3743
        %v3763 = vsel %vm3756, %v3753, %v3745
        %v3764 = vsel %vm3756, %v3755, %v3747
        %s3765 = scalar_lea.vmem [#allocation4], 18
        %v3766 = vld [vmem:[%s3765] ss:$8 sm:$0x3]
        %v3768 = vlaneseq
        %v3769 = vshrl.u32 %v3768, 7
        %v3770 = vsub.s32 0, %v3769
        %v3771 = vrot.slane %v3766, %v3770
        %v3772 = vlaneseq
        %v3773 = vshrl.u32 %v3772, 7
        %v3774 = vsub.s32 1, %v3773
        %v3775 = vrot.slane %v3766, %v3774
        %v3778 = vmul.f32 %v3761, %v3771
        %v3779 = vmul.f32 %v3757, %v3775
        %v3780 = vmul.f32 %v3762, %v3771
        %v3781 = vmul.f32 %v3758, %v3775
        %v3782 = vmul.f32 %v3763, %v3771
        %v3783 = vmul.f32 %v3759, %v3775
        %v3784 = vmul.f32 %v3764, %v3771
        %v3785 = vmul.f32 %v3760, %v3775
        %3786 = vset.pattern.permute.xlu0 10
        %3787 = vperm.xlu0 %3786, %v3001
        %v3788 = vpop.permute.xlu0 %3787
        %3790 = vset.pattern.permute.xlu0 10
        %3791 = vperm.xlu0 %3790, %v3002
        %v3792 = vpop.permute.xlu0 %3791
        %3794 = vset.pattern.permute.xlu0 10
        %3795 = vperm.xlu0 %3794, %v3003
        %v3796 = vpop.permute.xlu0 %3795
        %3798 = vset.pattern.permute.xlu0 10
        %3799 = vperm.xlu0 %3798, %v3004
        %v3800 = vpop.permute.xlu0 %3799
        %v3802 = vmul.f32 %v3788, %v3778
        %v3803 = vmul.f32 %v3788, %v3779
        %v3804 = vmul.f32 %v3792, %v3780
        %v3805 = vmul.f32 %v3792, %v3781
        %v3806 = vmul.f32 %v3796, %v3782
        %v3807 = vmul.f32 %v3796, %v3783
        %v3808 = vmul.f32 %v3800, %v3784
        %v3809 = vmul.f32 %v3800, %v3785
        %v3810 = vadd.f32 %v3732, %v3802
        %v3811 = vadd.f32 %v3733, %v3803
        %v3812 = vadd.f32 %v3734, %v3804
        %v3813 = vadd.f32 %v3735, %v3805
        %v3814 = vadd.f32 %v3736, %v3806
        %v3815 = vadd.f32 %v3737, %v3807
        %v3816 = vadd.f32 %v3738, %v3808
        %v3817 = vadd.f32 %v3739, %v3809
        %3818 = vrot.lane.b32.xlu0 %v2948, 1
        %v3819 = vpop.permute.xlu0 %3818
        %3820 = vrot.lane.b32.xlu0 %v2950, 1
        %v3821 = vpop.permute.xlu0 %3820
        %3822 = vrot.lane.b32.xlu0 %v2952, 1
        %v3823 = vpop.permute.xlu0 %3822
        %3824 = vrot.lane.b32.xlu0 %v2954, 1
        %v3825 = vpop.permute.xlu0 %3824
        %3826 = vrot.lane.b32.xlu0 %v2949, 1
        %v3827 = vpop.permute.xlu0 %3826
        %3828 = vrot.lane.b32.xlu0 %v2951, 1
        %v3829 = vpop.permute.xlu0 %3828
        %3830 = vrot.lane.b32.xlu0 %v2953, 1
        %v3831 = vpop.permute.xlu0 %3830
        %3832 = vrot.lane.b32.xlu0 %v2955, 1
        %v3833 = vpop.permute.xlu0 %3832
        %v3834 = vsel %vm884, %v3819, %v3827
        %v3835 = vsel %vm884, %v3821, %v3829
        %v3836 = vsel %vm884, %v3823, %v3831
        %v3837 = vsel %vm884, %v3825, %v3833
        %v3838 = vsel %vm884, %v3827, %v3819
        %v3839 = vsel %vm884, %v3829, %v3821
        %v3840 = vsel %vm884, %v3831, %v3823
        %v3841 = vsel %vm884, %v3833, %v3825
        %s3842 = scalar_lea.vmem [#allocation4], 19
        %v3843 = vld [vmem:[%s3842] ss:$8 sm:$0x3]
        %v3845 = vlaneseq
        %v3846 = vshrl.u32 %v3845, 7
        %v3847 = vsub.s32 0, %v3846
        %v3848 = vrot.slane %v3843, %v3847
        %v3849 = vlaneseq
        %v3850 = vshrl.u32 %v3849, 7
        %v3851 = vsub.s32 1, %v3850
        %v3852 = vrot.slane %v3843, %v3851
        %v3855 = vmul.f32 %v3838, %v3848
        %v3856 = vmul.f32 %v3834, %v3852
        %v3857 = vmul.f32 %v3839, %v3848
        %v3858 = vmul.f32 %v3835, %v3852
        %v3859 = vmul.f32 %v3840, %v3848
        %v3860 = vmul.f32 %v3836, %v3852
        %v3861 = vmul.f32 %v3841, %v3848
        %v3862 = vmul.f32 %v3837, %v3852
        %3863 = vset.pattern.permute.xlu0 11
        %3864 = vperm.xlu0 %3863, %v3001
        %v3865 = vpop.permute.xlu0 %3864
        %3867 = vset.pattern.permute.xlu0 11
        %3868 = vperm.xlu0 %3867, %v3002
        %v3869 = vpop.permute.xlu0 %3868
        %3871 = vset.pattern.permute.xlu0 11
        %3872 = vperm.xlu0 %3871, %v3003
        %v3873 = vpop.permute.xlu0 %3872
        %3875 = vset.pattern.permute.xlu0 11
        %3876 = vperm.xlu0 %3875, %v3004
        %v3877 = vpop.permute.xlu0 %3876
        %v3879 = vmul.f32 %v3865, %v3855
        %v3880 = vmul.f32 %v3865, %v3856
        %v3881 = vmul.f32 %v3869, %v3857
        %v3882 = vmul.f32 %v3869, %v3858
        %v3883 = vmul.f32 %v3873, %v3859
        %v3884 = vmul.f32 %v3873, %v3860
        %v3885 = vmul.f32 %v3877, %v3861
        %v3886 = vmul.f32 %v3877, %v3862
        %v3887 = vadd.f32 %v3810, %v3879
        %v3888 = vadd.f32 %v3811, %v3880
        %v3889 = vadd.f32 %v3812, %v3881
        %v3890 = vadd.f32 %v3813, %v3882
        %v3891 = vadd.f32 %v3814, %v3883
        %v3892 = vadd.f32 %v3815, %v3884
        %v3893 = vadd.f32 %v3816, %v3885
        %v3894 = vadd.f32 %v3817, %v3886
        %3895 = vset.pattern.permute.xlu0 12
        %3896 = vperm.xlu0 %3895, %v3001
        %v3897 = vpop.permute.xlu0 %3896
        %3899 = vset.pattern.permute.xlu0 12
        %3900 = vperm.xlu0 %3899, %v3002
        %v3901 = vpop.permute.xlu0 %3900
        %3903 = vset.pattern.permute.xlu0 12
        %3904 = vperm.xlu0 %3903, %v3003
        %v3905 = vpop.permute.xlu0 %3904
        %3907 = vset.pattern.permute.xlu0 12
        %3908 = vperm.xlu0 %3907, %v3004
        %v3909 = vpop.permute.xlu0 %3908
        %v3911 = vmul.f32 %v3897, %v2948
        %v3912 = vmul.f32 %v3897, %v2949
        %v3913 = vmul.f32 %v3901, %v2950
        %v3914 = vmul.f32 %v3901, %v2951
        %v3915 = vmul.f32 %v3905, %v2952
        %v3916 = vmul.f32 %v3905, %v2953
        %v3917 = vmul.f32 %v3909, %v2954
        %v3918 = vmul.f32 %v3909, %v2955
        %v3919 = vadd.f32 %v3887, %v3911
        %v3920 = vadd.f32 %v3888, %v3912
        %v3921 = vadd.f32 %v3889, %v3913
        %v3922 = vadd.f32 %v3890, %v3914
        %v3923 = vadd.f32 %v3891, %v3915
        %v3924 = vadd.f32 %v3892, %v3916
        %v3925 = vadd.f32 %v3893, %v3917
        %v3926 = vadd.f32 %v3894, %v3918
        %3927 = vrot.lane.b32.xlu0 %v2948, 127
        %v3928 = vpop.permute.xlu0 %3927
        %3929 = vrot.lane.b32.xlu0 %v2950, 127
        %v3930 = vpop.permute.xlu0 %3929
        %3931 = vrot.lane.b32.xlu0 %v2952, 127
        %v3932 = vpop.permute.xlu0 %3931
        %3933 = vrot.lane.b32.xlu0 %v2954, 127
        %v3934 = vpop.permute.xlu0 %3933
        %3935 = vrot.lane.b32.xlu0 %v2949, 127
        %v3936 = vpop.permute.xlu0 %3935
        %3937 = vrot.lane.b32.xlu0 %v2951, 127
        %v3938 = vpop.permute.xlu0 %3937
        %3939 = vrot.lane.b32.xlu0 %v2953, 127
        %v3940 = vpop.permute.xlu0 %3939
        %3941 = vrot.lane.b32.xlu0 %v2955, 127
        %v3942 = vpop.permute.xlu0 %3941
        %v3943 = vsel %vm938, %v3928, %v3936
        %v3944 = vsel %vm938, %v3930, %v3938
        %v3945 = vsel %vm938, %v3932, %v3940
        %v3946 = vsel %vm938, %v3934, %v3942
        %v3947 = vsel %vm938, %v3936, %v3928
        %v3948 = vsel %vm938, %v3938, %v3930
        %v3949 = vsel %vm938, %v3940, %v3932
        %v3950 = vsel %vm938, %v3942, %v3934
        %s3951 = scalar_lea.vmem [#allocation4], 21
        %v3952 = vld [vmem:[%s3951] ss:$8 sm:$0x3]
        %v3954 = vlaneseq
        %v3955 = vshrl.u32 %v3954, 7
        %v3956 = vsub.s32 0, %v3955
        %v3957 = vrot.slane %v3952, %v3956
        %v3958 = vlaneseq
        %v3959 = vshrl.u32 %v3958, 7
        %v3960 = vsub.s32 1, %v3959
        %v3961 = vrot.slane %v3952, %v3960
        %v3964 = vmul.f32 %v3943, %v3957
        %v3965 = vmul.f32 %v3947, %v3961
        %v3966 = vmul.f32 %v3944, %v3957
        %v3967 = vmul.f32 %v3948, %v3961
        %v3968 = vmul.f32 %v3945, %v3957
        %v3969 = vmul.f32 %v3949, %v3961
        %v3970 = vmul.f32 %v3946, %v3957
        %v3971 = vmul.f32 %v3950, %v3961
        %3972 = vset.pattern.permute.xlu0 13
        %3973 = vperm.xlu0 %3972, %v3001
        %v3974 = vpop.permute.xlu0 %3973
        %3976 = vset.pattern.permute.xlu0 13
        %3977 = vperm.xlu0 %3976, %v3002
        %v3978 = vpop.permute.xlu0 %3977
        %3980 = vset.pattern.permute.xlu0 13
        %3981 = vperm.xlu0 %3980, %v3003
        %v3982 = vpop.permute.xlu0 %3981
        %3984 = vset.pattern.permute.xlu0 13
        %3985 = vperm.xlu0 %3984, %v3004
        %v3986 = vpop.permute.xlu0 %3985
        %v3988 = vmul.f32 %v3974, %v3964
        %v3989 = vmul.f32 %v3974, %v3965
        %v3990 = vmul.f32 %v3978, %v3966
        %v3991 = vmul.f32 %v3978, %v3967
        %v3992 = vmul.f32 %v3982, %v3968
        %v3993 = vmul.f32 %v3982, %v3969
        %v3994 = vmul.f32 %v3986, %v3970
        %v3995 = vmul.f32 %v3986, %v3971
        %v3996 = vadd.f32 %v3919, %v3988
        %v3997 = vadd.f32 %v3920, %v3989
        %v3998 = vadd.f32 %v3921, %v3990
        %v3999 = vadd.f32 %v3922, %v3991
        %v4000 = vadd.f32 %v3923, %v3992
        %v4001 = vadd.f32 %v3924, %v3993
        %v4002 = vadd.f32 %v3925, %v3994
        %v4003 = vadd.f32 %v3926, %v3995
        %4004 = vrot.lane.b32.xlu0 %v2948, 126
        %v4005 = vpop.permute.xlu0 %4004
        %4006 = vrot.lane.b32.xlu0 %v2950, 126
        %v4007 = vpop.permute.xlu0 %4006
        %4008 = vrot.lane.b32.xlu0 %v2952, 126
        %v4009 = vpop.permute.xlu0 %4008
        %4010 = vrot.lane.b32.xlu0 %v2954, 126
        %v4011 = vpop.permute.xlu0 %4010
        %4012 = vrot.lane.b32.xlu0 %v2949, 126
        %v4013 = vpop.permute.xlu0 %4012
        %4014 = vrot.lane.b32.xlu0 %v2951, 126
        %v4015 = vpop.permute.xlu0 %4014
        %4016 = vrot.lane.b32.xlu0 %v2953, 126
        %v4017 = vpop.permute.xlu0 %4016
        %4018 = vrot.lane.b32.xlu0 %v2955, 126
        %v4019 = vpop.permute.xlu0 %4018
        %vm4020 = vcmp.lt.s32.totalorder %v766, 126
        %v4021 = vsel %vm4020, %v4005, %v4013
        %v4022 = vsel %vm4020, %v4007, %v4015
        %v4023 = vsel %vm4020, %v4009, %v4017
        %v4024 = vsel %vm4020, %v4011, %v4019
        %v4025 = vsel %vm4020, %v4013, %v4005
        %v4026 = vsel %vm4020, %v4015, %v4007
        %v4027 = vsel %vm4020, %v4017, %v4009
        %v4028 = vsel %vm4020, %v4019, %v4011
        %s4029 = scalar_lea.vmem [#allocation4], 22
        %v4030 = vld [vmem:[%s4029] ss:$8 sm:$0x3]
        %v4032 = vlaneseq
        %v4033 = vshrl.u32 %v4032, 7
        %v4034 = vsub.s32 0, %v4033
        %v4035 = vrot.slane %v4030, %v4034
        %v4036 = vlaneseq
        %v4037 = vshrl.u32 %v4036, 7
        %v4038 = vsub.s32 1, %v4037
        %v4039 = vrot.slane %v4030, %v4038
        %v4042 = vmul.f32 %v4021, %v4035
        %v4043 = vmul.f32 %v4025, %v4039
        %v4044 = vmul.f32 %v4022, %v4035
        %v4045 = vmul.f32 %v4026, %v4039
        %v4046 = vmul.f32 %v4023, %v4035
        %v4047 = vmul.f32 %v4027, %v4039
        %v4048 = vmul.f32 %v4024, %v4035
        %v4049 = vmul.f32 %v4028, %v4039
        %4050 = vset.pattern.permute.xlu0 14
        %4051 = vperm.xlu0 %4050, %v3001
        %v4052 = vpop.permute.xlu0 %4051
        %4054 = vset.pattern.permute.xlu0 14
        %4055 = vperm.xlu0 %4054, %v3002
        %v4056 = vpop.permute.xlu0 %4055
        %4058 = vset.pattern.permute.xlu0 14
        %4059 = vperm.xlu0 %4058, %v3003
        %v4060 = vpop.permute.xlu0 %4059
        %4062 = vset.pattern.permute.xlu0 14
        %4063 = vperm.xlu0 %4062, %v3004
        %v4064 = vpop.permute.xlu0 %4063
        %v4066 = vmul.f32 %v4052, %v4042
        %v4067 = vmul.f32 %v4052, %v4043
        %v4068 = vmul.f32 %v4056, %v4044
        %v4069 = vmul.f32 %v4056, %v4045
        %v4070 = vmul.f32 %v4060, %v4046
        %v4071 = vmul.f32 %v4060, %v4047
        %v4072 = vmul.f32 %v4064, %v4048
        %v4073 = vmul.f32 %v4064, %v4049
        %v4074 = vadd.f32 %v3996, %v4066
        %v4075 = vadd.f32 %v3997, %v4067
        %v4076 = vadd.f32 %v3998, %v4068
        %v4077 = vadd.f32 %v3999, %v4069
        %v4078 = vadd.f32 %v4000, %v4070
        %v4079 = vadd.f32 %v4001, %v4071
        %v4080 = vadd.f32 %v4002, %v4072
        %v4081 = vadd.f32 %v4003, %v4073
        %4082 = vrot.lane.b32.xlu0 %v2948, 114
        %v4083 = vpop.permute.xlu0 %4082
        %4084 = vrot.lane.b32.xlu0 %v2950, 114
        %v4085 = vpop.permute.xlu0 %4084
        %4086 = vrot.lane.b32.xlu0 %v2952, 114
        %v4087 = vpop.permute.xlu0 %4086
        %4088 = vrot.lane.b32.xlu0 %v2954, 114
        %v4089 = vpop.permute.xlu0 %4088
        %4090 = vrot.lane.b32.xlu0 %v2949, 114
        %v4091 = vpop.permute.xlu0 %4090
        %4092 = vrot.lane.b32.xlu0 %v2951, 114
        %v4093 = vpop.permute.xlu0 %4092
        %4094 = vrot.lane.b32.xlu0 %v2953, 114
        %v4095 = vpop.permute.xlu0 %4094
        %4096 = vrot.lane.b32.xlu0 %v2955, 114
        %v4097 = vpop.permute.xlu0 %4096
        %vm4098 = vcmp.lt.s32.totalorder %v766, 114
        %v4099 = vsel %vm4098, %v4083, %v4091
        %v4100 = vsel %vm4098, %v4085, %v4093
        %v4101 = vsel %vm4098, %v4087, %v4095
        %v4102 = vsel %vm4098, %v4089, %v4097
        %v4103 = vsel %vm4098, %v4091, %v4083
        %v4104 = vsel %vm4098, %v4093, %v4085
        %v4105 = vsel %vm4098, %v4095, %v4087
        %v4106 = vsel %vm4098, %v4097, %v4089
        %s4107 = scalar_lea.vmem [#allocation4], 23
        %v4108 = vld [vmem:[%s4107] ss:$8 sm:$0x3]
        %v4110 = vlaneseq
        %v4111 = vshrl.u32 %v4110, 7
        %v4112 = vsub.s32 0, %v4111
        %v4113 = vrot.slane %v4108, %v4112
        %v4114 = vlaneseq
        %v4115 = vshrl.u32 %v4114, 7
        %v4116 = vsub.s32 1, %v4115
        %v4117 = vrot.slane %v4108, %v4116
        %v4120 = vmul.f32 %v4099, %v4113
        %v4121 = vmul.f32 %v4103, %v4117
        %v4122 = vmul.f32 %v4100, %v4113
        %v4123 = vmul.f32 %v4104, %v4117
        %v4124 = vmul.f32 %v4101, %v4113
        %v4125 = vmul.f32 %v4105, %v4117
        %v4126 = vmul.f32 %v4102, %v4113
        %v4127 = vmul.f32 %v4106, %v4117
        %4128 = vset.pattern.permute.xlu0 15
        %4129 = vperm.xlu0 %4128, %v3001
        %v4130 = vpop.permute.xlu0 %4129
        %4132 = vset.pattern.permute.xlu0 15
        %4133 = vperm.xlu0 %4132, %v3002
        %v4134 = vpop.permute.xlu0 %4133
        %4136 = vset.pattern.permute.xlu0 15
        %4137 = vperm.xlu0 %4136, %v3003
        %v4138 = vpop.permute.xlu0 %4137
        %4140 = vset.pattern.permute.xlu0 15
        %4141 = vperm.xlu0 %4140, %v3004
        %v4142 = vpop.permute.xlu0 %4141
        %v4144 = vmul.f32 %v4130, %v4120
        %v4145 = vmul.f32 %v4130, %v4121
        %v4146 = vmul.f32 %v4134, %v4122
        %v4147 = vmul.f32 %v4134, %v4123
        %v4148 = vmul.f32 %v4138, %v4124
        %v4149 = vmul.f32 %v4138, %v4125
        %v4150 = vmul.f32 %v4142, %v4126
        %v4151 = vmul.f32 %v4142, %v4127
        %v4152 = vadd.f32 %v4074, %v4144
        %v4153 = vadd.f32 %v4075, %v4145
        %v4154 = vadd.f32 %v4076, %v4146
        %v4155 = vadd.f32 %v4077, %v4147
        %v4156 = vadd.f32 %v4078, %v4148
        %v4157 = vadd.f32 %v4079, %v4149
        %v4158 = vadd.f32 %v4080, %v4150
        %v4159 = vadd.f32 %v4081, %v4151
        %4160 = vrot.lane.b32.xlu0 %v2948, 113
        %v4161 = vpop.permute.xlu0 %4160
        %4162 = vrot.lane.b32.xlu0 %v2950, 113
        %v4163 = vpop.permute.xlu0 %4162
        %4164 = vrot.lane.b32.xlu0 %v2952, 113
        %v4165 = vpop.permute.xlu0 %4164
        %4166 = vrot.lane.b32.xlu0 %v2954, 113
        %v4167 = vpop.permute.xlu0 %4166
        %4168 = vrot.lane.b32.xlu0 %v2949, 113
        %v4169 = vpop.permute.xlu0 %4168
        %4170 = vrot.lane.b32.xlu0 %v2951, 113
        %v4171 = vpop.permute.xlu0 %4170
        %4172 = vrot.lane.b32.xlu0 %v2953, 113
        %v4173 = vpop.permute.xlu0 %4172
        %4174 = vrot.lane.b32.xlu0 %v2955, 113
        %v4175 = vpop.permute.xlu0 %4174
        %v4176 = vsel %vm976, %v4161, %v4169
        %v4177 = vsel %vm976, %v4163, %v4171
        %v4178 = vsel %vm976, %v4165, %v4173
        %v4179 = vsel %vm976, %v4167, %v4175
        %v4180 = vsel %vm976, %v4169, %v4161
        %v4181 = vsel %vm976, %v4171, %v4163
        %v4182 = vsel %vm976, %v4173, %v4165
        %v4183 = vsel %vm976, %v4175, %v4167
        %s4184 = scalar_lea.vmem [#allocation4], 32
        %v4185 = vld [vmem:[%s4184] ss:$8 sm:$0x3]
        %v4187 = vlaneseq
        %v4188 = vshrl.u32 %v4187, 7
        %v4189 = vsub.s32 0, %v4188
        %v4190 = vrot.slane %v4185, %v4189
        %v4191 = vlaneseq
        %v4192 = vshrl.u32 %v4191, 7
        %v4193 = vsub.s32 1, %v4192
        %v4194 = vrot.slane %v4185, %v4193
        %v4197 = vmul.f32 %v4176, %v4190
        %v4198 = vmul.f32 %v4180, %v4194
        %v4199 = vmul.f32 %v4177, %v4190
        %v4200 = vmul.f32 %v4181, %v4194
        %v4201 = vmul.f32 %v4178, %v4190
        %v4202 = vmul.f32 %v4182, %v4194
        %v4203 = vmul.f32 %v4179, %v4190
        %v4204 = vmul.f32 %v4183, %v4194
        %4205 = vset.pattern.permute.xlu0 16
        %4206 = vperm.xlu0 %4205, %v3001
        %v4207 = vpop.permute.xlu0 %4206
        %4209 = vset.pattern.permute.xlu0 16
        %4210 = vperm.xlu0 %4209, %v3002
        %v4211 = vpop.permute.xlu0 %4210
        %4213 = vset.pattern.permute.xlu0 16
        %4214 = vperm.xlu0 %4213, %v3003
        %v4215 = vpop.permute.xlu0 %4214
        %4217 = vset.pattern.permute.xlu0 16
        %4218 = vperm.xlu0 %4217, %v3004
        %v4219 = vpop.permute.xlu0 %4218
        %v4221 = vmul.f32 %v4207, %v4197
        %v4222 = vmul.f32 %v4207, %v4198
        %v4223 = vmul.f32 %v4211, %v4199
        %v4224 = vmul.f32 %v4211, %v4200
        %v4225 = vmul.f32 %v4215, %v4201
        %v4226 = vmul.f32 %v4215, %v4202
        %v4227 = vmul.f32 %v4219, %v4203
        %v4228 = vmul.f32 %v4219, %v4204
        %v4229 = vadd.f32 %v4152, %v4221
        %v4230 = vadd.f32 %v4153, %v4222
        %v4231 = vadd.f32 %v4154, %v4223
        %v4232 = vadd.f32 %v4155, %v4224
        %v4233 = vadd.f32 %v4156, %v4225
        %v4234 = vadd.f32 %v4157, %v4226
        %v4235 = vadd.f32 %v4158, %v4227
        %v4236 = vadd.f32 %v4159, %v4228
        %4237 = vrot.lane.b32.xlu0 %v2948, 112
        %v4238 = vpop.permute.xlu0 %4237
        %4239 = vrot.lane.b32.xlu0 %v2950, 112
        %v4240 = vpop.permute.xlu0 %4239
        %4241 = vrot.lane.b32.xlu0 %v2952, 112
        %v4242 = vpop.permute.xlu0 %4241
        %4243 = vrot.lane.b32.xlu0 %v2954, 112
        %v4244 = vpop.permute.xlu0 %4243
        %4245 = vrot.lane.b32.xlu0 %v2949, 112
        %v4246 = vpop.permute.xlu0 %4245
        %4247 = vrot.lane.b32.xlu0 %v2951, 112
        %v4248 = vpop.permute.xlu0 %4247
        %4249 = vrot.lane.b32.xlu0 %v2953, 112
        %v4250 = vpop.permute.xlu0 %4249
        %4251 = vrot.lane.b32.xlu0 %v2955, 112
        %v4252 = vpop.permute.xlu0 %4251
        %v4253 = vsel %vm1014, %v4238, %v4246
        %v4254 = vsel %vm1014, %v4240, %v4248
        %v4255 = vsel %vm1014, %v4242, %v4250
        %v4256 = vsel %vm1014, %v4244, %v4252
        %v4257 = vsel %vm1014, %v4246, %v4238
        %v4258 = vsel %vm1014, %v4248, %v4240
        %v4259 = vsel %vm1014, %v4250, %v4242
        %v4260 = vsel %vm1014, %v4252, %v4244
        %s4261 = scalar_lea.vmem [#allocation4], 33
        %v4262 = vld [vmem:[%s4261] ss:$8 sm:$0x3]
        %v4264 = vlaneseq
        %v4265 = vshrl.u32 %v4264, 7
        %v4266 = vsub.s32 0, %v4265
        %v4267 = vrot.slane %v4262, %v4266
        %v4268 = vlaneseq
        %v4269 = vshrl.u32 %v4268, 7
        %v4270 = vsub.s32 1, %v4269
        %v4271 = vrot.slane %v4262, %v4270
        %v4274 = vmul.f32 %v4253, %v4267
        %v4275 = vmul.f32 %v4257, %v4271
        %v4276 = vmul.f32 %v4254, %v4267
        %v4277 = vmul.f32 %v4258, %v4271
        %v4278 = vmul.f32 %v4255, %v4267
        %v4279 = vmul.f32 %v4259, %v4271
        %v4280 = vmul.f32 %v4256, %v4267
        %v4281 = vmul.f32 %v4260, %v4271
        %4282 = vset.pattern.permute.xlu0 17
        %4283 = vperm.xlu0 %4282, %v3001
        %v4284 = vpop.permute.xlu0 %4283
        %4286 = vset.pattern.permute.xlu0 17
        %4287 = vperm.xlu0 %4286, %v3002
        %v4288 = vpop.permute.xlu0 %4287
        %4290 = vset.pattern.permute.xlu0 17
        %4291 = vperm.xlu0 %4290, %v3003
        %v4292 = vpop.permute.xlu0 %4291
        %4294 = vset.pattern.permute.xlu0 17
        %4295 = vperm.xlu0 %4294, %v3004
        %v4296 = vpop.permute.xlu0 %4295
        %v4298 = vmul.f32 %v4284, %v4274
        %v4299 = vmul.f32 %v4284, %v4275
        %v4300 = vmul.f32 %v4288, %v4276
        %v4301 = vmul.f32 %v4288, %v4277
        %v4302 = vmul.f32 %v4292, %v4278
        %v4303 = vmul.f32 %v4292, %v4279
        %v4304 = vmul.f32 %v4296, %v4280
        %v4305 = vmul.f32 %v4296, %v4281
        %v4306 = vadd.f32 %v4229, %v4298
        %v4307 = vadd.f32 %v4230, %v4299
        %v4308 = vadd.f32 %v4231, %v4300
        %v4309 = vadd.f32 %v4232, %v4301
        %v4310 = vadd.f32 %v4233, %v4302
        %v4311 = vadd.f32 %v4234, %v4303
        %v4312 = vadd.f32 %v4235, %v4304
        %v4313 = vadd.f32 %v4236, %v4305
        %4314 = vrot.lane.b32.xlu0 %v2948, 111
        %v4315 = vpop.permute.xlu0 %4314
        %4316 = vrot.lane.b32.xlu0 %v2950, 111
        %v4317 = vpop.permute.xlu0 %4316
        %4318 = vrot.lane.b32.xlu0 %v2952, 111
        %v4319 = vpop.permute.xlu0 %4318
        %4320 = vrot.lane.b32.xlu0 %v2954, 111
        %v4321 = vpop.permute.xlu0 %4320
        %4322 = vrot.lane.b32.xlu0 %v2949, 111
        %v4323 = vpop.permute.xlu0 %4322
        %4324 = vrot.lane.b32.xlu0 %v2951, 111
        %v4325 = vpop.permute.xlu0 %4324
        %4326 = vrot.lane.b32.xlu0 %v2953, 111
        %v4327 = vpop.permute.xlu0 %4326
        %4328 = vrot.lane.b32.xlu0 %v2955, 111
        %v4329 = vpop.permute.xlu0 %4328
        %v4330 = vsel %vm1052, %v4315, %v4323
        %v4331 = vsel %vm1052, %v4317, %v4325
        %v4332 = vsel %vm1052, %v4319, %v4327
        %v4333 = vsel %vm1052, %v4321, %v4329
        %v4334 = vsel %vm1052, %v4323, %v4315
        %v4335 = vsel %vm1052, %v4325, %v4317
        %v4336 = vsel %vm1052, %v4327, %v4319
        %v4337 = vsel %vm1052, %v4329, %v4321
        %s4338 = scalar_lea.vmem [#allocation4], 34
        %v4339 = vld [vmem:[%s4338] ss:$8 sm:$0x3]
        %v4341 = vlaneseq
        %v4342 = vshrl.u32 %v4341, 7
        %v4343 = vsub.s32 0, %v4342
        %v4344 = vrot.slane %v4339, %v4343
        %v4345 = vlaneseq
        %v4346 = vshrl.u32 %v4345, 7
        %v4347 = vsub.s32 1, %v4346
        %v4348 = vrot.slane %v4339, %v4347
        %v4351 = vmul.f32 %v4330, %v4344
        %v4352 = vmul.f32 %v4334, %v4348
        %v4353 = vmul.f32 %v4331, %v4344
        %v4354 = vmul.f32 %v4335, %v4348
        %v4355 = vmul.f32 %v4332, %v4344
        %v4356 = vmul.f32 %v4336, %v4348
        %v4357 = vmul.f32 %v4333, %v4344
        %v4358 = vmul.f32 %v4337, %v4348
        %4359 = vset.pattern.permute.xlu0 18
        %4360 = vperm.xlu0 %4359, %v3001
        %v4361 = vpop.permute.xlu0 %4360
        %4363 = vset.pattern.permute.xlu0 18
        %4364 = vperm.xlu0 %4363, %v3002
        %v4365 = vpop.permute.xlu0 %4364
        %4367 = vset.pattern.permute.xlu0 18
        %4368 = vperm.xlu0 %4367, %v3003
        %v4369 = vpop.permute.xlu0 %4368
        %4371 = vset.pattern.permute.xlu0 18
        %4372 = vperm.xlu0 %4371, %v3004
        %v4373 = vpop.permute.xlu0 %4372
        %v4375 = vmul.f32 %v4361, %v4351
        %v4376 = vmul.f32 %v4361, %v4352
        %v4377 = vmul.f32 %v4365, %v4353
        %v4378 = vmul.f32 %v4365, %v4354
        %v4379 = vmul.f32 %v4369, %v4355
        %v4380 = vmul.f32 %v4369, %v4356
        %v4381 = vmul.f32 %v4373, %v4357
        %v4382 = vmul.f32 %v4373, %v4358
        %v4383 = vadd.f32 %v4306, %v4375
        %v4384 = vadd.f32 %v4307, %v4376
        %v4385 = vadd.f32 %v4308, %v4377
        %v4386 = vadd.f32 %v4309, %v4378
        %v4387 = vadd.f32 %v4310, %v4379
        %v4388 = vadd.f32 %v4311, %v4380
        %v4389 = vadd.f32 %v4312, %v4381
        %v4390 = vadd.f32 %v4313, %v4382
        %4391 = vrot.lane.b32.xlu0 %v2948, 110
        %v4392 = vpop.permute.xlu0 %4391
        %4393 = vrot.lane.b32.xlu0 %v2950, 110
        %v4394 = vpop.permute.xlu0 %4393
        %4395 = vrot.lane.b32.xlu0 %v2952, 110
        %v4396 = vpop.permute.xlu0 %4395
        %4397 = vrot.lane.b32.xlu0 %v2954, 110
        %v4398 = vpop.permute.xlu0 %4397
        %4399 = vrot.lane.b32.xlu0 %v2949, 110
        %v4400 = vpop.permute.xlu0 %4399
        %4401 = vrot.lane.b32.xlu0 %v2951, 110
        %v4402 = vpop.permute.xlu0 %4401
        %4403 = vrot.lane.b32.xlu0 %v2953, 110
        %v4404 = vpop.permute.xlu0 %4403
        %4405 = vrot.lane.b32.xlu0 %v2955, 110
        %v4406 = vpop.permute.xlu0 %4405
        %vm4407 = vcmp.lt.s32.totalorder %v766, 110
        %v4408 = vsel %vm4407, %v4392, %v4400
        %v4409 = vsel %vm4407, %v4394, %v4402
        %v4410 = vsel %vm4407, %v4396, %v4404
        %v4411 = vsel %vm4407, %v4398, %v4406
        %v4412 = vsel %vm4407, %v4400, %v4392
        %v4413 = vsel %vm4407, %v4402, %v4394
        %v4414 = vsel %vm4407, %v4404, %v4396
        %v4415 = vsel %vm4407, %v4406, %v4398
        %s4416 = scalar_lea.vmem [#allocation4], 35
        %v4417 = vld [vmem:[%s4416] ss:$8 sm:$0x3]
        %v4419 = vlaneseq
        %v4420 = vshrl.u32 %v4419, 7
        %v4421 = vsub.s32 0, %v4420
        %v4422 = vrot.slane %v4417, %v4421
        %v4423 = vlaneseq
        %v4424 = vshrl.u32 %v4423, 7
        %v4425 = vsub.s32 1, %v4424
        %v4426 = vrot.slane %v4417, %v4425
        %v4429 = vmul.f32 %v4408, %v4422
        %v4430 = vmul.f32 %v4412, %v4426
        %v4431 = vmul.f32 %v4409, %v4422
        %v4432 = vmul.f32 %v4413, %v4426
        %v4433 = vmul.f32 %v4410, %v4422
        %v4434 = vmul.f32 %v4414, %v4426
        %v4435 = vmul.f32 %v4411, %v4422
        %v4436 = vmul.f32 %v4415, %v4426
        %4437 = vset.pattern.permute.xlu0 19
        %4438 = vperm.xlu0 %4437, %v3001
        %v4439 = vpop.permute.xlu0 %4438
        %4441 = vset.pattern.permute.xlu0 19
        %4442 = vperm.xlu0 %4441, %v3002
        %v4443 = vpop.permute.xlu0 %4442
        %4445 = vset.pattern.permute.xlu0 19
        %4446 = vperm.xlu0 %4445, %v3003
        %v4447 = vpop.permute.xlu0 %4446
        %4449 = vset.pattern.permute.xlu0 19
        %4450 = vperm.xlu0 %4449, %v3004
        %v4451 = vpop.permute.xlu0 %4450
        %v4453 = vmul.f32 %v4439, %v4429
        %v4454 = vmul.f32 %v4439, %v4430
        %v4455 = vmul.f32 %v4443, %v4431
        %v4456 = vmul.f32 %v4443, %v4432
        %v4457 = vmul.f32 %v4447, %v4433
        %v4458 = vmul.f32 %v4447, %v4434
        %v4459 = vmul.f32 %v4451, %v4435
        %v4460 = vmul.f32 %v4451, %v4436
        %v4461 = vadd.f32 %v4383, %v4453
        %v4462 = vadd.f32 %v4384, %v4454
        %v4463 = vadd.f32 %v4385, %v4455
        %v4464 = vadd.f32 %v4386, %v4456
        %v4465 = vadd.f32 %v4387, %v4457
        %v4466 = vadd.f32 %v4388, %v4458
        %v4467 = vadd.f32 %v4389, %v4459
        %v4468 = vadd.f32 %v4390, %v4460
        %4469 = vrot.lane.b32.xlu0 %v2948, 98
        %v4470 = vpop.permute.xlu0 %4469
        %4471 = vrot.lane.b32.xlu0 %v2950, 98
        %v4472 = vpop.permute.xlu0 %4471
        %4473 = vrot.lane.b32.xlu0 %v2952, 98
        %v4474 = vpop.permute.xlu0 %4473
        %4475 = vrot.lane.b32.xlu0 %v2954, 98
        %v4476 = vpop.permute.xlu0 %4475
        %4477 = vrot.lane.b32.xlu0 %v2949, 98
        %v4478 = vpop.permute.xlu0 %4477
        %4479 = vrot.lane.b32.xlu0 %v2951, 98
        %v4480 = vpop.permute.xlu0 %4479
        %4481 = vrot.lane.b32.xlu0 %v2953, 98
        %v4482 = vpop.permute.xlu0 %4481
        %4483 = vrot.lane.b32.xlu0 %v2955, 98
        %v4484 = vpop.permute.xlu0 %4483
        %vm4485 = vcmp.lt.s32.totalorder %v766, 98
        %v4486 = vsel %vm4485, %v4470, %v4478
        %v4487 = vsel %vm4485, %v4472, %v4480
        %v4488 = vsel %vm4485, %v4474, %v4482
        %v4489 = vsel %vm4485, %v4476, %v4484
        %v4490 = vsel %vm4485, %v4478, %v4470
        %v4491 = vsel %vm4485, %v4480, %v4472
        %v4492 = vsel %vm4485, %v4482, %v4474
        %v4493 = vsel %vm4485, %v4484, %v4476
        %s4494 = scalar_lea.vmem [#allocation4], 36
        %v4495 = vld [vmem:[%s4494] ss:$8 sm:$0x3]
        %v4497 = vlaneseq
        %v4498 = vshrl.u32 %v4497, 7
        %v4499 = vsub.s32 0, %v4498
        %v4500 = vrot.slane %v4495, %v4499
        %v4501 = vlaneseq
        %v4502 = vshrl.u32 %v4501, 7
        %v4503 = vsub.s32 1, %v4502
        %v4504 = vrot.slane %v4495, %v4503
        %v4507 = vmul.f32 %v4486, %v4500
        %v4508 = vmul.f32 %v4490, %v4504
        %v4509 = vmul.f32 %v4487, %v4500
        %v4510 = vmul.f32 %v4491, %v4504
        %v4511 = vmul.f32 %v4488, %v4500
        %v4512 = vmul.f32 %v4492, %v4504
        %v4513 = vmul.f32 %v4489, %v4500
        %v4514 = vmul.f32 %v4493, %v4504
        %4515 = vset.pattern.permute.xlu0 20
        %4516 = vperm.xlu0 %4515, %v3001
        %v4517 = vpop.permute.xlu0 %4516
        %4519 = vset.pattern.permute.xlu0 20
        %4520 = vperm.xlu0 %4519, %v3002
        %v4521 = vpop.permute.xlu0 %4520
        %4523 = vset.pattern.permute.xlu0 20
        %4524 = vperm.xlu0 %4523, %v3003
        %v4525 = vpop.permute.xlu0 %4524
        %4527 = vset.pattern.permute.xlu0 20
        %4528 = vperm.xlu0 %4527, %v3004
        %v4529 = vpop.permute.xlu0 %4528
        %v4531 = vmul.f32 %v4517, %v4507
        %v4532 = vmul.f32 %v4517, %v4508
        %v4533 = vmul.f32 %v4521, %v4509
        %v4534 = vmul.f32 %v4521, %v4510
        %v4535 = vmul.f32 %v4525, %v4511
        %v4536 = vmul.f32 %v4525, %v4512
        %v4537 = vmul.f32 %v4529, %v4513
        %v4538 = vmul.f32 %v4529, %v4514
        %v4539 = vadd.f32 %v4461, %v4531
        %v4540 = vadd.f32 %v4462, %v4532
        %v4541 = vadd.f32 %v4463, %v4533
        %v4542 = vadd.f32 %v4464, %v4534
        %v4543 = vadd.f32 %v4465, %v4535
        %v4544 = vadd.f32 %v4466, %v4536
        %v4545 = vadd.f32 %v4467, %v4537
        %v4546 = vadd.f32 %v4468, %v4538
        %4547 = vrot.lane.b32.xlu0 %v2948, 97
        %v4548 = vpop.permute.xlu0 %4547
        %4549 = vrot.lane.b32.xlu0 %v2950, 97
        %v4550 = vpop.permute.xlu0 %4549
        %4551 = vrot.lane.b32.xlu0 %v2952, 97
        %v4552 = vpop.permute.xlu0 %4551
        %4553 = vrot.lane.b32.xlu0 %v2954, 97
        %v4554 = vpop.permute.xlu0 %4553
        %4555 = vrot.lane.b32.xlu0 %v2949, 97
        %v4556 = vpop.permute.xlu0 %4555
        %4557 = vrot.lane.b32.xlu0 %v2951, 97
        %v4558 = vpop.permute.xlu0 %4557
        %4559 = vrot.lane.b32.xlu0 %v2953, 97
        %v4560 = vpop.permute.xlu0 %4559
        %4561 = vrot.lane.b32.xlu0 %v2955, 97
        %v4562 = vpop.permute.xlu0 %4561
        %vm4563 = vcmp.lt.s32.totalorder %v766, 97
        %v4564 = vsel %vm4563, %v4548, %v4556
        %v4565 = vsel %vm4563, %v4550, %v4558
        %v4566 = vsel %vm4563, %v4552, %v4560
        %v4567 = vsel %vm4563, %v4554, %v4562
        %v4568 = vsel %vm4563, %v4556, %v4548
        %v4569 = vsel %vm4563, %v4558, %v4550
        %v4570 = vsel %vm4563, %v4560, %v4552
        %v4571 = vsel %vm4563, %v4562, %v4554
        %s4572 = scalar_lea.vmem [#allocation4], 37
        %v4573 = vld [vmem:[%s4572] ss:$8 sm:$0x3]
        %v4575 = vlaneseq
        %v4576 = vshrl.u32 %v4575, 7
        %v4577 = vsub.s32 0, %v4576
        %v4578 = vrot.slane %v4573, %v4577
        %v4579 = vlaneseq
        %v4580 = vshrl.u32 %v4579, 7
        %v4581 = vsub.s32 1, %v4580
        %v4582 = vrot.slane %v4573, %v4581
        %v4585 = vmul.f32 %v4564, %v4578
        %v4586 = vmul.f32 %v4568, %v4582
        %v4587 = vmul.f32 %v4565, %v4578
        %v4588 = vmul.f32 %v4569, %v4582
        %v4589 = vmul.f32 %v4566, %v4578
        %v4590 = vmul.f32 %v4570, %v4582
        %v4591 = vmul.f32 %v4567, %v4578
        %v4592 = vmul.f32 %v4571, %v4582
        %4593 = vset.pattern.permute.xlu0 21
        %4594 = vperm.xlu0 %4593, %v3001
        %v4595 = vpop.permute.xlu0 %4594
        %4597 = vset.pattern.permute.xlu0 21
        %4598 = vperm.xlu0 %4597, %v3002
        %v4599 = vpop.permute.xlu0 %4598
        %4601 = vset.pattern.permute.xlu0 21
        %4602 = vperm.xlu0 %4601, %v3003
        %v4603 = vpop.permute.xlu0 %4602
        %4605 = vset.pattern.permute.xlu0 21
        %4606 = vperm.xlu0 %4605, %v3004
        %v4607 = vpop.permute.xlu0 %4606
        %v4609 = vmul.f32 %v4595, %v4585
        %v4610 = vmul.f32 %v4595, %v4586
        %v4611 = vmul.f32 %v4599, %v4587
        %v4612 = vmul.f32 %v4599, %v4588
        %v4613 = vmul.f32 %v4603, %v4589
        %v4614 = vmul.f32 %v4603, %v4590
        %v4615 = vmul.f32 %v4607, %v4591
        %v4616 = vmul.f32 %v4607, %v4592
        %v4617 = vadd.f32 %v4539, %v4609
        %v4618 = vadd.f32 %v4540, %v4610
        %v4619 = vadd.f32 %v4541, %v4611
        %v4620 = vadd.f32 %v4542, %v4612
        %v4621 = vadd.f32 %v4543, %v4613
        %v4622 = vadd.f32 %v4544, %v4614
        %v4623 = vadd.f32 %v4545, %v4615
        %v4624 = vadd.f32 %v4546, %v4616
        %4625 = vrot.lane.b32.xlu0 %v2948, 96
        %v4626 = vpop.permute.xlu0 %4625
        %4627 = vrot.lane.b32.xlu0 %v2950, 96
        %v4628 = vpop.permute.xlu0 %4627
        %4629 = vrot.lane.b32.xlu0 %v2952, 96
        %v4630 = vpop.permute.xlu0 %4629
        %4631 = vrot.lane.b32.xlu0 %v2954, 96
        %v4632 = vpop.permute.xlu0 %4631
        %4633 = vrot.lane.b32.xlu0 %v2949, 96
        %v4634 = vpop.permute.xlu0 %4633
        %4635 = vrot.lane.b32.xlu0 %v2951, 96
        %v4636 = vpop.permute.xlu0 %4635
        %4637 = vrot.lane.b32.xlu0 %v2953, 96
        %v4638 = vpop.permute.xlu0 %4637
        %4639 = vrot.lane.b32.xlu0 %v2955, 96
        %v4640 = vpop.permute.xlu0 %4639
        %vm4641 = vcmp.lt.s32.totalorder %v766, 96
        %v4642 = vsel %vm4641, %v4626, %v4634
        %v4643 = vsel %vm4641, %v4628, %v4636
        %v4644 = vsel %vm4641, %v4630, %v4638
        %v4645 = vsel %vm4641, %v4632, %v4640
        %v4646 = vsel %vm4641, %v4634, %v4626
        %v4647 = vsel %vm4641, %v4636, %v4628
        %v4648 = vsel %vm4641, %v4638, %v4630
        %v4649 = vsel %vm4641, %v4640, %v4632
        %s4650 = scalar_lea.vmem [#allocation4], 38
        %v4651 = vld [vmem:[%s4650] ss:$8 sm:$0x3]
        %v4653 = vlaneseq
        %v4654 = vshrl.u32 %v4653, 7
        %v4655 = vsub.s32 0, %v4654
        %v4656 = vrot.slane %v4651, %v4655
        %v4657 = vlaneseq
        %v4658 = vshrl.u32 %v4657, 7
        %v4659 = vsub.s32 1, %v4658
        %v4660 = vrot.slane %v4651, %v4659
        %v4663 = vmul.f32 %v4642, %v4656
        %v4664 = vmul.f32 %v4646, %v4660
        %v4665 = vmul.f32 %v4643, %v4656
        %v4666 = vmul.f32 %v4647, %v4660
        %v4667 = vmul.f32 %v4644, %v4656
        %v4668 = vmul.f32 %v4648, %v4660
        %v4669 = vmul.f32 %v4645, %v4656
        %v4670 = vmul.f32 %v4649, %v4660
        %4671 = vset.pattern.permute.xlu0 22
        %4672 = vperm.xlu0 %4671, %v3001
        %v4673 = vpop.permute.xlu0 %4672
        %4675 = vset.pattern.permute.xlu0 22
        %4676 = vperm.xlu0 %4675, %v3002
        %v4677 = vpop.permute.xlu0 %4676
        %4679 = vset.pattern.permute.xlu0 22
        %4680 = vperm.xlu0 %4679, %v3003
        %v4681 = vpop.permute.xlu0 %4680
        %4683 = vset.pattern.permute.xlu0 22
        %4684 = vperm.xlu0 %4683, %v3004
        %v4685 = vpop.permute.xlu0 %4684
        %v4687 = vmul.f32 %v4673, %v4663
        %v4688 = vmul.f32 %v4673, %v4664
        %v4689 = vmul.f32 %v4677, %v4665
        %v4690 = vmul.f32 %v4677, %v4666
        %v4691 = vmul.f32 %v4681, %v4667
        %v4692 = vmul.f32 %v4681, %v4668
        %v4693 = vmul.f32 %v4685, %v4669
        %v4694 = vmul.f32 %v4685, %v4670
        %v4695 = vadd.f32 %v4617, %v4687
        %v4696 = vadd.f32 %v4618, %v4688
        %v4697 = vadd.f32 %v4619, %v4689
        %v4698 = vadd.f32 %v4620, %v4690
        %v4699 = vadd.f32 %v4621, %v4691
        %v4700 = vadd.f32 %v4622, %v4692
        %v4701 = vadd.f32 %v4623, %v4693
        %v4702 = vadd.f32 %v4624, %v4694
        %4703 = vrot.lane.b32.xlu0 %v2948, 95
        %v4704 = vpop.permute.xlu0 %4703
        %4705 = vrot.lane.b32.xlu0 %v2950, 95
        %v4706 = vpop.permute.xlu0 %4705
        %4707 = vrot.lane.b32.xlu0 %v2952, 95
        %v4708 = vpop.permute.xlu0 %4707
        %4709 = vrot.lane.b32.xlu0 %v2954, 95
        %v4710 = vpop.permute.xlu0 %4709
        %4711 = vrot.lane.b32.xlu0 %v2949, 95
        %v4712 = vpop.permute.xlu0 %4711
        %4713 = vrot.lane.b32.xlu0 %v2951, 95
        %v4714 = vpop.permute.xlu0 %4713
        %4715 = vrot.lane.b32.xlu0 %v2953, 95
        %v4716 = vpop.permute.xlu0 %4715
        %4717 = vrot.lane.b32.xlu0 %v2955, 95
        %v4718 = vpop.permute.xlu0 %4717
        %vm4719 = vcmp.lt.s32.totalorder %v766, 95
        %v4720 = vsel %vm4719, %v4704, %v4712
        %v4721 = vsel %vm4719, %v4706, %v4714
        %v4722 = vsel %vm4719, %v4708, %v4716
        %v4723 = vsel %vm4719, %v4710, %v4718
        %v4724 = vsel %vm4719, %v4712, %v4704
        %v4725 = vsel %vm4719, %v4714, %v4706
        %v4726 = vsel %vm4719, %v4716, %v4708
        %v4727 = vsel %vm4719, %v4718, %v4710
        %s4728 = scalar_lea.vmem [#allocation4], 39
        %v4729 = vld [vmem:[%s4728] ss:$8 sm:$0x3]
        %v4731 = vlaneseq
        %v4732 = vshrl.u32 %v4731, 7
        %v4733 = vsub.s32 0, %v4732
        %v4734 = vrot.slane %v4729, %v4733
        %v4735 = vlaneseq
        %v4736 = vshrl.u32 %v4735, 7
        %v4737 = vsub.s32 1, %v4736
        %v4738 = vrot.slane %v4729, %v4737
        %v4741 = vmul.f32 %v4720, %v4734
        %v4742 = vmul.f32 %v4724, %v4738
        %v4743 = vmul.f32 %v4721, %v4734
        %v4744 = vmul.f32 %v4725, %v4738
        %v4745 = vmul.f32 %v4722, %v4734
        %v4746 = vmul.f32 %v4726, %v4738
        %v4747 = vmul.f32 %v4723, %v4734
        %v4748 = vmul.f32 %v4727, %v4738
        %4749 = vset.pattern.permute.xlu0 23
        %4750 = vperm.xlu0 %4749, %v3001
        %v4751 = vpop.permute.xlu0 %4750
        %4753 = vset.pattern.permute.xlu0 23
        %4754 = vperm.xlu0 %4753, %v3002
        %v4755 = vpop.permute.xlu0 %4754
        %4757 = vset.pattern.permute.xlu0 23
        %4758 = vperm.xlu0 %4757, %v3003
        %v4759 = vpop.permute.xlu0 %4758
        %4761 = vset.pattern.permute.xlu0 23
        %4762 = vperm.xlu0 %4761, %v3004
        %v4763 = vpop.permute.xlu0 %4762
        %v4765 = vmul.f32 %v4751, %v4741
        %v4766 = vmul.f32 %v4751, %v4742
        %v4767 = vmul.f32 %v4755, %v4743
        %v4768 = vmul.f32 %v4755, %v4744
        %v4769 = vmul.f32 %v4759, %v4745
        %v4770 = vmul.f32 %v4759, %v4746
        %v4771 = vmul.f32 %v4763, %v4747
        %v4772 = vmul.f32 %v4763, %v4748
        %v4773 = vadd.f32 %v4695, %v4765
        %v4774 = vadd.f32 %v4696, %v4766
        %v4775 = vadd.f32 %v4697, %v4767
        %v4776 = vadd.f32 %v4698, %v4768
        %v4777 = vadd.f32 %v4699, %v4769
        %v4778 = vadd.f32 %v4700, %v4770
        %v4779 = vadd.f32 %v4701, %v4771
        %v4780 = vadd.f32 %v4702, %v4772
        %4781 = vrot.lane.b32.xlu0 %v2948, 94
        %v4782 = vpop.permute.xlu0 %4781
        %4783 = vrot.lane.b32.xlu0 %v2950, 94
        %v4784 = vpop.permute.xlu0 %4783
        %4785 = vrot.lane.b32.xlu0 %v2952, 94
        %v4786 = vpop.permute.xlu0 %4785
        %4787 = vrot.lane.b32.xlu0 %v2954, 94
        %v4788 = vpop.permute.xlu0 %4787
        %4789 = vrot.lane.b32.xlu0 %v2949, 94
        %v4790 = vpop.permute.xlu0 %4789
        %4791 = vrot.lane.b32.xlu0 %v2951, 94
        %v4792 = vpop.permute.xlu0 %4791
        %4793 = vrot.lane.b32.xlu0 %v2953, 94
        %v4794 = vpop.permute.xlu0 %4793
        %4795 = vrot.lane.b32.xlu0 %v2955, 94
        %v4796 = vpop.permute.xlu0 %4795
        %vm4797 = vcmp.lt.s32.totalorder %v766, 94
        %v4798 = vsel %vm4797, %v4782, %v4790
        %v4799 = vsel %vm4797, %v4784, %v4792
        %v4800 = vsel %vm4797, %v4786, %v4794
        %v4801 = vsel %vm4797, %v4788, %v4796
        %v4802 = vsel %vm4797, %v4790, %v4782
        %v4803 = vsel %vm4797, %v4792, %v4784
        %v4804 = vsel %vm4797, %v4794, %v4786
        %v4805 = vsel %vm4797, %v4796, %v4788
        %s4806 = scalar_lea.vmem [#allocation4], 48
        %v4807 = vld [vmem:[%s4806] ss:$8 sm:$0x3]
        %v4809 = vlaneseq
        %v4810 = vshrl.u32 %v4809, 7
        %v4811 = vsub.s32 0, %v4810
        %v4812 = vrot.slane %v4807, %v4811
        %v4813 = vlaneseq
        %v4814 = vshrl.u32 %v4813, 7
        %v4815 = vsub.s32 1, %v4814
        %v4816 = vrot.slane %v4807, %v4815
        %v4819 = vmul.f32 %v4798, %v4812
        %v4820 = vmul.f32 %v4802, %v4816
        %v4821 = vmul.f32 %v4799, %v4812
        %v4822 = vmul.f32 %v4803, %v4816
        %v4823 = vmul.f32 %v4800, %v4812
        %v4824 = vmul.f32 %v4804, %v4816
        %v4825 = vmul.f32 %v4801, %v4812
        %v4826 = vmul.f32 %v4805, %v4816
        %4827 = vset.pattern.permute.xlu0 24
        %4828 = vperm.xlu0 %4827, %v3001
        %v4829 = vpop.permute.xlu0 %4828
        %4831 = vset.pattern.permute.xlu0 24
        %4832 = vperm.xlu0 %4831, %v3002
        %v4833 = vpop.permute.xlu0 %4832
        %4835 = vset.pattern.permute.xlu0 24
        %4836 = vperm.xlu0 %4835, %v3003
        %v4837 = vpop.permute.xlu0 %4836
        %4839 = vset.pattern.permute.xlu0 24
        %4840 = vperm.xlu0 %4839, %v3004
        %v4841 = vpop.permute.xlu0 %4840
        %v4843 = vmul.f32 %v4829, %v4819
        %v4844 = vmul.f32 %v4829, %v4820
        %v4845 = vmul.f32 %v4833, %v4821
        %v4846 = vmul.f32 %v4833, %v4822
        %v4847 = vmul.f32 %v4837, %v4823
        %v4848 = vmul.f32 %v4837, %v4824
        %v4849 = vmul.f32 %v4841, %v4825
        %v4850 = vmul.f32 %v4841, %v4826
        %v4851 = vadd.f32 %v4773, %v4843
        %v4852 = vadd.f32 %v4774, %v4844
        %v4853 = vadd.f32 %v4775, %v4845
        %v4854 = vadd.f32 %v4776, %v4846
        %v4855 = vadd.f32 %v4777, %v4847
        %v4856 = vadd.f32 %v4778, %v4848
        %v4857 = vadd.f32 %v4779, %v4849
        %v4858 = vadd.f32 %v4780, %v4850
        %v4859 = vmax.f32 %v4851, 0.0
        %v4860 = vmax.f32 %v4852, 0.0
        %v4861 = vmax.f32 %v4853, 0.0
        %v4862 = vmax.f32 %v4854, 0.0
        %v4863 = vmax.f32 %v4855, 0.0
        %v4864 = vmax.f32 %v4856, 0.0
        %v4865 = vmax.f32 %v4857, 0.0
        %v4866 = vmax.f32 %v4858, 0.0
        %v4867 = vld [vmem:[#allocation18] sm:$0xff]
        %v4868 = vld [vmem:[#allocation18 + $0x8] sm:$0xff]
        %v4869 = vld [vmem:[#allocation18 + $0x10] sm:$0xff]
        %v4870 = vld [vmem:[#allocation18 + $0x18] sm:$0xff]
        %v4871 = vpack.c.bf16 %v4868, %v4867
        %v4872 = vpack.c.bf16 %v4870, %v4869
        %v4873 = vpack.c.bf16 %v4861, %v4859
        %v4874 = vpack.c.bf16 %v4862, %v4860
        %v4875 = vpack.c.bf16 %v4865, %v4863
        %v4876 = vpack.c.bf16 %v4866, %v4864
        %vm4877 = vcmask 261120
        %v4879 = vsel %vm4877, %v4871, 0
        %v4882 = vsel %vm4877, %v4872, 0
        %4884 = vmatprep.subr.bf16.mxu0 %v4874
        %4885 = vmatpush1.bf16.msra.mxu0 %v4873
        %4886 = vmatprep.subr.bf16.mxu0 %v4876
        %4887 = vmatpush1.bf16.msra.mxu0 %v4875
        %4888 = vmatprep.subr.bf16.mxu0 0
        %4889 = vmatpush1.bf16.msra.mxu0 0
        %4890 = vmatprep.subr.bf16.mxu0 0
        %4891 = vmatpush1.bf16.msra.mxu0 0
        %4892 = vmatprep.subr.bf16.mxu0 0
        %4893 = vmatpush1.bf16.msra.mxu0 0
        %4894 = vmatprep.subr.bf16.mxu0 0
        %4895 = vmatpush1.bf16.msra.mxu0 0
        %4896 = vmatprep.subr.bf16.mxu0 0
        %4897 = vmatpush1.bf16.msra.mxu0 0
        %4898 = vmatprep.subr.bf16.mxu0 0
        %4899 = vmatpush1.bf16.msra.mxu0 0
        %4900 = vmatprep.subr.bf16.mxu0 0
        %4901 = vmatpush1.bf16.msra.mxu0 0
        %4902 = vmatprep.subr.bf16.mxu0 0
        %4903 = vmatpush1.bf16.msra.mxu0 0
        %4904 = vmatprep.subr.bf16.mxu0 0
        %4905 = vmatpush1.bf16.msra.mxu0 0
        %4906 = vmatprep.subr.bf16.mxu0 0
        %4907 = vmatpush1.bf16.msra.mxu0 0
        %4908 = vmatprep.subr.bf16.mxu0 0
        %4909 = vmatpush1.bf16.msra.mxu0 0
        %4910 = vmatprep.subr.bf16.mxu0 0
        %4911 = vmatpush1.bf16.msra.mxu0 0
        %4912 = vmatprep.subr.bf16.mxu0 0
        %4913 = vmatpush1.bf16.msra.mxu0 0
        %4914 = vmatprep.subr.bf16.mxu0 0
        %4915 = vmatpush1.bf16.msra.mxu0 0
        %4916 = vmatprep.mubr.bf16.mxu0 0
        %4917 = vmatmul.mubr.bf16.gmra.mrb[0].mxu0 %v4879
        %v4918 = vpop.f32.mrb[0].mxu0
        %v4919 = vadd.f32 0.0, %v4918
        %v4920 = vpop.f32.mrb[0].mxu0
        %v4921 = vadd.f32 0.0, %v4920
        %v4922 = vpop.f32.mrb[0].mxu0
        %v4923 = vadd.f32 0.0, %v4922
        %v4924 = vpop.f32.mrb[0].mxu0
        %v4925 = vadd.f32 0.0, %v4924
        %4926 = vmatprep.mubr.bf16.mxu0 0
        %4927 = vmatmul.mubr.bf16.gmra.mrb[0].mxu0 %v4882
        %v4928 = vpop.f32.mrb[0].mxu0
        %v4929 = vadd.f32 0.0, %v4928
        %v4930 = vpop.f32.mrb[0].mxu0
        %v4931 = vadd.f32 0.0, %v4930
        %v4932 = vpop.f32.mrb[0].mxu0
        %v4933 = vadd.f32 0.0, %v4932
        %v4934 = vpop.f32.mrb[0].mxu0
        %v4935 = vadd.f32 0.0, %v4934
        %4936 = vdwg.mxu0
        %v4937 = vadd.f32 %v4919, %v4921
        %4938 = vadd.xlane.f32.xlu0 %v4937
        %v4939 = vpop.xlane.xlu0 %4938
        %v4940 = vadd.f32 %v4923, %v4925
        %4941 = vadd.xlane.f32.xlu0 %v4940
        %v4942 = vpop.xlane.xlu0 %4941
        %v4943 = vadd.f32 %v4929, %v4931
        %4944 = vadd.xlane.f32.xlu0 %v4943
        %v4945 = vpop.xlane.xlu0 %4944
        %v4946 = vadd.f32 %v4933, %v4935
        %4947 = vadd.xlane.f32.xlu0 %v4946
        %v4948 = vpop.xlane.xlu0 %4947
        %v4949 = vmul.f32 %v4939, 0.00390625
        %v4950 = vmul.f32 %v4942, 0.00390625
        %v4951 = vmul.f32 %v4945, 0.00390625
        %v4952 = vmul.f32 %v4948, 0.00390625
        %v4953 = vld [vmem:[#allocation19] sm:$0xff]
        %v4955 = vsel %vm4877, %v4953, 0
        %4957 = vmatprep.subr.mxu0 %v4949
        %4958 = vmatpush1.msra.mxu0 %v4949
        %4959 = vmatprep.subr.mxu0 %v4950
        %4960 = vmatpush1.msra.mxu0 %v4950
        %4961 = vmatprep.subr.mxu0 %v4951
        %4962 = vmatpush1.msra.mxu0 %v4951
        %4963 = vmatprep.subr.mxu0 %v4952
        %4964 = vmatpush1.msra.mxu0 %v4952
        %4965 = vmatprep.subr.mxu0 0.0
        %4966 = vmatpush1.msra.mxu0 0.0
        %4967 = vmatprep.subr.mxu0 0.0
        %4968 = vmatpush1.msra.mxu0 0.0
        %4969 = vmatprep.subr.mxu0 0.0
        %4970 = vmatpush1.msra.mxu0 0.0
        %4971 = vmatprep.subr.mxu0 0.0
        %4972 = vmatpush1.msra.mxu0 0.0
        %4973 = vmatprep.subr.mxu0 0.0
        %4974 = vmatpush1.msra.mxu0 0.0
        %4975 = vmatprep.subr.mxu0 0.0
        %4976 = vmatpush1.msra.mxu0 0.0
        %4977 = vmatprep.subr.mxu0 0.0
        %4978 = vmatpush1.msra.mxu0 0.0
        %4979 = vmatprep.subr.mxu0 0.0
        %4980 = vmatpush1.msra.mxu0 0.0
        %4981 = vmatprep.subr.mxu0 0.0
        %4982 = vmatpush1.msra.mxu0 0.0
        %4983 = vmatprep.subr.mxu0 0.0
        %4984 = vmatpush1.msra.mxu0 0.0
        %4985 = vmatprep.subr.mxu0 0.0
        %4986 = vmatpush1.msra.mxu0 0.0
        %4987 = vmatprep.subr.mxu0 0.0
        %4988 = vmatpush1.msra.mxu0 0.0
        %4989 = vmatprep.subr.mxu0 0.0
        %4990 = vmatpush1.msra.mxu0 0.0
        %4991 = vmatprep.subr.mxu0 0.0
        %4992 = vmatpush1.msra.mxu0 0.0
        %4993 = vmatprep.subr.mxu0 0.0
        %4994 = vmatpush1.msra.mxu0 0.0
        %4995 = vmatprep.subr.mxu0 0.0
        %4996 = vmatpush1.msra.mxu0 0.0
        %4997 = vmatprep.subr.mxu0 0.0
        %4998 = vmatpush1.msra.mxu0 0.0
        %4999 = vmatprep.subr.mxu0 0.0
        %5000 = vmatpush1.msra.mxu0 0.0
        %5001 = vmatprep.subr.mxu0 0.0
        %5002 = vmatpush1.msra.mxu0 0.0
        %5003 = vmatprep.subr.mxu0 0.0
        %5004 = vmatpush1.msra.mxu0 0.0
        %5005 = vmatprep.subr.mxu0 0.0
        %5006 = vmatpush1.msra.mxu0 0.0
        %5007 = vmatprep.subr.mxu0 0.0
        %5008 = vmatpush1.msra.mxu0 0.0
        %5009 = vmatprep.subr.mxu0 0.0
        %5010 = vmatpush1.msra.mxu0 0.0
        %5011 = vmatprep.subr.mxu0 0.0
        %5012 = vmatpush1.msra.mxu0 0.0
        %5013 = vmatprep.subr.mxu0 0.0
        %5014 = vmatpush1.msra.mxu0 0.0
        %5015 = vmatprep.subr.mxu0 0.0
        %5016 = vmatpush1.msra.mxu0 0.0
        %5017 = vmatprep.subr.mxu0 0.0
        %5018 = vmatpush1.msra.mxu0 0.0
        %5019 = vmatprep.subr.mxu0 0.0
        %5020 = vmatpush1.msra.mxu0 0.0
        %5021 = vmatprep.mubr.f32.mxu0 0.0
        %5022 = vmatmul.mubr.f32.gmra.mrb[0].mxu0 %v4955
        %v5023 = vpop.f32.mrb[0].mxu0
        %v5024 = vadd.f32 0.0, %v5023
        %v5025 = vpop.f32.mrb[0].mxu0
        %v5026 = vadd.f32 0.0, %v5025
        %5027 = vdwg.mxu0
        %v5028 = vmax.f32 %v5024, 0.0
        %v5029 = vmax.f32 %v5026, 0.0
        %v5030 = vld [vmem:[#allocation21] sm:$0xff]
        %v5031 = vld [vmem:[#allocation21 + $0x8] sm:$0xff]
        %v5032 = vld [vmem:[#allocation21 + $0x10] sm:$0xff]
        %v5033 = vld [vmem:[#allocation21 + $0x18] sm:$0xff]
        %vm5034 = vcmask 64512
        %v5036 = vsel %vm5034, %v5030, 0
        %v5039 = vsel %vm5034, %v5031, 0
        %v5042 = vsel %vm5034, %v5032, 0
        %v5045 = vsel %vm5034, %v5033, 0
        %5047 = vmatprep.subr.mxu0 %v5029
        %5048 = vmatpush1.msra.mxu0 %v5028
        %5049 = vmatprep.subr.mxu0 0.0
        %5050 = vmatpush1.msra.mxu0 0.0
        %5051 = vmatprep.subr.mxu0 0.0
        %5052 = vmatpush1.msra.mxu0 0.0
        %5053 = vmatprep.subr.mxu0 0.0
        %5054 = vmatpush1.msra.mxu0 0.0
        %5055 = vmatprep.subr.mxu0 0.0
        %5056 = vmatpush1.msra.mxu0 0.0
        %5057 = vmatprep.subr.mxu0 0.0
        %5058 = vmatpush1.msra.mxu0 0.0
        %5059 = vmatprep.subr.mxu0 0.0
        %5060 = vmatpush1.msra.mxu0 0.0
        %5061 = vmatprep.subr.mxu0 0.0
        %5062 = vmatpush1.msra.mxu0 0.0
        %5063 = vmatprep.subr.mxu0 0.0
        %5064 = vmatpush1.msra.mxu0 0.0
        %5065 = vmatprep.subr.mxu0 0.0
        %5066 = vmatpush1.msra.mxu0 0.0
        %5067 = vmatprep.subr.mxu0 0.0
        %5068 = vmatpush1.msra.mxu0 0.0
        %5069 = vmatprep.subr.mxu0 0.0
        %5070 = vmatpush1.msra.mxu0 0.0
        %5071 = vmatprep.subr.mxu0 0.0
        %5072 = vmatpush1.msra.mxu0 0.0
        %5073 = vmatprep.subr.mxu0 0.0
        %5074 = vmatpush1.msra.mxu0 0.0
        %5075 = vmatprep.subr.mxu0 0.0
        %5076 = vmatpush1.msra.mxu0 0.0
        %5077 = vmatprep.subr.mxu0 0.0
        %5078 = vmatpush1.msra.mxu0 0.0
        %5079 = vmatprep.subr.mxu0 0.0
        %5080 = vmatpush1.msra.mxu0 0.0
        %5081 = vmatprep.subr.mxu0 0.0
        %5082 = vmatpush1.msra.mxu0 0.0
        %5083 = vmatprep.subr.mxu0 0.0
        %5084 = vmatpush1.msra.mxu0 0.0
        %5085 = vmatprep.subr.mxu0 0.0
        %5086 = vmatpush1.msra.mxu0 0.0
        %5087 = vmatprep.subr.mxu0 0.0
        %5088 = vmatpush1.msra.mxu0 0.0
        %5089 = vmatprep.subr.mxu0 0.0
        %5090 = vmatpush1.msra.mxu0 0.0
        %5091 = vmatprep.subr.mxu0 0.0
        %5092 = vmatpush1.msra.mxu0 0.0
        %5093 = vmatprep.subr.mxu0 0.0
        %5094 = vmatpush1.msra.mxu0 0.0
        %5095 = vmatprep.subr.mxu0 0.0
        %5096 = vmatpush1.msra.mxu0 0.0
        %5097 = vmatprep.subr.mxu0 0.0
        %5098 = vmatpush1.msra.mxu0 0.0
        %5099 = vmatprep.subr.mxu0 0.0
        %5100 = vmatpush1.msra.mxu0 0.0
        %5101 = vmatprep.subr.mxu0 0.0
        %5102 = vmatpush1.msra.mxu0 0.0
        %5103 = vmatprep.subr.mxu0 0.0
        %5104 = vmatpush1.msra.mxu0 0.0
        %5105 = vmatprep.subr.mxu0 0.0
        %5106 = vmatpush1.msra.mxu0 0.0
        %5107 = vmatprep.subr.mxu0 0.0
        %5108 = vmatpush1.msra.mxu0 0.0
        %5109 = vmatprep.subr.mxu0 0.0
        %5110 = vmatpush1.msra.mxu0 0.0
        %5111 = vmatprep.mubr.f32.mxu0 0.0
        %5112 = vmatmul.mubr.f32.gmra.mrb[0].mxu0 %v5036
        %v5113 = vpop.f32.mrb[0].mxu0
        %v5114 = vadd.f32 3.0, %v5113
        %v5115 = vpop.f32.mrb[0].mxu0
        %v5116 = vadd.f32 3.0, %v5115
        %5117 = vmatprep.mubr.f32.mxu0 0.0
        %5118 = vmatmul.mubr.f32.gmra.mrb[0].mxu0 %v5039
        %v5119 = vpop.f32.mrb[0].mxu0
        %v5120 = vadd.f32 3.0, %v5119
        %v5121 = vpop.f32.mrb[0].mxu0
        %v5122 = vadd.f32 3.0, %v5121
        %5123 = vmatprep.mubr.f32.mxu0 0.0
        %5124 = vmatmul.mubr.f32.gmra.mrb[0].mxu0 %v5042
        %v5125 = vpop.f32.mrb[0].mxu0
        %v5126 = vadd.f32 3.0, %v5125
        %v5127 = vpop.f32.mrb[0].mxu0
        %v5128 = vadd.f32 3.0, %v5127
        %5129 = vmatprep.mubr.f32.mxu0 0.0
        %5130 = vmatmul.mubr.f32.gmra.mrb[0].mxu0 %v5045
        %v5131 = vpop.f32.mrb[0].mxu0
        %v5132 = vadd.f32 3.0, %v5131
        %v5133 = vpop.f32.mrb[0].mxu0
        %v5134 = vadd.f32 3.0, %v5133
        %5135 = vdwg.mxu0
        %v5136 = vmax.f32 %v5114, 0.0
        %v5137 = vmax.f32 %v5116, 0.0
        %v5138 = vmax.f32 %v5120, 0.0
        %v5139 = vmax.f32 %v5122, 0.0
        %v5140 = vmax.f32 %v5126, 0.0
        %v5141 = vmax.f32 %v5128, 0.0
        %v5142 = vmax.f32 %v5132, 0.0
        %v5143 = vmax.f32 %v5134, 0.0
        %v5144 = vmin.f32 %v5136, 6.0
        %v5145 = vmin.f32 %v5137, 6.0
        %v5146 = vmin.f32 %v5138, 6.0
        %v5147 = vmin.f32 %v5139, 6.0
        %v5148 = vmin.f32 %v5140, 6.0
        %v5149 = vmin.f32 %v5141, 6.0
        %v5150 = vmin.f32 %v5142, 6.0
        %v5151 = vmin.f32 %v5143, 6.0
        %v5152 = vmul.f32 %v5144, 0.16666667
        %v5153 = vmul.f32 %v5145, 0.16666667
        %v5154 = vmul.f32 %v5146, 0.16666667
        %v5155 = vmul.f32 %v5147, 0.16666667
        %v5156 = vmul.f32 %v5148, 0.16666667
        %v5157 = vmul.f32 %v5149, 0.16666667
        %v5158 = vmul.f32 %v5150, 0.16666667
        %v5159 = vmul.f32 %v5151, 0.16666667
        %v5160 = vmul.f32 %v4919, %v5152
        %v5161 = vmul.f32 %v4921, %v5153
        %v5162 = vmul.f32 %v4923, %v5154
        %v5163 = vmul.f32 %v4925, %v5155
        %v5164 = vmul.f32 %v4929, %v5156
        %v5165 = vmul.f32 %v4931, %v5157
        %v5166 = vmul.f32 %v4933, %v5158
        %v5167 = vmul.f32 %v4935, %v5159
        %v5168 = vld [vmem:[#allocation22] sm:$0xff]
        %v5169 = vld [vmem:[#allocation22 + $0x8] sm:$0xff]
        %v5170 = vld [vmem:[#allocation22 + $0x10] sm:$0xff]
        %v5171 = vld [vmem:[#allocation22 + $0x18] sm:$0xff]
        %v5172 = vpack.c.bf16 %v5169, %v5168
        %v5173 = vpack.c.bf16 %v5171, %v5170
        %v5175 = vsel %vm2346, %v5172, 0
        %v5178 = vsel %vm2346, %v5173, 0
        %5180 = vmatprep.subr.bf16.mxu0 %v2882
        %5181 = vmatpush1.bf16.msra.mxu0 %v2881
        %5182 = vmatprep.subr.bf16.mxu0 %v2884
        %5183 = vmatpush1.bf16.msra.mxu0 %v2883
        %5184 = vmatprep.subr.bf16.mxu0 %v2886
        %5185 = vmatpush1.bf16.msra.mxu0 %v2885
        %5186 = vmatprep.subr.bf16.mxu0 %v2888
        %5187 = vmatpush1.bf16.msra.mxu0 %v2887
        %5188 = vmatprep.subr.bf16.mxu0 0
        %5189 = vmatpush1.bf16.msra.mxu0 0
        %5190 = vmatprep.subr.bf16.mxu0 0
        %5191 = vmatpush1.bf16.msra.mxu0 0
        %5192 = vmatprep.subr.bf16.mxu0 0
        %5193 = vmatpush1.bf16.msra.mxu0 0
        %5194 = vmatprep.subr.bf16.mxu0 0
        %5195 = vmatpush1.bf16.msra.mxu0 0
        %5196 = vmatprep.subr.bf16.mxu0 0
        %5197 = vmatpush1.bf16.msra.mxu0 0
        %5198 = vmatprep.subr.bf16.mxu0 0
        %5199 = vmatpush1.bf16.msra.mxu0 0
        %5200 = vmatprep.subr.bf16.mxu0 0
        %5201 = vmatpush1.bf16.msra.mxu0 0
        %5202 = vmatprep.subr.bf16.mxu0 0
        %5203 = vmatpush1.bf16.msra.mxu0 0
        %5204 = vmatprep.subr.bf16.mxu0 0
        %5205 = vmatpush1.bf16.msra.mxu0 0
        %5206 = vmatprep.subr.bf16.mxu0 0
        %5207 = vmatpush1.bf16.msra.mxu0 0
        %5208 = vmatprep.subr.bf16.mxu0 0
        %5209 = vmatpush1.bf16.msra.mxu0 0
        %5210 = vmatprep.subr.bf16.mxu0 0
        %5211 = vmatpush1.bf16.msra.mxu0 0
        %5212 = vmatprep.mubr.bf16.mxu0 0
        %5213 = vmatmul.mubr.bf16.gmra.mrb[0].mxu0 %v5175
        %v5214 = vpop.f32.mrb[0].mxu0
        %v5215 = vadd.f32 0.0, %v5214
        %v5216 = vpop.f32.mrb[0].mxu0
        %v5217 = vadd.f32 0.0, %v5216
        %v5218 = vpop.f32.mrb[0].mxu0
        %v5219 = vadd.f32 0.0, %v5218
        %v5220 = vpop.f32.mrb[0].mxu0
        %v5221 = vadd.f32 0.0, %v5220
        %5222 = vmatprep.mubr.bf16.mxu0 0
        %5223 = vmatmul.mubr.bf16.gmra.mrb[0].mxu0 %v5178
        %v5224 = vpop.f32.mrb[0].mxu0
        %v5225 = vadd.f32 0.0, %v5224
        %v5226 = vpop.f32.mrb[0].mxu0
        %v5227 = vadd.f32 0.0, %v5226
        %v5228 = vpop.f32.mrb[0].mxu0
        %v5229 = vadd.f32 0.0, %v5228
        %v5230 = vpop.f32.mrb[0].mxu0
        %v5231 = vadd.f32 0.0, %v5230
        %5232 = vdwg.mxu0
        %v5233 = vadd.f32 %v5160, %v5215
        %v5234 = vadd.f32 %v5161, %v5217
        %v5235 = vadd.f32 %v5162, %v5219
        %v5236 = vadd.f32 %v5163, %v5221
        %v5237 = vadd.f32 %v5164, %v5225
        %v5238 = vadd.f32 %v5165, %v5227
        %v5239 = vadd.f32 %v5166, %v5229
        %v5240 = vadd.f32 %v5167, %v5231
        %v5241 = vld [vmem:[%s16] sm:$0xff]
        %v5242 = vld [vmem:[%s16 + $0x8] sm:$0xff]
        %v5243 = vpack.c.bf16 %v5242, %v5241
        %v5244 = vpack.c.bf16 %v5235, %v5233
        %v5245 = vpack.c.bf16 %v5236, %v5234
        %v5246 = vpack.c.bf16 %v5239, %v5237
        %v5247 = vpack.c.bf16 %v5240, %v5238
        %v5249 = vsel %vm4877, %v5243, 0
        %5251 = vmatprep.subr.bf16.mxu0 %v5245
        %5252 = vmatpush1.bf16.msra.mxu0 %v5244
        %5253 = vmatprep.subr.bf16.mxu0 %v5247
        %5254 = vmatpush1.bf16.msra.mxu0 %v5246
        %5255 = vmatprep.subr.bf16.mxu0 0
        %5256 = vmatpush1.bf16.msra.mxu0 0
        %5257 = vmatprep.subr.bf16.mxu0 0
        %5258 = vmatpush1.bf16.msra.mxu0 0
        %5259 = vmatprep.subr.bf16.mxu0 0
        %5260 = vmatpush1.bf16.msra.mxu0 0
        %5261 = vmatprep.subr.bf16.mxu0 0
        %5262 = vmatpush1.bf16.msra.mxu0 0
        %5263 = vmatprep.subr.bf16.mxu0 0
        %5264 = vmatpush1.bf16.msra.mxu0 0
        %5265 = vmatprep.subr.bf16.mxu0 0
        %5266 = vmatpush1.bf16.msra.mxu0 0
        %5267 = vmatprep.subr.bf16.mxu0 0
        %5268 = vmatpush1.bf16.msra.mxu0 0
        %5269 = vmatprep.subr.bf16.mxu0 0
        %5270 = vmatpush1.bf16.msra.mxu0 0
        %5271 = vmatprep.subr.bf16.mxu0 0
        %5272 = vmatpush1.bf16.msra.mxu0 0
        %5273 = vmatprep.subr.bf16.mxu0 0
        %5274 = vmatpush1.bf16.msra.mxu0 0
        %5275 = vmatprep.subr.bf16.mxu0 0
        %5276 = vmatpush1.bf16.msra.mxu0 0
        %5277 = vmatprep.subr.bf16.mxu0 0
        %5278 = vmatpush1.bf16.msra.mxu0 0
        %5279 = vmatprep.subr.bf16.mxu0 0
        %5280 = vmatpush1.bf16.msra.mxu0 0
        %5281 = vmatprep.subr.bf16.mxu0 0
        %5282 = vmatpush1.bf16.msra.mxu0 0
        %5283 = vmatprep.mubr.bf16.mxu0 0
        %5284 = vmatmul.mubr.bf16.gmra.mrb[0].mxu0 %v5249
        %v5285 = vpop.f32.mrb[0].mxu0
        %v5286 = vadd.f32 0.0, %v5285
        %v5287 = vpop.f32.mrb[0].mxu0
        %v5288 = vadd.f32 0.0, %v5287
        %v5289 = vpop.f32.mrb[0].mxu0
        %v5290 = vadd.f32 0.0, %v5289
        %v5291 = vpop.f32.mrb[0].mxu0
        %v5292 = vadd.f32 0.0, %v5291
        %5293 = vdwg.mxu0
        %v5294 = vmax.f32 %v5286, 0.0
        %v5295 = vmax.f32 %v5288, 0.0
        %v5296 = vmax.f32 %v5290, 0.0
        %v5297 = vmax.f32 %v5292, 0.0
        %5298 = vst [vmem:[%s747] sm:$0xff] %v5294
        %5299 = vst [vmem:[%s747 + $0x8] sm:$0xff] %v5295
        %5300 = vst [vmem:[%s747 + $0x10] sm:$0xff] %v5296
        %5301 = vst [vmem:[%s747 + $0x18] sm:$0xff] %v5297
        %p5302 = scmp.lt.s32.totalorder %s36, 1
        %s5303 = scalar_select %p5302, %s36, 1
        %s5304 = smul.addr %s5303, 4
        %s5305 = smul.addr %s5304, 8
        %s5306 = scalar_lea.vmem %s17, %s5305
        // Predicated region
        $region145: #{_lambda_.1} parent=87 // pred_check
          %p5307 = pneg %p416
        $region146: #{_lambda_.1} parent=87 // pred_check_branch
          %5309 = sbr.rel (%p5307) target = $region148
        $region147: #{_lambda_.1} parent=87 // pred_region
          _
        $region148: #{_lambda_.1} parent=87 // pred_fallthru
          _
      $region88: #{_lambda_.1} parent=5 // pred_fallthru
        _
      %p5310 = scmp.le.s32.totalorder 2, %s31
      // Predicated region
      $region149: #{_lambda_.1} parent=5 // pred_check
        %p5311 = pneg %p5310
      $region150: #{_lambda_.1} parent=5 // pred_check_branch
        %5313 = sbr.rel (%p5311) target = $region152
      $region151: #{_lambda_.1} parent=5 // pred_region
        %s5314 = ssub.s32 %s31, 2
        // Predicated region
        $region153: #{_lambda_.1} parent=151 // pred_check
          %p5315 = pneg %p422
        $region154: #{_lambda_.1} parent=151 // pred_check_branch
          %5317 = sbr.rel (%p5315) target = $region156
        $region155: #{_lambda_.1} parent=151 // pred_region
          %p5318 = scmp.lt.s32.totalorder %s37, 1
          %s5319 = scalar_select %p5318, %s37, 1
          %s5320 = smul.addr %s5319, 4
          %s5321 = smul.addr %s5320, 8
          %s5322 = scalar_lea.vmem %s17, %s5321
        $region156: #{_lambda_.1} parent=151 // pred_fallthru
          _
      $region152: #{_lambda_.1} parent=5 // pred_fallthru
        _
    $region6: #{_lambda_.1} parent=1 // loop_footer
      %s35 = sadd.s32 1, %s31
    $region7: #{_lambda_.1} parent=1 // loop_footer_branch
      %30 = sbr.rel target = $region3
    $region8: #{_lambda_.1} parent=1 // loop_exit
      _
    %5323 = vsyncpa [#allocation3], 1
    %s5324 = scalar_lea.sflag [#allocation3], 1
    %5325 = vsyncpa %s5324, 1
    %5326 = vsyncpa [#allocation5], 1
    %5327 = vsyncpa [#allocation8], 1
    %5328 = vsyncpa [#allocation11], 1
    %5329 = vsyncpa [#allocation14], 1
    %5330 = vsyncpa [#allocation17], 1
    %5331 = vsyncpa [#allocation20], 1
    %5332 = vsyncpa [#allocation23], 1

</llo_original>
